<compile_context>
chip_gen: v6e
topology: v6e:2x2x1
jax: 0.10.0
libtpu: 0.0.40
codegen_flags: <defaults>
</compile_context>

<pallas_src>
import jax
import jax.numpy as jnp
from jax.experimental import pallas as pl
from jax.experimental.pallas import tpu as pltpu

H1, H2, H3 = 1200, 1600, 1200   # hidden sizes fixed by the module
NUM_CHUNKS = 2                   # H2 split for streaming W2 / W3
CHUNK = H2 // NUM_CHUNKS         # 800 (multiple of 32 -> clean int8 tiling)


def quantize_rows(w):
    """Symmetric per-output-channel int8 quantization of a PyTorch-layout
    [out, in] weight.  Returns (q_int8, scale) with w ~= q * scale."""
    amax = jnp.max(jnp.abs(w), axis=1, keepdims=True)
    scale = jnp.maximum(amax, 1e-30) / 127.0
    q = jnp.clip(jnp.round(w / scale), -127.0, 127.0).astype(jnp.int8)
    return q, scale.astype(jnp.float32)


def mlp_kernel(x_ref, w1_ref, b1_ref, w2c_ref, s2c_ref, b2c_ref,
               w3c_ref, s3_ref, b3_ref, w4_ref, b4_ref,
               o_ref, h1_scr, acc3_scr):
    k = pl.program_id(0)

    # --- step 0: layer 1 (tiny) + init the layer-3 accumulator -------------
    @pl.when(k == 0)
    def _init():
        h1 = jnp.dot(x_ref[...].astype(jnp.bfloat16), w1_ref[...],
                     preferred_element_type=jnp.float32) + b1_ref[...]
        h1_scr[...] = jnp.maximum(h1, 0.0).astype(jnp.bfloat16)
        acc3_scr[...] = jnp.zeros_like(acc3_scr)

    # --- every step: one H2-chunk of layer 2 and its layer-3 contribution --
    # W2 chunk is [chunk, H1] int8 (H1 = lane dim); contract the H1 dims of
    # both operands (A @ B^T form).  Per-channel scale applied post-matmul.
    w2_bf16 = w2c_ref[...].astype(jnp.bfloat16)          # exact: |q| <= 127
    h2c = jax.lax.dot_general(
        h1_scr[...], w2_bf16,
        dimension_numbers=(((1,), (1,)), ((), ())),
        preferred_element_type=jnp.float32)
    h2c = h2c * s2c_ref[...] + b2c_ref[...]
    h2c = jnp.maximum(h2c, 0.0).astype(jnp.bfloat16)

    # acc3 += h2_chunk @ W3[chunk_k, :]  (int-valued; scale applied at the end)
    w3_bf16 = w3c_ref[...].astype(jnp.bfloat16)
    acc3_scr[...] += jnp.dot(h2c, w3_bf16, preferred_element_type=jnp.float32)

    # --- last step: finish layer 3 (scale + bias + ReLU) and layer 4 -------
    @pl.when(k == pl.num_programs(0) - 1)
    def _finish():
        h3 = acc3_scr[...] * s3_ref[...] + b3_ref[...]
        h3 = jnp.maximum(h3, 0.0).astype(jnp.bfloat16)
        y = jnp.dot(h3, w4_ref[...],
                    preferred_element_type=jnp.float32) + b4_ref[...]
        o_ref[...] = y.astype(o_ref.dtype)


def prepare_params(params, num_chunks=NUM_CHUNKS):
    """One-time weight preprocessing (layout, bf16 cast, int8 quantization)."""
    chunk = H2 // num_chunks

    w1 = params["w1"].T.astype(jnp.bfloat16)                   # [in, H1]
    b1 = params["b1"].reshape(1, H1).astype(jnp.float32)

    # Layer 2: keep [H2, H1] orientation, chunk along leading H2 axis so
    # H1 (=1200) is the lane dim of every streamed block.
    q2, s2 = quantize_rows(params["w2"])                       # [H2, H1] i8, [H2, 1]
    w2c = q2.reshape(num_chunks, chunk, H1)                    # [nc, chunk, H1] i8
    s2c = s2.reshape(num_chunks, 1, chunk)                     # [nc, 1, chunk] f32
    b2c = params["b2"].reshape(num_chunks, 1, chunk).astype(jnp.float32)

    # Layer 3: quantize per output channel (H3), then lay out as [H2, H3]
    # so the lane dim of every streamed block is H3 (=1200).
    q3, s3 = quantize_rows(params["w3"])                       # [H3, H2] i8, [H3, 1]
    w3q = q3.T                                                 # [H2, H3] i8
    s3r = s3.reshape(1, H3)                                    # [1, H3] f32
    b3 = params["b3"].reshape(1, H3).astype(jnp.float32)

    w4 = params["w4"].T.astype(jnp.bfloat16)                   # [H3, out]
    b4 = params["b4"].reshape(1, -1).astype(jnp.float32)
    return (w1, b1, w2c, s2c, b2c, w3q, s3r, b3, w4, b4)


def mlp_forward(x, prepped):
    """x: [B, input_shape] f32. prepped: output of prepare_params."""
    w1, b1, w2c, s2c, b2c, w3q, s3, b3, w4, b4 = prepped
    B, in_dim = x.shape
    out_dim = w4.shape[1]
    nc, chunk, _ = w2c.shape

    full = lambda a: pl.BlockSpec(a.shape, lambda k: (0, 0))   # step-invariant

    grid_spec = pltpu.PrefetchScalarGridSpec(
        num_scalar_prefetch=0,
        grid=(nc,),
        in_specs=[
            full(x),                                            # x
            full(w1), full(b1),                                 # layer 1
            pl.BlockSpec((None, chunk, H1), lambda k: (k, 0, 0)),  # W2 chunk (i8)
            pl.BlockSpec((None, 1, chunk), lambda k: (k, 0, 0)),   # scale2 chunk
            pl.BlockSpec((None, 1, chunk), lambda k: (k, 0, 0)),   # b2 chunk
            pl.BlockSpec((chunk, H3), lambda k: (k, 0)),           # W3 chunk (i8)
            full(s3), full(b3),                                 # layer 3 epilogue
            full(w4), full(b4),                                 # layer 4
        ],
        out_specs=pl.BlockSpec((B, out_dim), lambda k: (0, 0)),
        scratch_shapes=[
            pltpu.VMEM((B, H1), jnp.bfloat16),   # relu(layer-1) activations
            pltpu.VMEM((B, H3), jnp.float32),    # layer-3 pre-scale accumulator
        ],
    )

    flops = 2 * B * (in_dim * H1 + H1 * H2 + H2 * H3 + H3 * out_dim)
    bytes_accessed = (
        sum(int(a.size) * a.dtype.itemsize
            for a in (x, w1, b1, w2c, s2c, b2c, w3q, s3, b3, w4, b4))
        + B * out_dim * 4)

    return pl.pallas_call(
        mlp_kernel,
        out_shape=jax.ShapeDtypeStruct((B, out_dim), jnp.float32),
        grid_spec=grid_spec,
        compiler_params=pltpu.CompilerParams(
            dimension_semantics=("arbitrary",),   # sequential reduction axis
            vmem_limit_bytes=32 << 20),
        cost_estimate=pl.CostEstimate(
            flops=flops, transcendentals=0, bytes_accessed=bytes_accessed),
    )(x, w1, b1, w2c, s2c, b2c, w3q, s3, b3, w4, b4)


def init_params(key, input_shape, output_shape):
    dims = [(input_shape, H1), (H1, H2), (H2, H3), (H3, output_shape)]
    params = {}
    for i, (fan_in, fan_out) in enumerate(dims, start=1):
        key, kw, kb = jax.random.split(key, 3)
        bound = 1.0 / jnp.sqrt(jnp.float32(fan_in))
        params[f"w{i}"] = jax.random.uniform(
            kw, (fan_out, fan_in), jnp.float32, -bound, bound)  # PyTorch [out, in]
        params[f"b{i}"] = jax.random.uniform(
            kb, (fan_out,), jnp.float32, -bound, bound)
    return params


def ref_forward(x, params):
    """Plain-JAX reference mirroring the kernel's numerics: bf16 activations /
    W1 / W4, int8 per-channel W2 / W3 with post-matmul scaling, f32 accum."""
    bf16 = lambda v: v.astype(jnp.bfloat16).astype(jnp.float32)
    q2, s2 = quantize_rows(params["w2"])
    q3, s3 = quantize_rows(params["w3"])

    h1 = jnp.maximum(bf16(x) @ bf16(params["w1"]).T + params["b1"], 0.0)
    h2 = jnp.maximum(
        (bf16(h1) @ q2.astype(jnp.float32).T) * s2[:, 0] + params["b2"], 0.0)
    h3 = jnp.maximum(
        (bf16(h2) @ q3.astype(jnp.float32).T) * s3[:, 0] + params["b3"], 0.0)
    return bf16(h3) @ bf16(params["w4"]).T + params["b4"]


if __name__ == "__main__":
    key = jax.random.PRNGKey(0)
    key, kx = jax.random.split(key)

    batch, input_shape, output_shape = 8, 32, 16
    x = jax.random.normal(kx, (batch, input_shape), jnp.float32)
    params = init_params(key, input_shape, output_shape)

    prepped = prepare_params(params)
    out = mlp_forward(x, prepped)
    jax.block_until_ready(out)

    ref = ref_forward(x, params)
    assert out.shape == (batch, output_shape)
    assert jnp.allclose(out, ref, atol=2e-3, rtol=2e-3), (
        float(jnp.max(jnp.abs(out - ref))))

    print("KERNEL_OK")
</pallas_src>

<mosaic_0001>
module attributes {stable_mosaic.version = 11 : i64} {
  func.func @mlp_kernel(%arg0: i32, %arg1: memref<8x32xf32, #tpu.memory_space<vmem>>, %arg2: memref<32x1200xbf16, #tpu.memory_space<vmem>>, %arg3: memref<1x1200xf32, #tpu.memory_space<vmem>>, %arg4: memref<1x800x1200xi8, #tpu.memory_space<vmem>>, %arg5: memref<1x1x800xf32, #tpu.memory_space<vmem>>, %arg6: memref<1x1x800xf32, #tpu.memory_space<vmem>>, %arg7: memref<800x1200xi8, #tpu.memory_space<vmem>>, %arg8: memref<1x1200xf32, #tpu.memory_space<vmem>>, %arg9: memref<1x1200xf32, #tpu.memory_space<vmem>>, %arg10: memref<1200x16xbf16, #tpu.memory_space<vmem>>, %arg11: memref<1x16xf32, #tpu.memory_space<vmem>>, %arg12: memref<8x16xf32, #tpu.memory_space<vmem>>, %arg13: memref<8x1200xbf16, #tpu.memory_space<vmem>>, %arg14: memref<8x1200xf32, #tpu.memory_space<vmem>>) attributes {dimension_semantics = [#tpu.dimension_semantics<arbitrary>], iteration_bounds = array<i64: 2>, scalar_prefetch = 0 : i64, scratch_operands = 2 : i64, tpu.core_type = #tpu.core_type<tc>, window_params = [{pipeline_mode = #tpu.pipeline_mode<synchronous>, transform_indices = @transform_0, window_bounds = array<i64: 8, 32>}, {pipeline_mode = #tpu.pipeline_mode<synchronous>, transform_indices = @transform_1, window_bounds = array<i64: 32, 1200>}, {pipeline_mode = #tpu.pipeline_mode<synchronous>, transform_indices = @transform_2, window_bounds = array<i64: 1, 1200>}, {transform_indices = @transform_3, window_bounds = array<i64: 1, 800, 1200>}, {transform_indices = @transform_4, window_bounds = array<i64: 1, 1, 800>}, {transform_indices = @transform_5, window_bounds = array<i64: 1, 1, 800>}, {transform_indices = @transform_6, window_bounds = array<i64: 800, 1200>}, {pipeline_mode = #tpu.pipeline_mode<synchronous>, transform_indices = @transform_7, window_bounds = array<i64: 1, 1200>}, {pipeline_mode = #tpu.pipeline_mode<synchronous>, transform_indices = @transform_8, window_bounds = array<i64: 1, 1200>}, {pipeline_mode = #tpu.pipeline_mode<synchronous>, transform_indices = @transform_9, window_bounds = array<i64: 1200, 16>}, {pipeline_mode = #tpu.pipeline_mode<synchronous>, transform_indices = @transform_10, window_bounds = array<i64: 1, 16>}, {pipeline_mode = #tpu.pipeline_mode<synchronous>, transform_indices = @transform_11, window_bounds = array<i64: 8, 16>}]} {
    %c0_i32 = arith.constant 0 : i32
    %0 = arith.cmpi eq, %arg0, %c0_i32 : i32
    %1 = arith.extui %0 : i1 to i32
    %c0_i32_0 = arith.constant 0 : i32
    %2 = arith.cmpi ne, %1, %c0_i32_0 : i32
    scf.if %2 {
      %c0_20 = arith.constant 0 : index
      %c0_21 = arith.constant 0 : index
      %28 = vector.load %arg1[%c0_20, %c0_21] : memref<8x32xf32, #tpu.memory_space<vmem>>, vector<8x32xf32>
      %29 = arith.truncf %28 : vector<8x32xf32> to vector<8x32xbf16>
      %c0_22 = arith.constant 0 : index
      %c0_23 = arith.constant 0 : index
      %30 = vector.load %arg2[%c0_22, %c0_23] : memref<32x1200xbf16, #tpu.memory_space<vmem>>, vector<32x1200xbf16>
      %cst_24 = arith.constant dense<0.000000e+00> : vector<8x1200xf32>
      %31 = tpu.matmul %29, %30, %cst_24 {dimension_numbers = #tpu.dot_dimension_numbers<[1], [0], [0], [1], [0, 0, 1, 1], [], []>} : vector<8x32xbf16>, vector<32x1200xbf16>, vector<8x1200xf32> -> vector<8x1200xf32>
      %c0_25 = arith.constant 0 : index
      %c0_26 = arith.constant 0 : index
      %32 = vector.load %arg3[%c0_25, %c0_26] : memref<1x1200xf32, #tpu.memory_space<vmem>>, vector<1x1200xf32>
      %33 = vector.broadcast %32 : vector<1x1200xf32> to vector<8x1200xf32>
      %34 = arith.addf %31, %33 : vector<8x1200xf32>
      %cst_27 = arith.constant 0.000000e+00 : f32
      %35 = vector.broadcast %cst_27 : f32 to vector<8x1200xf32>
      %36 = arith.maximumf %34, %35 : vector<8x1200xf32>
      %37 = arith.truncf %36 : vector<8x1200xf32> to vector<8x1200xbf16>
      %c0_28 = arith.constant 0 : index
      %c0_29 = arith.constant 0 : index
      %38 = vector.load %arg13[%c0_28, %c0_29] : memref<8x1200xbf16, #tpu.memory_space<vmem>>, vector<8x1200xbf16>
      tpu.vector_store %arg13[%c0_28, %c0_29], %37 {strides = array<i32>} : memref<8x1200xbf16, #tpu.memory_space<vmem>>, vector<8x1200xbf16>,
      %cst_30 = arith.constant 0.000000e+00 : f32
      %39 = vector.broadcast %cst_30 : f32 to vector<8x1200xf32>
      %c0_31 = arith.constant 0 : index
      %c0_32 = arith.constant 0 : index
      %40 = vector.load %arg14[%c0_31, %c0_32] : memref<8x1200xf32, #tpu.memory_space<vmem>>, vector<8x1200xf32>
      tpu.vector_store %arg14[%c0_31, %c0_32], %39 {strides = array<i32>} : memref<8x1200xf32, #tpu.memory_space<vmem>>, vector<8x1200xf32>,
    } else {
    }
    %c0 = arith.constant 0 : index
    %c0_1 = arith.constant 0 : index
    %c0_2 = arith.constant 0 : index
    %3 = vector.load %arg4[%c0, %c0_1, %c0_2] : memref<1x800x1200xi8, #tpu.memory_space<vmem>>, vector<1x800x1200xi8>
    %4 = vector.shape_cast %3 : vector<1x800x1200xi8> to vector<800x1200xi8>
    %5 = arith.sitofp %4 : vector<800x1200xi8> to vector<800x1200xbf16>
    %c0_3 = arith.constant 0 : index
    %c0_4 = arith.constant 0 : index
    %6 = vector.load %arg13[%c0_3, %c0_4] : memref<8x1200xbf16, #tpu.memory_space<vmem>>, vector<8x1200xbf16>
    %cst = arith.constant dense<0.000000e+00> : vector<8x800xf32>
    %7 = tpu.matmul %6, %5, %cst {dimension_numbers = #tpu.dot_dimension_numbers<[1], [1], [0], [0], [0, 0, 1, 0], [], []>} : vector<8x1200xbf16>, vector<800x1200xbf16>, vector<8x800xf32> -> vector<8x800xf32>
    %c0_5 = arith.constant 0 : index
    %c0_6 = arith.constant 0 : index
    %c0_7 = arith.constant 0 : index
    %8 = vector.load %arg5[%c0_5, %c0_6, %c0_7] : memref<1x1x800xf32, #tpu.memory_space<vmem>>, vector<1x1x800xf32>
    %9 = vector.shape_cast %8 : vector<1x1x800xf32> to vector<1x800xf32>
    %10 = vector.broadcast %9 : vector<1x800xf32> to vector<8x800xf32>
    %11 = arith.mulf %7, %10 : vector<8x800xf32>
    %c0_8 = arith.constant 0 : index
    %c0_9 = arith.constant 0 : index
    %c0_10 = arith.constant 0 : index
    %12 = vector.load %arg6[%c0_8, %c0_9, %c0_10] : memref<1x1x800xf32, #tpu.memory_space<vmem>>, vector<1x1x800xf32>
    %13 = vector.shape_cast %12 : vector<1x1x800xf32> to vector<1x800xf32>
    %14 = vector.broadcast %13 : vector<1x800xf32> to vector<8x800xf32>
    %15 = arith.addf %11, %14 : vector<8x800xf32>
    %cst_11 = arith.constant 0.000000e+00 : f32
    %16 = vector.broadcast %cst_11 : f32 to vector<8x800xf32>
    %17 = arith.maximumf %15, %16 : vector<8x800xf32>
    %18 = arith.truncf %17 : vector<8x800xf32> to vector<8x800xbf16>
    %c0_12 = arith.constant 0 : index
    %c0_13 = arith.constant 0 : index
    %19 = vector.load %arg7[%c0_12, %c0_13] : memref<800x1200xi8, #tpu.memory_space<vmem>>, vector<800x1200xi8>
    %20 = arith.sitofp %19 : vector<800x1200xi8> to vector<800x1200xbf16>
    %c0_14 = arith.constant 0 : index
    %c0_15 = arith.constant 0 : index
    %21 = vector.load %arg14[%c0_14, %c0_15] : memref<8x1200xf32, #tpu.memory_space<vmem>>, vector<8x1200xf32>
    %cst_16 = arith.constant dense<0.000000e+00> : vector<8x1200xf32>
    %22 = tpu.matmul %18, %20, %cst_16 {dimension_numbers = #tpu.dot_dimension_numbers<[1], [0], [0], [1], [0, 0, 1, 1], [], []>} : vector<8x800xbf16>, vector<800x1200xbf16>, vector<8x1200xf32> -> vector<8x1200xf32>
    %23 = arith.addf %21, %22 : vector<8x1200xf32>
    %c0_17 = arith.constant 0 : index
    %c0_18 = arith.constant 0 : index
    %24 = vector.load %arg14[%c0_17, %c0_18] : memref<8x1200xf32, #tpu.memory_space<vmem>>, vector<8x1200xf32>
    tpu.vector_store %arg14[%c0_17, %c0_18], %23 {strides = array<i32>} : memref<8x1200xf32, #tpu.memory_space<vmem>>, vector<8x1200xf32>,
    %c1_i32 = arith.constant 1 : i32
    %25 = arith.cmpi eq, %arg0, %c1_i32 : i32
    %26 = arith.extui %25 : i1 to i32
    %c0_i32_19 = arith.constant 0 : i32
    %27 = arith.cmpi ne, %26, %c0_i32_19 : i32
    scf.if %27 {
      %c0_20 = arith.constant 0 : index
      %c0_21 = arith.constant 0 : index
      %28 = vector.load %arg14[%c0_20, %c0_21] : memref<8x1200xf32, #tpu.memory_space<vmem>>, vector<8x1200xf32>
      %c0_22 = arith.constant 0 : index
      %c0_23 = arith.constant 0 : index
      %29 = vector.load %arg8[%c0_22, %c0_23] : memref<1x1200xf32, #tpu.memory_space<vmem>>, vector<1x1200xf32>
      %30 = vector.broadcast %29 : vector<1x1200xf32> to vector<8x1200xf32>
      %31 = arith.mulf %28, %30 : vector<8x1200xf32>
      %c0_24 = arith.constant 0 : index
      %c0_25 = arith.constant 0 : index
      %32 = vector.load %arg9[%c0_24, %c0_25] : memref<1x1200xf32, #tpu.memory_space<vmem>>, vector<1x1200xf32>
      %33 = vector.broadcast %32 : vector<1x1200xf32> to vector<8x1200xf32>
      %34 = arith.addf %31, %33 : vector<8x1200xf32>
      %cst_26 = arith.constant 0.000000e+00 : f32
      %35 = vector.broadcast %cst_26 : f32 to vector<8x1200xf32>
      %36 = arith.maximumf %34, %35 : vector<8x1200xf32>
      %37 = arith.truncf %36 : vector<8x1200xf32> to vector<8x1200xbf16>
      %c0_27 = arith.constant 0 : index
      %c0_28 = arith.constant 0 : index
      %38 = vector.load %arg10[%c0_27, %c0_28] : memref<1200x16xbf16, #tpu.memory_space<vmem>>, vector<1200x16xbf16>
      %cst_29 = arith.constant dense<0.000000e+00> : vector<8x16xf32>
      %39 = tpu.matmul %37, %38, %cst_29 {dimension_numbers = #tpu.dot_dimension_numbers<[1], [0], [0], [1], [0, 0, 1, 1], [], []>} : vector<8x1200xbf16>, vector<1200x16xbf16>, vector<8x16xf32> -> vector<8x16xf32>
      %c0_30 = arith.constant 0 : index
      %c0_31 = arith.constant 0 : index
      %40 = vector.load %arg11[%c0_30, %c0_31] : memref<1x16xf32, #tpu.memory_space<vmem>>, vector<1x16xf32>
      %41 = vector.broadcast %40 : vector<1x16xf32> to vector<8x16xf32>
      %42 = arith.addf %39, %41 : vector<8x16xf32>
      %c0_32 = arith.constant 0 : index
      %c0_33 = arith.constant 0 : index
      %43 = vector.load %arg12[%c0_32, %c0_33] : memref<8x16xf32, #tpu.memory_space<vmem>>, vector<8x16xf32>
      tpu.vector_store %arg12[%c0_32, %c0_33], %42 {strides = array<i32>} : memref<8x16xf32, #tpu.memory_space<vmem>>, vector<8x16xf32>,
    } else {
    }
    return
  }
  func.func @transform_0(%arg0: i32) -> (i32, i32) {
    %c0_i32 = arith.constant 0 : i32
    %c0_i32_0 = arith.constant 0 : i32
    %c0_i32_1 = arith.constant 0 : i32
    return %c0_i32, %c0_i32_0 : i32, i32
  }
  func.func @transform_1(%arg0: i32) -> (i32, i32) {
    %c0_i32 = arith.constant 0 : i32
    %c0_i32_0 = arith.constant 0 : i32
    %c0_i32_1 = arith.constant 0 : i32
    return %c0_i32, %c0_i32_0 : i32, i32
  }
  func.func @transform_2(%arg0: i32) -> (i32, i32) {
    %c0_i32 = arith.constant 0 : i32
    %c0_i32_0 = arith.constant 0 : i32
    %c0_i32_1 = arith.constant 0 : i32
    return %c0_i32, %c0_i32_0 : i32, i32
  }
  func.func @transform_3(%arg0: i32) -> (i32, i32, i32) {
    %c0_i32 = arith.constant 0 : i32
    %c0_i32_0 = arith.constant 0 : i32
    %c0_i32_1 = arith.constant 0 : i32
    return %arg0, %c0_i32, %c0_i32_0 : i32, i32, i32
  }
  func.func @transform_4(%arg0: i32) -> (i32, i32, i32) {
    %c0_i32 = arith.constant 0 : i32
    %c0_i32_0 = arith.constant 0 : i32
    %c0_i32_1 = arith.constant 0 : i32
    return %arg0, %c0_i32, %c0_i32_0 : i32, i32, i32
  }
  func.func @transform_5(%arg0: i32) -> (i32, i32, i32) {
    %c0_i32 = arith.constant 0 : i32
    %c0_i32_0 = arith.constant 0 : i32
    %c0_i32_1 = arith.constant 0 : i32
    return %arg0, %c0_i32, %c0_i32_0 : i32, i32, i32
  }
  func.func @transform_6(%arg0: i32) -> (i32, i32) {
    %c0_i32 = arith.constant 0 : i32
    %c0_i32_0 = arith.constant 0 : i32
    return %arg0, %c0_i32 : i32, i32
  }
  func.func @transform_7(%arg0: i32) -> (i32, i32) {
    %c0_i32 = arith.constant 0 : i32
    %c0_i32_0 = arith.constant 0 : i32
    %c0_i32_1 = arith.constant 0 : i32
    return %c0_i32, %c0_i32_0 : i32, i32
  }
  func.func @transform_8(%arg0: i32) -> (i32, i32) {
    %c0_i32 = arith.constant 0 : i32
    %c0_i32_0 = arith.constant 0 : i32
    %c0_i32_1 = arith.constant 0 : i32
    return %c0_i32, %c0_i32_0 : i32, i32
  }
  func.func @transform_9(%arg0: i32) -> (i32, i32) {
    %c0_i32 = arith.constant 0 : i32
    %c0_i32_0 = arith.constant 0 : i32
    %c0_i32_1 = arith.constant 0 : i32
    return %c0_i32, %c0_i32_0 : i32, i32
  }
  func.func @transform_10(%arg0: i32) -> (i32, i32) {
    %c0_i32 = arith.constant 0 : i32
    %c0_i32_0 = arith.constant 0 : i32
    %c0_i32_1 = arith.constant 0 : i32
    return %c0_i32, %c0_i32_0 : i32, i32
  }
  func.func @transform_11(%arg0: i32) -> (i32, i32) {
    %c0_i32 = arith.constant 0 : i32
    %c0_i32_0 = arith.constant 0 : i32
    %c0_i32_1 = arith.constant 0 : i32
    return %c0_i32, %c0_i32_0 : i32, i32
  }
}

</mosaic_0001>

<llo_original>
// kernel: tpu_custom_call.1
$region0: #{tpu_custom_call.1}
  #allocation0 [shape = 'u32[]', space=smem, size = 0x4, offset = 0x4, fixed_abs, tag = 'smem constant byte address 0x4 - core index']
  #allocation1 [shape = 'u32[144,128]{1,0:T(1,128)}', space=vmem, size = 0x12000, scoped, tag = 'internal scratch']
  #allocation2 [shape = 'bf16[8,1200]{1,0:T(8,128)(2,1)}', space=vmem, size = 0x5000, scoped, tag = 'scratch operand']
  #allocation3 [shape = 'f32[8,1200]{1,0:T(8,128)}', space=vmem, size = 0xa000, scoped, tag = 'scratch operand']
  %s0 = inlined_call_operand.vmem [shape: f32[8,32], index: 0, kind: input, shape index: {}]
  %s1 = inlined_call_operand.vmem [shape: bf16[32,1200], index: 1, kind: input, shape index: {}]
  %s2 = inlined_call_operand.vmem [shape: f32[1,1200], index: 2, kind: input, shape index: {}]
  %s3 = inlined_call_operand.vmem [shape: s8[2,800,1200], index: 3, kind: input, shape index: {}]
  %s4 = inlined_call_operand.vmem [shape: f32[2,1,800], index: 4, kind: input, shape index: {}]
  %s5 = inlined_call_operand.vmem [shape: f32[2,1,800], index: 5, kind: input, shape index: {}]
  %s6 = inlined_call_operand.vmem [shape: s8[1600,1200], index: 6, kind: input, shape index: {}]
  %s7 = inlined_call_operand.vmem [shape: f32[1,1200], index: 7, kind: input, shape index: {}]
  %s8 = inlined_call_operand.vmem [shape: f32[1,1200], index: 8, kind: input, shape index: {}]
  %s9 = inlined_call_operand.vmem [shape: bf16[1200,16], index: 9, kind: input, shape index: {}]
  %s10 = inlined_call_operand.vmem [shape: f32[1,16], index: 10, kind: input, shape index: {}]
  %s11 = inlined_call_operand.hbm [shape: f32[8,16], index: 11, kind: output, shape index: {}]
  %s12 = sld [smem:[#allocation0]]
  $region85: #{tpu_custom_call.1} parent=0
    _
  %s14 = ssub.s32 1, %s12
  %s15 = scalar_select 0, %s14, %s12
  $region1: #{tpu_custom_call.1} parent=0
    #allocation4 [shape = 'u8[4096]{0}', space=vmem, size = 0x1000, scoped, tag = 'output window, operand 0, single buffered']
    #allocation5 [shape = 's32[2]{0}', space=sflag, size = 0x8, scoped, tag = 'scoped memory for tpu_custom_call.1']
    %16 = vsyncpa [#allocation5], 0
    loop: start=0, step=1, limit=4
    $region2: #{tpu_custom_call.1} parent=1 // loop_pre_header
      _
    $region3: #{tpu_custom_call.1} parent=1 // loop_header
      %s18 = sphi 0, %s22
      %p19 = scmp.ge.s32.totalorder %s18, 4
      %s26 = sphi 0, %s26
      %s28 = sphi 0, %s26
      %s29 = sphi 0, %s28
      %s43 = sphi 0, %s29
      %s47 = sphi 0, %s47
      %s49 = sphi 0, %s47
      %s50 = sphi 0, %s49
      %s64 = sphi 0, %s50
      %s68 = sphi 0, %s68
      %s70 = sphi 0, %s68
      %s71 = sphi 0, %s70
      %s85 = sphi 0, %s71
      %s91 = sphi 0, %s93
      %s94 = sphi 0, %s91
      %s95 = sphi 0, %s94
      %s111 = sphi 0, %s95
      %s117 = sphi 0, %s119
      %s120 = sphi 0, %s117
      %s121 = sphi 0, %s120
      %s137 = sphi 0, %s121
      %s143 = sphi 0, %s145
      %s146 = sphi 0, %s143
      %s147 = sphi 0, %s146
      %s163 = sphi 0, %s147
      %s169 = sphi 0, %s171
      %s172 = sphi 0, %s169
      %s173 = sphi 0, %s172
      %s189 = sphi 0, %s173
      %s193 = sphi 0, %s193
      %s195 = sphi 0, %s193
      %s196 = sphi 0, %s195
      %s210 = sphi 0, %s196
      %s214 = sphi 0, %s214
      %s216 = sphi 0, %s214
      %s217 = sphi 0, %s216
      %s231 = sphi 0, %s217
      %s235 = sphi 0, %s235
      %s237 = sphi 0, %s235
      %s238 = sphi 0, %s237
      %s252 = sphi 0, %s238
      %s256 = sphi 0, %s256
      %s258 = sphi 0, %s256
      %s259 = sphi 0, %s258
      %s273 = sphi 0, %s259
      %s277 = sphi 0, %s277
      %s279 = sphi 0, %s277
      %s280 = sphi 0, %s279
      %s294 = sphi 0, %s280
    $region4: #{tpu_custom_call.1} parent=1 // loop_header_branch
      %21 = sbr.rel (%p19) target = $region8
    $region5: #{tpu_custom_call.1} parent=1 // loop_body
      %s23 = ssub.s32 %s18, 1
      %s24 = ssub.s32 %s18, 2
      %s25 = sadd.s32 %s18, 1
      %s27 = sadd.s32 %s26, 1
      %p30 = scmp.eq.s32.totalorder %s18, 1
      %p31 = scmp.ne.s32.totalorder %s26, %s28
      %p32 = scmp.eq.s32.totalorder %s18, 0
      %p33 = por %p31, %p32
      %p34 = scmp.ne.s32.totalorder %s26, %s28
      %p35 = scmp.eq.s32.totalorder %s23, 1
      %p36 = por %p34, %p35
      %p37 = scmp.ne.s32.totalorder %s28, %s29
      %p38 = scmp.eq.s32.totalorder %s23, 0
      %p39 = por %p37, %p38
      %p40 = scmp.ne.s32.totalorder %s28, %s29
      %p41 = scmp.eq.s32.totalorder %s24, 1
      %p42 = por %p40, %p41
      %p44 = scmp.ne.s32.totalorder %s29, %s43
      %p45 = scmp.eq.s32.totalorder %s24, 0
      %p46 = por %p44, %p45
      %s48 = sadd.s32 %s47, 1
      %p51 = scmp.eq.s32.totalorder %s18, 1
      %p52 = scmp.ne.s32.totalorder %s47, %s49
      %p53 = scmp.eq.s32.totalorder %s18, 0
      %p54 = por %p52, %p53
      %p55 = scmp.ne.s32.totalorder %s47, %s49
      %p56 = scmp.eq.s32.totalorder %s23, 1
      %p57 = por %p55, %p56
      %p58 = scmp.ne.s32.totalorder %s49, %s50
      %p59 = scmp.eq.s32.totalorder %s23, 0
      %p60 = por %p58, %p59
      %p61 = scmp.ne.s32.totalorder %s49, %s50
      %p62 = scmp.eq.s32.totalorder %s24, 1
      %p63 = por %p61, %p62
      %p65 = scmp.ne.s32.totalorder %s50, %s64
      %p66 = scmp.eq.s32.totalorder %s24, 0
      %p67 = por %p65, %p66
      %s69 = sadd.s32 %s68, 1
      %p72 = scmp.eq.s32.totalorder %s18, 1
      %p73 = scmp.ne.s32.totalorder %s68, %s70
      %p74 = scmp.eq.s32.totalorder %s18, 0
      %p75 = por %p73, %p74
      %p76 = scmp.ne.s32.totalorder %s68, %s70
      %p77 = scmp.eq.s32.totalorder %s23, 1
      %p78 = por %p76, %p77
      %p79 = scmp.ne.s32.totalorder %s70, %s71
      %p80 = scmp.eq.s32.totalorder %s23, 0
      %p81 = por %p79, %p80
      %p82 = scmp.ne.s32.totalorder %s70, %s71
      %p83 = scmp.eq.s32.totalorder %s24, 1
      %p84 = por %p82, %p83
      %p86 = scmp.ne.s32.totalorder %s71, %s85
      %p87 = scmp.eq.s32.totalorder %s24, 0
      %p88 = por %p86, %p87
      %s89 = ssub.s32 %s18, %s25
      %p90 = scmp.eq.s32.totalorder %s89, 0
      %s92 = sadd.s32 %s91, 1
      %s93 = scalar_select %p90, %s91, %s92
      %p96 = pneg %p90
      %p97 = scmp.eq.s32.totalorder %s18, 1
      %p98 = por %p96, %p97
      %p99 = scmp.ne.s32.totalorder %s91, %s94
      %p100 = scmp.eq.s32.totalorder %s18, 0
      %p101 = por %p99, %p100
      %p102 = scmp.ne.s32.totalorder %s91, %s94
      %p103 = scmp.eq.s32.totalorder %s23, 1
      %p104 = por %p102, %p103
      %p105 = scmp.ne.s32.totalorder %s94, %s95
      %p106 = scmp.eq.s32.totalorder %s23, 0
      %p107 = por %p105, %p106
      %p108 = scmp.ne.s32.totalorder %s94, %s95
      %p109 = scmp.eq.s32.totalorder %s24, 1
      %p110 = por %p108, %p109
      %p112 = scmp.ne.s32.totalorder %s95, %s111
      %p113 = scmp.eq.s32.totalorder %s24, 0
      %p114 = por %p112, %p113
      %s115 = ssub.s32 %s18, %s25
      %p116 = scmp.eq.s32.totalorder %s115, 0
      %s118 = sadd.s32 %s117, 1
      %s119 = scalar_select %p116, %s117, %s118
      %p122 = pneg %p116
      %p123 = scmp.eq.s32.totalorder %s18, 1
      %p124 = por %p122, %p123
      %p125 = scmp.ne.s32.totalorder %s117, %s120
      %p126 = scmp.eq.s32.totalorder %s18, 0
      %p127 = por %p125, %p126
      %p128 = scmp.ne.s32.totalorder %s117, %s120
      %p129 = scmp.eq.s32.totalorder %s23, 1
      %p130 = por %p128, %p129
      %p131 = scmp.ne.s32.totalorder %s120, %s121
      %p132 = scmp.eq.s32.totalorder %s23, 0
      %p133 = por %p131, %p132
      %p134 = scmp.ne.s32.totalorder %s120, %s121
      %p135 = scmp.eq.s32.totalorder %s24, 1
      %p136 = por %p134, %p135
      %p138 = scmp.ne.s32.totalorder %s121, %s137
      %p139 = scmp.eq.s32.totalorder %s24, 0
      %p140 = por %p138, %p139
      %s141 = ssub.s32 %s18, %s25
      %p142 = scmp.eq.s32.totalorder %s141, 0
      %s144 = sadd.s32 %s143, 1
      %s145 = scalar_select %p142, %s143, %s144
      %p148 = pneg %p142
      %p149 = scmp.eq.s32.totalorder %s18, 1
      %p150 = por %p148, %p149
      %p151 = scmp.ne.s32.totalorder %s143, %s146
      %p152 = scmp.eq.s32.totalorder %s18, 0
      %p153 = por %p151, %p152
      %p154 = scmp.ne.s32.totalorder %s143, %s146
      %p155 = scmp.eq.s32.totalorder %s23, 1
      %p156 = por %p154, %p155
      %p157 = scmp.ne.s32.totalorder %s146, %s147
      %p158 = scmp.eq.s32.totalorder %s23, 0
      %p159 = por %p157, %p158
      %p160 = scmp.ne.s32.totalorder %s146, %s147
      %p161 = scmp.eq.s32.totalorder %s24, 1
      %p162 = por %p160, %p161
      %p164 = scmp.ne.s32.totalorder %s147, %s163
      %p165 = scmp.eq.s32.totalorder %s24, 0
      %p166 = por %p164, %p165
      %s167 = ssub.s32 %s18, %s25
      %p168 = scmp.eq.s32.totalorder %s167, 0
      %s170 = sadd.s32 %s169, 1
      %s171 = scalar_select %p168, %s169, %s170
      %p174 = pneg %p168
      %p175 = scmp.eq.s32.totalorder %s18, 1
      %p176 = por %p174, %p175
      %p177 = scmp.ne.s32.totalorder %s169, %s172
      %p178 = scmp.eq.s32.totalorder %s18, 0
      %p179 = por %p177, %p178
      %p180 = scmp.ne.s32.totalorder %s169, %s172
      %p181 = scmp.eq.s32.totalorder %s23, 1
      %p182 = por %p180, %p181
      %p183 = scmp.ne.s32.totalorder %s172, %s173
      %p184 = scmp.eq.s32.totalorder %s23, 0
      %p185 = por %p183, %p184
      %p186 = scmp.ne.s32.totalorder %s172, %s173
      %p187 = scmp.eq.s32.totalorder %s24, 1
      %p188 = por %p186, %p187
      %p190 = scmp.ne.s32.totalorder %s173, %s189
      %p191 = scmp.eq.s32.totalorder %s24, 0
      %p192 = por %p190, %p191
      %s194 = sadd.s32 %s193, 1
      %p197 = scmp.eq.s32.totalorder %s18, 1
      %p198 = scmp.ne.s32.totalorder %s193, %s195
      %p199 = scmp.eq.s32.totalorder %s18, 0
      %p200 = por %p198, %p199
      %p201 = scmp.ne.s32.totalorder %s193, %s195
      %p202 = scmp.eq.s32.totalorder %s23, 1
      %p203 = por %p201, %p202
      %p204 = scmp.ne.s32.totalorder %s195, %s196
      %p205 = scmp.eq.s32.totalorder %s23, 0
      %p206 = por %p204, %p205
      %p207 = scmp.ne.s32.totalorder %s195, %s196
      %p208 = scmp.eq.s32.totalorder %s24, 1
      %p209 = por %p207, %p208
      %p211 = scmp.ne.s32.totalorder %s196, %s210
      %p212 = scmp.eq.s32.totalorder %s24, 0
      %p213 = por %p211, %p212
      %s215 = sadd.s32 %s214, 1
      %p218 = scmp.eq.s32.totalorder %s18, 1
      %p219 = scmp.ne.s32.totalorder %s214, %s216
      %p220 = scmp.eq.s32.totalorder %s18, 0
      %p221 = por %p219, %p220
      %p222 = scmp.ne.s32.totalorder %s214, %s216
      %p223 = scmp.eq.s32.totalorder %s23, 1
      %p224 = por %p222, %p223
      %p225 = scmp.ne.s32.totalorder %s216, %s217
      %p226 = scmp.eq.s32.totalorder %s23, 0
      %p227 = por %p225, %p226
      %p228 = scmp.ne.s32.totalorder %s216, %s217
      %p229 = scmp.eq.s32.totalorder %s24, 1
      %p230 = por %p228, %p229
      %p232 = scmp.ne.s32.totalorder %s217, %s231
      %p233 = scmp.eq.s32.totalorder %s24, 0
      %p234 = por %p232, %p233
      %s236 = sadd.s32 %s235, 1
      %p239 = scmp.eq.s32.totalorder %s18, 1
      %p240 = scmp.ne.s32.totalorder %s235, %s237
      %p241 = scmp.eq.s32.totalorder %s18, 0
      %p242 = por %p240, %p241
      %p243 = scmp.ne.s32.totalorder %s235, %s237
      %p244 = scmp.eq.s32.totalorder %s23, 1
      %p245 = por %p243, %p244
      %p246 = scmp.ne.s32.totalorder %s237, %s238
      %p247 = scmp.eq.s32.totalorder %s23, 0
      %p248 = por %p246, %p247
      %p249 = scmp.ne.s32.totalorder %s237, %s238
      %p250 = scmp.eq.s32.totalorder %s24, 1
      %p251 = por %p249, %p250
      %p253 = scmp.ne.s32.totalorder %s238, %s252
      %p254 = scmp.eq.s32.totalorder %s24, 0
      %p255 = por %p253, %p254
      %s257 = sadd.s32 %s256, 1
      %p260 = scmp.eq.s32.totalorder %s18, 1
      %p261 = scmp.ne.s32.totalorder %s256, %s258
      %p262 = scmp.eq.s32.totalorder %s18, 0
      %p263 = por %p261, %p262
      %p264 = scmp.ne.s32.totalorder %s256, %s258
      %p265 = scmp.eq.s32.totalorder %s23, 1
      %p266 = por %p264, %p265
      %p267 = scmp.ne.s32.totalorder %s258, %s259
      %p268 = scmp.eq.s32.totalorder %s23, 0
      %p269 = por %p267, %p268
      %p270 = scmp.ne.s32.totalorder %s258, %s259
      %p271 = scmp.eq.s32.totalorder %s24, 1
      %p272 = por %p270, %p271
      %p274 = scmp.ne.s32.totalorder %s259, %s273
      %p275 = scmp.eq.s32.totalorder %s24, 0
      %p276 = por %p274, %p275
      %s278 = sadd.s32 %s277, 1
      %p281 = scmp.eq.s32.totalorder %s18, 1
      %p282 = scmp.ne.s32.totalorder %s277, %s279
      %p283 = scmp.eq.s32.totalorder %s18, 0
      %p284 = por %p282, %p283
      %p285 = scmp.ne.s32.totalorder %s277, %s279
      %p286 = scmp.eq.s32.totalorder %s23, 1
      %p287 = por %p285, %p286
      %p288 = scmp.ne.s32.totalorder %s279, %s280
      %p289 = scmp.eq.s32.totalorder %s23, 0
      %p290 = por %p288, %p289
      %p291 = scmp.ne.s32.totalorder %s279, %s280
      %p292 = scmp.eq.s32.totalorder %s24, 1
      %p293 = por %p291, %p292
      %p295 = scmp.ne.s32.totalorder %s280, %s294
      %p296 = scmp.eq.s32.totalorder %s24, 0
      %p297 = por %p295, %p296
      %p298 = scmp.le.s32.totalorder 1, %s18
      %p299 = scmp.lt.s32.totalorder %s18, 3
      %p300 = pnand %p298, %p299
      %p301 = pneg %p300
      // Predicated region
      $region9: #{tpu_custom_call.1} parent=5 // pred_check
        _
      $region10: #{tpu_custom_call.1} parent=5 // pred_check_branch
        %303 = sbr.rel (%p300) target = $region12
      $region11: #{tpu_custom_call.1} parent=5 // pred_region
        %s304 = ssub.s32 %s18, 1
        // Predicated region
        $region13: #{tpu_custom_call.1} parent=11 // pred_check
          %p305 = pneg %p39
        $region14: #{tpu_custom_call.1} parent=11 // pred_check_branch
          %307 = sbr.rel (%p305) target = $region16
        $region15: #{tpu_custom_call.1} parent=11 // pred_region
          _
        $region16: #{tpu_custom_call.1} parent=11 // pred_fallthru
          _
        // Predicated region
        $region17: #{tpu_custom_call.1} parent=11 // pred_check
          %p308 = pneg %p60
        $region18: #{tpu_custom_call.1} parent=11 // pred_check_branch
          %310 = sbr.rel (%p308) target = $region20
        $region19: #{tpu_custom_call.1} parent=11 // pred_region
          _
        $region20: #{tpu_custom_call.1} parent=11 // pred_fallthru
          _
        // Predicated region
        $region21: #{tpu_custom_call.1} parent=11 // pred_check
          %p311 = pneg %p81
        $region22: #{tpu_custom_call.1} parent=11 // pred_check_branch
          %313 = sbr.rel (%p311) target = $region24
        $region23: #{tpu_custom_call.1} parent=11 // pred_region
          _
        $region24: #{tpu_custom_call.1} parent=11 // pred_fallthru
          _
        // Predicated region
        $region25: #{tpu_custom_call.1} parent=11 // pred_check
          %p314 = pneg %p206
        $region26: #{tpu_custom_call.1} parent=11 // pred_check_branch
          %316 = sbr.rel (%p314) target = $region28
        $region27: #{tpu_custom_call.1} parent=11 // pred_region
          _
        $region28: #{tpu_custom_call.1} parent=11 // pred_fallthru
          _
        // Predicated region
        $region29: #{tpu_custom_call.1} parent=11 // pred_check
          %p317 = pneg %p227
        $region30: #{tpu_custom_call.1} parent=11 // pred_check_branch
          %319 = sbr.rel (%p317) target = $region32
        $region31: #{tpu_custom_call.1} parent=11 // pred_region
          _
        $region32: #{tpu_custom_call.1} parent=11 // pred_fallthru
          _
        // Predicated region
        $region33: #{tpu_custom_call.1} parent=11 // pred_check
          %p320 = pneg %p248
        $region34: #{tpu_custom_call.1} parent=11 // pred_check_branch
          %322 = sbr.rel (%p320) target = $region36
        $region35: #{tpu_custom_call.1} parent=11 // pred_region
          _
        $region36: #{tpu_custom_call.1} parent=11 // pred_fallthru
          _
        // Predicated region
        $region37: #{tpu_custom_call.1} parent=11 // pred_check
          %p323 = pneg %p269
        $region38: #{tpu_custom_call.1} parent=11 // pred_check_branch
          %325 = sbr.rel (%p323) target = $region40
        $region39: #{tpu_custom_call.1} parent=11 // pred_region
          _
        $region40: #{tpu_custom_call.1} parent=11 // pred_fallthru
          _
      $region12: #{tpu_custom_call.1} parent=5 // pred_fallthru
        _
      %p326 = scmp.lt.s32.totalorder %s18, 2
      // Predicated region
      $region41: #{tpu_custom_call.1} parent=5 // pred_check
        %p327 = pneg %p326
      $region42: #{tpu_custom_call.1} parent=5 // pred_check_branch
        %329 = sbr.rel (%p327) target = $region44
      $region43: #{tpu_custom_call.1} parent=5 // pred_region
        // Predicated region
        $region45: #{tpu_custom_call.1} parent=43 // pred_check
          %p330 = pneg %p101
        $region46: #{tpu_custom_call.1} parent=43 // pred_check_branch
          %332 = sbr.rel (%p330) target = $region48
        $region47: #{tpu_custom_call.1} parent=43 // pred_region
          %p333 = scmp.lt.s32.totalorder %s18, 1
          %s334 = scalar_select %p333, %s18, 1
          %s335 = smul.addr %s334, 250
          %s336 = smul.addr %s335, 8
          %s337 = scalar_lea.vmem %s3, %s336
        $region48: #{tpu_custom_call.1} parent=43 // pred_fallthru
          _
        // Predicated region
        $region49: #{tpu_custom_call.1} parent=43 // pred_check
          %p338 = pneg %p127
        $region50: #{tpu_custom_call.1} parent=43 // pred_check_branch
          %340 = sbr.rel (%p338) target = $region52
        $region51: #{tpu_custom_call.1} parent=43 // pred_region
          %p341 = scmp.lt.s32.totalorder %s18, 1
          %s342 = scalar_select %p341, %s18, 1
          %s343 = smul.addr %s342, 7
          %s344 = scalar_lea.vmem %s4, %s343
        $region52: #{tpu_custom_call.1} parent=43 // pred_fallthru
          _
        // Predicated region
        $region53: #{tpu_custom_call.1} parent=43 // pred_check
          %p345 = pneg %p153
        $region54: #{tpu_custom_call.1} parent=43 // pred_check_branch
          %347 = sbr.rel (%p345) target = $region56
        $region55: #{tpu_custom_call.1} parent=43 // pred_region
          %p348 = scmp.lt.s32.totalorder %s18, 1
          %s349 = scalar_select %p348, %s18, 1
          %s350 = smul.addr %s349, 7
          %s351 = scalar_lea.vmem %s5, %s350
        $region56: #{tpu_custom_call.1} parent=43 // pred_fallthru
          _
        // Predicated region
        $region57: #{tpu_custom_call.1} parent=43 // pred_check
          %p352 = pneg %p179
        $region58: #{tpu_custom_call.1} parent=43 // pred_check_branch
          %354 = sbr.rel (%p352) target = $region60
        $region59: #{tpu_custom_call.1} parent=43 // pred_region
          %s355 = smul.u32 25, %s18
          %p356 = scmp.lt.s32.totalorder %s355, 49
          %s357 = scalar_select %p356, %s355, 49
          %s358 = smul.addr %s357, 10
          %s359 = smul.addr %s358, 8
          %s360 = scalar_lea.vmem %s6, %s359
          %s361 = smul.u32 25, %s18
        $region60: #{tpu_custom_call.1} parent=43 // pred_fallthru
          _
      $region44: #{tpu_custom_call.1} parent=5 // pred_fallthru
        _
      %p362 = scmp.le.s32.totalorder 1, %s18
      %p363 = scmp.lt.s32.totalorder %s18, 3
      %p364 = pnand %p362, %p363
      %p365 = pneg %p364
      // Predicated region
      $region61: #{tpu_custom_call.1} parent=5 // pred_check
        _
      $region62: #{tpu_custom_call.1} parent=5 // pred_check_branch
        %367 = sbr.rel (%p364) target = $region64
      $region63: #{tpu_custom_call.1} parent=5 // pred_region
        %s368 = ssub.s32 %s18, 1
        %p369 = pneg %p39
        %p370 = pneg %p36
        %p371 = pneg %p60
        %p372 = pneg %p57
        %p373 = pneg %p81
        %p374 = pneg %p78
        %p375 = scmp.lt.s32.totalorder %s23, 1
        %s376 = scalar_select %p375, %s23, 1
        %s377 = smul.addr %s376, 250
        %s378 = smul.addr %s377, 8
        %s379 = scalar_lea.vmem %s3, %s378
        %p380 = pneg %p107
        %p381 = pneg %p104
        %p382 = scmp.lt.s32.totalorder %s23, 1
        %s383 = scalar_select %p382, %s23, 1
        %s384 = smul.addr %s383, 7
        %s385 = scalar_lea.vmem %s4, %s384
        %p386 = pneg %p133
        %p387 = pneg %p130
        %p388 = scmp.lt.s32.totalorder %s23, 1
        %s389 = scalar_select %p388, %s23, 1
        %s390 = smul.addr %s389, 7
        %s391 = scalar_lea.vmem %s5, %s390
        %p392 = pneg %p159
        %p393 = pneg %p156
        %s394 = smul.u32 25, %s23
        %p395 = scmp.lt.s32.totalorder %s394, 49
        %s396 = scalar_select %p395, %s394, 49
        %s397 = smul.addr %s396, 10
        %s398 = smul.addr %s397, 8
        %s399 = scalar_lea.vmem %s6, %s398
        %p400 = pneg %p185
        %p401 = pneg %p182
        %p402 = pneg %p206
        %p403 = pneg %p203
        %p404 = pneg %p227
        %p405 = pneg %p224
        %p406 = pneg %p248
        %p407 = pneg %p245
        %p408 = pneg %p269
        %p409 = pneg %p266
        %p410 = pneg %p290
        %p411 = pneg %p287
        %p412 = scmp.lt.s32.totalorder %s23, 1
        %s413 = scalar_select %p412, %s23, 1
        %s414 = smul.addr %s413, 250
        %s415 = smul.addr %s414, 8
        %s416 = scalar_lea.vmem %s3, %s415
        %p417 = scmp.lt.s32.totalorder %s23, 1
        %s418 = scalar_select %p417, %s23, 1
        %s419 = smul.addr %s418, 7
        %s420 = scalar_lea.vmem %s4, %s419
        %p421 = scmp.lt.s32.totalorder %s23, 1
        %s422 = scalar_select %p421, %s23, 1
        %s423 = smul.addr %s422, 7
        %s424 = scalar_lea.vmem %s5, %s423
        %s425 = smul.u32 25, %s23
        %p426 = scmp.lt.s32.totalorder %s425, 49
        %s427 = scalar_select %p426, %s425, 49
        %s428 = smul.addr %s427, 10
        %s429 = smul.addr %s428, 8
        %s430 = scalar_lea.vmem %s6, %s429
        %s431 = smul.u32 25, %s23
        %p433 = scmp.eq.s32.totalorder %s23, 0
        // Predicated region
        $region65: #{tpu_custom_call.1} parent=63 // pred_check
          %p434 = pneg %p433
        $region66: #{tpu_custom_call.1} parent=63 // pred_check_branch
          %436 = sbr.rel (%p434) target = $region68
        $region67: #{tpu_custom_call.1} parent=63 // pred_region
          %v437 = vld [vmem:[%s0] sm:$0xff]
          %v438 = vpack.c.bf16 %v437, %v437
          %v439 = vld [vmem:[%s1] sm:$0xff]
          %v440 = vld [vmem:[%s1 + $0x8] sm:$0xff]
          %v441 = vld [vmem:[%s1 + $0x10] sm:$0xff]
          %v442 = vld [vmem:[%s1 + $0x18] sm:$0xff]
          %v443 = vld [vmem:[%s1 + $0x20] sm:$0xff]
          %v444 = vld [vmem:[%s1 + $0x28] sm:$0xff]
          %v445 = vld [vmem:[%s1 + $0x30] sm:$0xff]
          %v446 = vld [vmem:[%s1 + $0x38] sm:$0xff]
          %v447 = vld [vmem:[%s1 + $0x40] sm:$0xff]
          %v448 = vld [vmem:[%s1 + $0x48] sm:$0xff]
          %v449 = vld [vmem:[%s1 + $0x50] sm:$0xff]
          %v450 = vld [vmem:[%s1 + $0x58] sm:$0xff]
          %v451 = vld [vmem:[%s1 + $0x60] sm:$0xff]
          %v452 = vld [vmem:[%s1 + $0x68] sm:$0xff]
          %v453 = vld [vmem:[%s1 + $0x70] sm:$0xff]
          %v454 = vld [vmem:[%s1 + $0x78] sm:$0xff]
          %v455 = vld [vmem:[%s1 + $0x80] sm:$0xff]
          %v456 = vld [vmem:[%s1 + $0x88] sm:$0xff]
          %v457 = vld [vmem:[%s1 + $0x90] sm:$0xff]
          %v458 = vld [vmem:[%s1 + $0x98] sm:$0xff]
          %v459 = vld [vmem:[%s2] sm:$0xff]
          %v460 = vld [vmem:[%s2 + $0x8] sm:$0x3]
          %v463 = vlaneseq
          %v464 = vshrl.u32 %v463, 7
          %v465 = vsub.s32 0, %v464
          %v466 = vrot.slane %v459, %v465
          %v467 = vlaneseq
          %v468 = vshrl.u32 %v467, 7
          %v469 = vsub.s32 1, %v468
          %v470 = vrot.slane %v459, %v469
          %v471 = vlaneseq
          %v472 = vshrl.u32 %v471, 7
          %v473 = vsub.s32 2, %v472
          %v474 = vrot.slane %v459, %v473
          %v475 = vlaneseq
          %v476 = vshrl.u32 %v475, 7
          %v477 = vsub.s32 3, %v476
          %v478 = vrot.slane %v459, %v477
          %v479 = vlaneseq
          %v480 = vshrl.u32 %v479, 7
          %v481 = vsub.s32 4, %v480
          %v482 = vrot.slane %v459, %v481
          %v483 = vlaneseq
          %v484 = vshrl.u32 %v483, 7
          %v485 = vsub.s32 5, %v484
          %v486 = vrot.slane %v459, %v485
          %v487 = vlaneseq
          %v488 = vshrl.u32 %v487, 7
          %v489 = vsub.s32 6, %v488
          %v490 = vrot.slane %v459, %v489
          %v491 = vlaneseq
          %v492 = vshrl.u32 %v491, 7
          %v493 = vsub.s32 7, %v492
          %v494 = vrot.slane %v459, %v493
          %v495 = vlaneseq
          %v496 = vshrl.u32 %v495, 7
          %v497 = vsub.s32 0, %v496
          %v498 = vrot.slane %v460, %v497
          %v499 = vlaneseq
          %v500 = vshrl.u32 %v499, 7
          %v501 = vsub.s32 1, %v500
          %v502 = vrot.slane %v460, %v501
          %v533 = vunpack.c.l.b16 %v439
          %v534 = vunpack.c.h.b16 %v439
          %v535 = vunpack.c.l.b16 %v440
          %v536 = vunpack.c.h.b16 %v440
          %v537 = vunpack.c.l.b16 %v441
          %v538 = vunpack.c.h.b16 %v441
          %v539 = vunpack.c.l.b16 %v442
          %v540 = vunpack.c.h.b16 %v442
          %v541 = vunpack.c.l.b16 %v443
          %v542 = vunpack.c.h.b16 %v443
          %v543 = vunpack.c.l.b16 %v444
          %v544 = vunpack.c.h.b16 %v444
          %v545 = vunpack.c.l.b16 %v445
          %v546 = vunpack.c.h.b16 %v445
          %v547 = vunpack.c.l.b16 %v446
          %v548 = vunpack.c.h.b16 %v446
          %v549 = vunpack.c.l.b16 %v447
          %v550 = vunpack.c.h.b16 %v447
          %v551 = vunpack.c.l.b16 %v448
          %v552 = vunpack.c.h.b16 %v448
          %v553 = vunpack.c.l.b16 %v449
          %v554 = vunpack.c.h.b16 %v449
          %v555 = vunpack.c.l.b16 %v450
          %v556 = vunpack.c.h.b16 %v450
          %v557 = vunpack.c.l.b16 %v451
          %v558 = vunpack.c.h.b16 %v451
          %v559 = vunpack.c.l.b16 %v452
          %v560 = vunpack.c.h.b16 %v452
          %v561 = vunpack.c.l.b16 %v453
          %v562 = vunpack.c.h.b16 %v453
          %v563 = vunpack.c.l.b16 %v454
          %v564 = vunpack.c.h.b16 %v454
          %v565 = vunpack.c.l.b16 %v455
          %v566 = vunpack.c.h.b16 %v455
          %v567 = vunpack.c.l.b16 %v456
          %v568 = vunpack.c.h.b16 %v456
          %v569 = vunpack.c.l.b16 %v457
          %v570 = vunpack.c.h.b16 %v457
          %v571 = vunpack.c.l.b16 %v458
          %v572 = vunpack.c.h.b16 %v458
          %v573 = vpack.c.b16 %v543, %v533
          %v574 = vpack.c.b16 %v544, %v534
          %v575 = vpack.c.b16 %v545, %v535
          %v576 = vpack.c.b16 %v546, %v536
          %v577 = vpack.c.b16 %v547, %v537
          %v578 = vpack.c.b16 %v548, %v538
          %v579 = vpack.c.b16 %v549, %v539
          %v580 = vpack.c.b16 %v550, %v540
          %v581 = vpack.c.b16 %v551, %v541
          %v582 = vpack.c.b16 %v552, %v542
          %v583 = vpack.c.b16 %v563, %v553
          %v584 = vpack.c.b16 %v564, %v554
          %v585 = vpack.c.b16 %v565, %v555
          %v586 = vpack.c.b16 %v566, %v556
          %v587 = vpack.c.b16 %v567, %v557
          %v588 = vpack.c.b16 %v568, %v558
          %v589 = vpack.c.b16 %v569, %v559
          %v590 = vpack.c.b16 %v570, %v560
          %v591 = vpack.c.b16 %v571, %v561
          %v592 = vpack.c.b16 %v572, %v562
          %vm613 = vcmask 261120
          %v615 = vsel %vm613, %v438, 0
          %617 = vmatprep.subr.bf16.mxu0 0
          %618 = vmatpush1.bf16.msra.mxu0 0
          %619 = vmatprep.subr.bf16.mxu0 0
          %620 = vmatpush1.bf16.msra.mxu0 0
          %621 = vmatprep.subr.bf16.mxu0 0
          %622 = vmatpush1.bf16.msra.mxu0 0
          %623 = vmatprep.subr.bf16.mxu0 0
          %624 = vmatpush1.bf16.msra.mxu0 0
          %625 = vmatprep.subr.bf16.mxu0 0
          %626 = vmatpush1.bf16.msra.mxu0 0
          %627 = vmatprep.subr.bf16.mxu0 0
          %628 = vmatpush1.bf16.msra.mxu0 0
          %629 = vmatprep.subr.bf16.mxu0 %v584
          %630 = vmatpush1.bf16.msra.mxu0 %v583
          %631 = vmatprep.subr.bf16.mxu0 %v574
          %632 = vmatpush1.bf16.msra.mxu0 %v573
          %633 = vmatprep.subr.bf16.mxu0 0
          %634 = vmatpush2.bf16.msra.mxu0 0
          %635 = vmatprep.subr.bf16.mxu0 0
          %636 = vmatpush2.bf16.msra.mxu0 0
          %637 = vmatprep.subr.bf16.mxu0 0
          %638 = vmatpush2.bf16.msra.mxu0 0
          %639 = vmatprep.subr.bf16.mxu0 0
          %640 = vmatpush2.bf16.msra.mxu0 0
          %641 = vmatprep.subr.bf16.mxu0 0
          %642 = vmatpush2.bf16.msra.mxu0 0
          %643 = vmatprep.subr.bf16.mxu0 0
          %644 = vmatpush2.bf16.msra.mxu0 0
          %645 = vmatprep.subr.bf16.mxu0 0
          %646 = vmatpush2.bf16.msra.mxu0 0
          %647 = vmatprep.subr.bf16.mxu0 0
          %648 = vmatpush2.bf16.msra.mxu0 0
          %649 = vmatprep.mubr.bf16.mxu0 0
          %650 = vmatmul.mubr.bf16.gmra.mxu0 %v615
          %v651 = vpop.f32.mrf.mxu0
          %v652 = vadd.f32 %v466, %v651
          %v653 = vpop.f32.mrf.mxu0
          %v654 = vadd.f32 %v470, %v653
          %v655 = vpop.f32.mrf.mxu0
          %v656 = vpop.f32.mrf.mxu0
          %657 = vdwg.mxu0
          %658 = vmatprep.subr.bf16.mxu0 0
          %659 = vmatpush1.bf16.msra.mxu0 0
          %660 = vmatprep.subr.bf16.mxu0 0
          %661 = vmatpush1.bf16.msra.mxu0 0
          %662 = vmatprep.subr.bf16.mxu0 0
          %663 = vmatpush1.bf16.msra.mxu0 0
          %664 = vmatprep.subr.bf16.mxu0 0
          %665 = vmatpush1.bf16.msra.mxu0 0
          %666 = vmatprep.subr.bf16.mxu0 0
          %667 = vmatpush1.bf16.msra.mxu0 0
          %668 = vmatprep.subr.bf16.mxu0 0
          %669 = vmatpush1.bf16.msra.mxu0 0
          %670 = vmatprep.subr.bf16.mxu0 %v586
          %671 = vmatpush1.bf16.msra.mxu0 %v585
          %672 = vmatprep.subr.bf16.mxu0 %v576
          %673 = vmatpush1.bf16.msra.mxu0 %v575
          %674 = vmatprep.subr.bf16.mxu0 0
          %675 = vmatpush2.bf16.msra.mxu0 0
          %676 = vmatprep.subr.bf16.mxu0 0
          %677 = vmatpush2.bf16.msra.mxu0 0
          %678 = vmatprep.subr.bf16.mxu0 0
          %679 = vmatpush2.bf16.msra.mxu0 0
          %680 = vmatprep.subr.bf16.mxu0 0
          %681 = vmatpush2.bf16.msra.mxu0 0
          %682 = vmatprep.subr.bf16.mxu0 0
          %683 = vmatpush2.bf16.msra.mxu0 0
          %684 = vmatprep.subr.bf16.mxu0 0
          %685 = vmatpush2.bf16.msra.mxu0 0
          %686 = vmatprep.subr.bf16.mxu0 0
          %687 = vmatpush2.bf16.msra.mxu0 0
          %688 = vmatprep.subr.bf16.mxu0 0
          %689 = vmatpush2.bf16.msra.mxu0 0
          %690 = vmatprep.mubr.bf16.mxu0 0
          %691 = vmatmul.mubr.bf16.gmra.mxu0 %v615
          %v692 = vpop.f32.mrf.mxu0
          %v693 = vadd.f32 %v474, %v692
          %v694 = vpop.f32.mrf.mxu0
          %v695 = vadd.f32 %v478, %v694
          %v696 = vpop.f32.mrf.mxu0
          %v697 = vpop.f32.mrf.mxu0
          %698 = vdwg.mxu0
          %699 = vmatprep.subr.bf16.mxu0 0
          %700 = vmatpush1.bf16.msra.mxu0 0
          %701 = vmatprep.subr.bf16.mxu0 0
          %702 = vmatpush1.bf16.msra.mxu0 0
          %703 = vmatprep.subr.bf16.mxu0 0
          %704 = vmatpush1.bf16.msra.mxu0 0
          %705 = vmatprep.subr.bf16.mxu0 0
          %706 = vmatpush1.bf16.msra.mxu0 0
          %707 = vmatprep.subr.bf16.mxu0 0
          %708 = vmatpush1.bf16.msra.mxu0 0
          %709 = vmatprep.subr.bf16.mxu0 0
          %710 = vmatpush1.bf16.msra.mxu0 0
          %711 = vmatprep.subr.bf16.mxu0 %v588
          %712 = vmatpush1.bf16.msra.mxu0 %v587
          %713 = vmatprep.subr.bf16.mxu0 %v578
          %714 = vmatpush1.bf16.msra.mxu0 %v577
          %715 = vmatprep.subr.bf16.mxu0 0
          %716 = vmatpush2.bf16.msra.mxu0 0
          %717 = vmatprep.subr.bf16.mxu0 0
          %718 = vmatpush2.bf16.msra.mxu0 0
          %719 = vmatprep.subr.bf16.mxu0 0
          %720 = vmatpush2.bf16.msra.mxu0 0
          %721 = vmatprep.subr.bf16.mxu0 0
          %722 = vmatpush2.bf16.msra.mxu0 0
          %723 = vmatprep.subr.bf16.mxu0 0
          %724 = vmatpush2.bf16.msra.mxu0 0
          %725 = vmatprep.subr.bf16.mxu0 0
          %726 = vmatpush2.bf16.msra.mxu0 0
          %727 = vmatprep.subr.bf16.mxu0 0
          %728 = vmatpush2.bf16.msra.mxu0 0
          %729 = vmatprep.subr.bf16.mxu0 0
          %730 = vmatpush2.bf16.msra.mxu0 0
          %731 = vmatprep.mubr.bf16.mxu0 0
          %732 = vmatmul.mubr.bf16.gmra.mxu0 %v615
          %v733 = vpop.f32.mrf.mxu0
          %v734 = vadd.f32 %v482, %v733
          %v735 = vpop.f32.mrf.mxu0
          %v736 = vadd.f32 %v486, %v735
          %v737 = vpop.f32.mrf.mxu0
          %v738 = vpop.f32.mrf.mxu0
          %739 = vdwg.mxu0
          %740 = vmatprep.subr.bf16.mxu0 0
          %741 = vmatpush1.bf16.msra.mxu0 0
          %742 = vmatprep.subr.bf16.mxu0 0
          %743 = vmatpush1.bf16.msra.mxu0 0
          %744 = vmatprep.subr.bf16.mxu0 0
          %745 = vmatpush1.bf16.msra.mxu0 0
          %746 = vmatprep.subr.bf16.mxu0 0
          %747 = vmatpush1.bf16.msra.mxu0 0
          %748 = vmatprep.subr.bf16.mxu0 0
          %749 = vmatpush1.bf16.msra.mxu0 0
          %750 = vmatprep.subr.bf16.mxu0 0
          %751 = vmatpush1.bf16.msra.mxu0 0
          %752 = vmatprep.subr.bf16.mxu0 %v590
          %753 = vmatpush1.bf16.msra.mxu0 %v589
          %754 = vmatprep.subr.bf16.mxu0 %v580
          %755 = vmatpush1.bf16.msra.mxu0 %v579
          %756 = vmatprep.subr.bf16.mxu0 0
          %757 = vmatpush2.bf16.msra.mxu0 0
          %758 = vmatprep.subr.bf16.mxu0 0
          %759 = vmatpush2.bf16.msra.mxu0 0
          %760 = vmatprep.subr.bf16.mxu0 0
          %761 = vmatpush2.bf16.msra.mxu0 0
          %762 = vmatprep.subr.bf16.mxu0 0
          %763 = vmatpush2.bf16.msra.mxu0 0
          %764 = vmatprep.subr.bf16.mxu0 0
          %765 = vmatpush2.bf16.msra.mxu0 0
          %766 = vmatprep.subr.bf16.mxu0 0
          %767 = vmatpush2.bf16.msra.mxu0 0
          %768 = vmatprep.subr.bf16.mxu0 0
          %769 = vmatpush2.bf16.msra.mxu0 0
          %770 = vmatprep.subr.bf16.mxu0 0
          %771 = vmatpush2.bf16.msra.mxu0 0
          %772 = vmatprep.mubr.bf16.mxu0 0
          %773 = vmatmul.mubr.bf16.gmra.mxu0 %v615
          %v774 = vpop.f32.mrf.mxu0
          %v775 = vadd.f32 %v490, %v774
          %v776 = vpop.f32.mrf.mxu0
          %v777 = vadd.f32 %v494, %v776
          %v778 = vpop.f32.mrf.mxu0
          %v779 = vpop.f32.mrf.mxu0
          %780 = vdwg.mxu0
          %781 = vmatprep.subr.bf16.mxu0 0
          %782 = vmatpush1.bf16.msra.mxu0 0
          %783 = vmatprep.subr.bf16.mxu0 0
          %784 = vmatpush1.bf16.msra.mxu0 0
          %785 = vmatprep.subr.bf16.mxu0 0
          %786 = vmatpush1.bf16.msra.mxu0 0
          %787 = vmatprep.subr.bf16.mxu0 0
          %788 = vmatpush1.bf16.msra.mxu0 0
          %789 = vmatprep.subr.bf16.mxu0 0
          %790 = vmatpush1.bf16.msra.mxu0 0
          %791 = vmatprep.subr.bf16.mxu0 0
          %792 = vmatpush1.bf16.msra.mxu0 0
          %793 = vmatprep.subr.bf16.mxu0 %v592
          %794 = vmatpush1.bf16.msra.mxu0 %v591
          %795 = vmatprep.subr.bf16.mxu0 %v582
          %796 = vmatpush1.bf16.msra.mxu0 %v581
          %797 = vmatprep.subr.bf16.mxu0 0
          %798 = vmatpush2.bf16.msra.mxu0 0
          %799 = vmatprep.subr.bf16.mxu0 0
          %800 = vmatpush2.bf16.msra.mxu0 0
          %801 = vmatprep.subr.bf16.mxu0 0
          %802 = vmatpush2.bf16.msra.mxu0 0
          %803 = vmatprep.subr.bf16.mxu0 0
          %804 = vmatpush2.bf16.msra.mxu0 0
          %805 = vmatprep.subr.bf16.mxu0 0
          %806 = vmatpush2.bf16.msra.mxu0 0
          %807 = vmatprep.subr.bf16.mxu0 0
          %808 = vmatpush2.bf16.msra.mxu0 0
          %809 = vmatprep.subr.bf16.mxu0 0
          %810 = vmatpush2.bf16.msra.mxu0 0
          %811 = vmatprep.subr.bf16.mxu0 0
          %812 = vmatpush2.bf16.msra.mxu0 0
          %813 = vmatprep.mubr.bf16.mxu0 0
          %814 = vmatmul.mubr.bf16.gmra.mxu0 %v615
          %v815 = vpop.f32.mrf.mxu0
          %v816 = vadd.f32 %v498, %v815
          %v817 = vpop.f32.mrf.mxu0
          %v818 = vadd.f32 %v502, %v817
          %v819 = vpop.f32.mrf.mxu0
          %v820 = vpop.f32.mrf.mxu0
          %821 = vdwg.mxu0
          %v822 = vmax.f32 %v652, 0.0
          %v823 = vmax.f32 %v654, 0.0
          %v824 = vmax.f32 %v693, 0.0
          %v825 = vmax.f32 %v695, 0.0
          %v826 = vmax.f32 %v734, 0.0
          %v827 = vmax.f32 %v736, 0.0
          %v828 = vmax.f32 %v775, 0.0
          %v829 = vmax.f32 %v777, 0.0
          %v830 = vmax.f32 %v816, 0.0
          %v831 = vmax.f32 %v818, 0.0
          %v832 = vpack.c.bf16 %v822, %v822
          %v833 = vpack.c.bf16 %v823, %v823
          %v834 = vpack.c.bf16 %v824, %v824
          %v835 = vpack.c.bf16 %v825, %v825
          %v836 = vpack.c.bf16 %v826, %v826
          %v837 = vpack.c.bf16 %v827, %v827
          %v838 = vpack.c.bf16 %v828, %v828
          %v839 = vpack.c.bf16 %v829, %v829
          %v840 = vpack.c.bf16 %v830, %v830
          %v841 = vpack.c.bf16 %v831, %v831
          %v852 = vunpack.c.l.b16 %v832
          %v853 = vunpack.c.l.b16 %v833
          %v854 = vunpack.c.l.b16 %v834
          %v855 = vunpack.c.l.b16 %v835
          %v856 = vunpack.c.l.b16 %v836
          %v857 = vunpack.c.l.b16 %v837
          %v858 = vunpack.c.l.b16 %v838
          %v859 = vunpack.c.l.b16 %v839
          %v860 = vunpack.c.l.b16 %v840
          %v861 = vunpack.c.l.b16 %v841
          %v862 = vpack.c.b16 %v853, %v852
          %v863 = vpack.c.b16 %v855, %v854
          %v864 = vpack.c.b16 %v857, %v856
          %v865 = vpack.c.b16 %v859, %v858
          %v866 = vpack.c.b16 %v861, %v860
          %872 = vst [vmem:[#allocation2] sm:$0xff] %v862
          %873 = vst [vmem:[#allocation2 + $0x8] sm:$0xff] %v863
          %874 = vst [vmem:[#allocation2 + $0x10] sm:$0xff] %v864
          %875 = vst [vmem:[#allocation2 + $0x18] sm:$0xff] %v865
          %vm876 = vcmask 1043456
          %vm877 = vcmask 392196
          %vm878 = vmor %vm877, %vm876
          %879 = vst.msk [vmem:[#allocation2 + $0x20] sm:$0xff] %vm878, %v866
          %880 = vst [vmem:[#allocation3] sm:$0xff] 0.0
          %881 = vst [vmem:[#allocation3 + $0x8] sm:$0xff] 0.0
          %882 = vst [vmem:[#allocation3 + $0x10] sm:$0xff] 0.0
          %883 = vst [vmem:[#allocation3 + $0x18] sm:$0xff] 0.0
          %884 = vst [vmem:[#allocation3 + $0x20] sm:$0xff] 0.0
          %885 = vst [vmem:[#allocation3 + $0x28] sm:$0xff] 0.0
          %886 = vst [vmem:[#allocation3 + $0x30] sm:$0xff] 0.0
          %887 = vst [vmem:[#allocation3 + $0x38] sm:$0xff] 0.0
          %888 = vst [vmem:[#allocation3 + $0x40] sm:$0xff] 0.0
          %vm889 = vcmask 392192
          %890 = vst.msk [vmem:[#allocation3 + $0x48] sm:$0xff] %vm889, 0.0
        $region68: #{tpu_custom_call.1} parent=63 // pred_fallthru
          _
        %v891 = vld [vmem:[%s416] sm:$0xff]
        %v892 = vld [vmem:[%s416 + $0x8] sm:$0xff]
        %v893 = vld [vmem:[%s416 + $0x10] sm:$0xff]
        %v894 = vld [vmem:[%s416 + $0x18] sm:$0xff]
        %v895 = vld [vmem:[%s416 + $0x20] sm:$0xff]
        %v896 = vld [vmem:[%s416 + $0x28] sm:$0xff]
        %v897 = vld [vmem:[%s416 + $0x30] sm:$0xff]
        %v898 = vld [vmem:[%s416 + $0x38] sm:$0xff]
        %v899 = vld [vmem:[%s416 + $0x40] sm:$0xff]
        %v900 = vld [vmem:[%s416 + $0x48] sm:$0xff]
        %v901 = vld [vmem:[%s416 + $0x50] sm:$0xff]
        %v902 = vld [vmem:[%s416 + $0x58] sm:$0xff]
        %v903 = vld [vmem:[%s416 + $0x60] sm:$0xff]
        %v904 = vld [vmem:[%s416 + $0x68] sm:$0xff]
        %v905 = vld [vmem:[%s416 + $0x70] sm:$0xff]
        %v906 = vld [vmem:[%s416 + $0x78] sm:$0xff]
        %v907 = vld [vmem:[%s416 + $0x80] sm:$0xff]
        %v908 = vld [vmem:[%s416 + $0x88] sm:$0xff]
        %v909 = vld [vmem:[%s416 + $0x90] sm:$0xff]
        %v910 = vld [vmem:[%s416 + $0x98] sm:$0xff]
        %v911 = vld [vmem:[%s416 + $0xa0] sm:$0xff]
        %v912 = vld [vmem:[%s416 + $0xa8] sm:$0xff]
        %v913 = vld [vmem:[%s416 + $0xb0] sm:$0xff]
        %v914 = vld [vmem:[%s416 + $0xb8] sm:$0xff]
        %v915 = vld [vmem:[%s416 + $0xc0] sm:$0xff]
        %v916 = vld [vmem:[%s416 + $0xc8] sm:$0xff]
        %v917 = vld [vmem:[%s416 + $0xd0] sm:$0xff]
        %v918 = vld [vmem:[%s416 + $0xd8] sm:$0xff]
        %v919 = vld [vmem:[%s416 + $0xe0] sm:$0xff]
        %v920 = vld [vmem:[%s416 + $0xe8] sm:$0xff]
        %v921 = vld [vmem:[%s416 + $0xf0] sm:$0xff]
        %v922 = vld [vmem:[%s416 + $0xf8] sm:$0xff]
        %v923 = vld [vmem:[%s416 + $0x100] sm:$0xff]
        %v924 = vld [vmem:[%s416 + $0x108] sm:$0xff]
        %v925 = vld [vmem:[%s416 + $0x110] sm:$0xff]
        %v926 = vld [vmem:[%s416 + $0x118] sm:$0xff]
        %v927 = vld [vmem:[%s416 + $0x120] sm:$0xff]
        %v928 = vld [vmem:[%s416 + $0x128] sm:$0xff]
        %v929 = vld [vmem:[%s416 + $0x130] sm:$0xff]
        %v930 = vld [vmem:[%s416 + $0x138] sm:$0xff]
        %v931 = vld [vmem:[%s416 + $0x140] sm:$0xff]
        %v932 = vld [vmem:[%s416 + $0x148] sm:$0xff]
        %v933 = vld [vmem:[%s416 + $0x150] sm:$0xff]
        %v934 = vld [vmem:[%s416 + $0x158] sm:$0xff]
        %v935 = vld [vmem:[%s416 + $0x160] sm:$0xff]
        %v936 = vld [vmem:[%s416 + $0x168] sm:$0xff]
        %v937 = vld [vmem:[%s416 + $0x170] sm:$0xff]
        %v938 = vld [vmem:[%s416 + $0x178] sm:$0xff]
        %v939 = vld [vmem:[%s416 + $0x180] sm:$0xff]
        %v940 = vld [vmem:[%s416 + $0x188] sm:$0xff]
        %v941 = vld [vmem:[%s416 + $0x190] sm:$0xff]
        %v942 = vld [vmem:[%s416 + $0x198] sm:$0xff]
        %v943 = vld [vmem:[%s416 + $0x1a0] sm:$0xff]
        %v944 = vld [vmem:[%s416 + $0x1a8] sm:$0xff]
        %v945 = vld [vmem:[%s416 + $0x1b0] sm:$0xff]
        %v946 = vld [vmem:[%s416 + $0x1b8] sm:$0xff]
        %v947 = vld [vmem:[%s416 + $0x1c0] sm:$0xff]
        %v948 = vld [vmem:[%s416 + $0x1c8] sm:$0xff]
        %v949 = vld [vmem:[%s416 + $0x1d0] sm:$0xff]
        %v950 = vld [vmem:[%s416 + $0x1d8] sm:$0xff]
        %v951 = vld [vmem:[%s416 + $0x1e0] sm:$0xff]
        %v952 = vld [vmem:[%s416 + $0x1e8] sm:$0xff]
        %v953 = vld [vmem:[%s416 + $0x1f0] sm:$0xff]
        %v954 = vld [vmem:[%s416 + $0x1f8] sm:$0xff]
        %v955 = vld [vmem:[%s416 + $0x200] sm:$0xff]
        %v956 = vld [vmem:[%s416 + $0x208] sm:$0xff]
        %v957 = vld [vmem:[%s416 + $0x210] sm:$0xff]
        %v958 = vld [vmem:[%s416 + $0x218] sm:$0xff]
        %v959 = vld [vmem:[%s416 + $0x220] sm:$0xff]
        %v960 = vld [vmem:[%s416 + $0x228] sm:$0xff]
        %v961 = vld [vmem:[%s416 + $0x230] sm:$0xff]
        %v962 = vld [vmem:[%s416 + $0x238] sm:$0xff]
        %v963 = vld [vmem:[%s416 + $0x240] sm:$0xff]
        %v964 = vld [vmem:[%s416 + $0x248] sm:$0xff]
        %v965 = vld [vmem:[%s416 + $0x250] sm:$0xff]
        %v966 = vld [vmem:[%s416 + $0x258] sm:$0xff]
        %v967 = vld [vmem:[%s416 + $0x260] sm:$0xff]
        %v968 = vld [vmem:[%s416 + $0x268] sm:$0xff]
        %v969 = vld [vmem:[%s416 + $0x270] sm:$0xff]
        %v970 = vld [vmem:[%s416 + $0x278] sm:$0xff]
        %v971 = vld [vmem:[%s416 + $0x280] sm:$0xff]
        %v972 = vld [vmem:[%s416 + $0x288] sm:$0xff]
        %v973 = vld [vmem:[%s416 + $0x290] sm:$0xff]
        %v974 = vld [vmem:[%s416 + $0x298] sm:$0xff]
        %v975 = vld [vmem:[%s416 + $0x2a0] sm:$0xff]
        %v976 = vld [vmem:[%s416 + $0x2a8] sm:$0xff]
        %v977 = vld [vmem:[%s416 + $0x2b0] sm:$0xff]
        %v978 = vld [vmem:[%s416 + $0x2b8] sm:$0xff]
        %v979 = vld [vmem:[%s416 + $0x2c0] sm:$0xff]
        %v980 = vld [vmem:[%s416 + $0x2c8] sm:$0xff]
        %v981 = vld [vmem:[%s416 + $0x2d0] sm:$0xff]
        %v982 = vld [vmem:[%s416 + $0x2d8] sm:$0xff]
        %v983 = vld [vmem:[%s416 + $0x2e0] sm:$0xff]
        %v984 = vld [vmem:[%s416 + $0x2e8] sm:$0xff]
        %v985 = vld [vmem:[%s416 + $0x2f0] sm:$0xff]
        %v986 = vld [vmem:[%s416 + $0x2f8] sm:$0xff]
        %v987 = vld [vmem:[%s416 + $0x300] sm:$0xff]
        %v988 = vld [vmem:[%s416 + $0x308] sm:$0xff]
        %v989 = vld [vmem:[%s416 + $0x310] sm:$0xff]
        %v990 = vld [vmem:[%s416 + $0x318] sm:$0xff]
        %v991 = vld [vmem:[%s416 + $0x320] sm:$0xff]
        %v992 = vld [vmem:[%s416 + $0x328] sm:$0xff]
        %v993 = vld [vmem:[%s416 + $0x330] sm:$0xff]
        %v994 = vld [vmem:[%s416 + $0x338] sm:$0xff]
        %v995 = vld [vmem:[%s416 + $0x340] sm:$0xff]
        %v996 = vld [vmem:[%s416 + $0x348] sm:$0xff]
        %v997 = vld [vmem:[%s416 + $0x350] sm:$0xff]
        %v998 = vld [vmem:[%s416 + $0x358] sm:$0xff]
        %v999 = vld [vmem:[%s416 + $0x360] sm:$0xff]
        %v1000 = vld [vmem:[%s416 + $0x368] sm:$0xff]
        %v1001 = vld [vmem:[%s416 + $0x370] sm:$0xff]
        %v1002 = vld [vmem:[%s416 + $0x378] sm:$0xff]
        %v1003 = vld [vmem:[%s416 + $0x380] sm:$0xff]
        %v1004 = vld [vmem:[%s416 + $0x388] sm:$0xff]
        %v1005 = vld [vmem:[%s416 + $0x390] sm:$0xff]
        %v1006 = vld [vmem:[%s416 + $0x398] sm:$0xff]
        %v1007 = vld [vmem:[%s416 + $0x3a0] sm:$0xff]
        %v1008 = vld [vmem:[%s416 + $0x3a8] sm:$0xff]
        %v1009 = vld [vmem:[%s416 + $0x3b0] sm:$0xff]
        %v1010 = vld [vmem:[%s416 + $0x3b8] sm:$0xff]
        %v1011 = vld [vmem:[%s416 + $0x3c0] sm:$0xff]
        %v1012 = vld [vmem:[%s416 + $0x3c8] sm:$0xff]
        %v1013 = vld [vmem:[%s416 + $0x3d0] sm:$0xff]
        %v1014 = vld [vmem:[%s416 + $0x3d8] sm:$0xff]
        %v1015 = vld [vmem:[%s416 + $0x3e0] sm:$0xff]
        %v1016 = vld [vmem:[%s416 + $0x3e8] sm:$0xff]
        %v1017 = vld [vmem:[%s416 + $0x3f0] sm:$0xff]
        %v1018 = vld [vmem:[%s416 + $0x3f8] sm:$0xff]
        %v1019 = vld [vmem:[%s416 + $0x400] sm:$0xff]
        %v1020 = vld [vmem:[%s416 + $0x408] sm:$0xff]
        %v1021 = vld [vmem:[%s416 + $0x410] sm:$0xff]
        %v1022 = vld [vmem:[%s416 + $0x418] sm:$0xff]
        %v1023 = vld [vmem:[%s416 + $0x420] sm:$0xff]
        %v1024 = vld [vmem:[%s416 + $0x428] sm:$0xff]
        %v1025 = vld [vmem:[%s416 + $0x430] sm:$0xff]
        %v1026 = vld [vmem:[%s416 + $0x438] sm:$0xff]
        %v1027 = vld [vmem:[%s416 + $0x440] sm:$0xff]
        %v1028 = vld [vmem:[%s416 + $0x448] sm:$0xff]
        %v1029 = vld [vmem:[%s416 + $0x450] sm:$0xff]
        %v1030 = vld [vmem:[%s416 + $0x458] sm:$0xff]
        %v1031 = vld [vmem:[%s416 + $0x460] sm:$0xff]
        %v1032 = vld [vmem:[%s416 + $0x468] sm:$0xff]
        %v1033 = vld [vmem:[%s416 + $0x470] sm:$0xff]
        %v1034 = vld [vmem:[%s416 + $0x478] sm:$0xff]
        %v1035 = vld [vmem:[%s416 + $0x480] sm:$0xff]
        %v1036 = vld [vmem:[%s416 + $0x488] sm:$0xff]
        %v1037 = vld [vmem:[%s416 + $0x490] sm:$0xff]
        %v1038 = vld [vmem:[%s416 + $0x498] sm:$0xff]
        %v1039 = vld [vmem:[%s416 + $0x4a0] sm:$0xff]
        %v1040 = vld [vmem:[%s416 + $0x4a8] sm:$0xff]
        %v1041 = vld [vmem:[%s416 + $0x4b0] sm:$0xff]
        %v1042 = vld [vmem:[%s416 + $0x4b8] sm:$0xff]
        %v1043 = vld [vmem:[%s416 + $0x4c0] sm:$0xff]
        %v1044 = vld [vmem:[%s416 + $0x4c8] sm:$0xff]
        %v1045 = vld [vmem:[%s416 + $0x4d0] sm:$0xff]
        %v1046 = vld [vmem:[%s416 + $0x4d8] sm:$0xff]
        %v1047 = vld [vmem:[%s416 + $0x4e0] sm:$0xff]
        %v1048 = vld [vmem:[%s416 + $0x4e8] sm:$0xff]
        %v1049 = vld [vmem:[%s416 + $0x4f0] sm:$0xff]
        %v1050 = vld [vmem:[%s416 + $0x4f8] sm:$0xff]
        %v1051 = vld [vmem:[%s416 + $0x500] sm:$0xff]
        %v1052 = vld [vmem:[%s416 + $0x508] sm:$0xff]
        %v1053 = vld [vmem:[%s416 + $0x510] sm:$0xff]
        %v1054 = vld [vmem:[%s416 + $0x518] sm:$0xff]
        %v1055 = vld [vmem:[%s416 + $0x520] sm:$0xff]
        %v1056 = vld [vmem:[%s416 + $0x528] sm:$0xff]
        %v1057 = vld [vmem:[%s416 + $0x530] sm:$0xff]
        %v1058 = vld [vmem:[%s416 + $0x538] sm:$0xff]
        %v1059 = vld [vmem:[%s416 + $0x540] sm:$0xff]
        %v1060 = vld [vmem:[%s416 + $0x548] sm:$0xff]
        %v1061 = vld [vmem:[%s416 + $0x550] sm:$0xff]
        %v1062 = vld [vmem:[%s416 + $0x558] sm:$0xff]
        %v1063 = vld [vmem:[%s416 + $0x560] sm:$0xff]
        %v1064 = vld [vmem:[%s416 + $0x568] sm:$0xff]
        %v1065 = vld [vmem:[%s416 + $0x570] sm:$0xff]
        %v1066 = vld [vmem:[%s416 + $0x578] sm:$0xff]
        %v1067 = vld [vmem:[%s416 + $0x580] sm:$0xff]
        %v1068 = vld [vmem:[%s416 + $0x588] sm:$0xff]
        %v1069 = vld [vmem:[%s416 + $0x590] sm:$0xff]
        %v1070 = vld [vmem:[%s416 + $0x598] sm:$0xff]
        %v1071 = vld [vmem:[%s416 + $0x5a0] sm:$0xff]
        %v1072 = vld [vmem:[%s416 + $0x5a8] sm:$0xff]
        %v1073 = vld [vmem:[%s416 + $0x5b0] sm:$0xff]
        %v1074 = vld [vmem:[%s416 + $0x5b8] sm:$0xff]
        %v1075 = vld [vmem:[%s416 + $0x5c0] sm:$0xff]
        %v1076 = vld [vmem:[%s416 + $0x5c8] sm:$0xff]
        %v1077 = vld [vmem:[%s416 + $0x5d0] sm:$0xff]
        %v1078 = vld [vmem:[%s416 + $0x5d8] sm:$0xff]
        %v1079 = vld [vmem:[%s416 + $0x5e0] sm:$0xff]
        %v1080 = vld [vmem:[%s416 + $0x5e8] sm:$0xff]
        %v1081 = vld [vmem:[%s416 + $0x5f0] sm:$0xff]
        %v1082 = vld [vmem:[%s416 + $0x5f8] sm:$0xff]
        %v1083 = vld [vmem:[%s416 + $0x600] sm:$0xff]
        %v1084 = vld [vmem:[%s416 + $0x608] sm:$0xff]
        %v1085 = vld [vmem:[%s416 + $0x610] sm:$0xff]
        %v1086 = vld [vmem:[%s416 + $0x618] sm:$0xff]
        %v1087 = vld [vmem:[%s416 + $0x620] sm:$0xff]
        %v1088 = vld [vmem:[%s416 + $0x628] sm:$0xff]
        %v1089 = vld [vmem:[%s416 + $0x630] sm:$0xff]
        %v1090 = vld [vmem:[%s416 + $0x638] sm:$0xff]
        %v1091 = vld [vmem:[%s416 + $0x640] sm:$0xff]
        %v1092 = vld [vmem:[%s416 + $0x648] sm:$0xff]
        %v1093 = vld [vmem:[%s416 + $0x650] sm:$0xff]
        %v1094 = vld [vmem:[%s416 + $0x658] sm:$0xff]
        %v1095 = vld [vmem:[%s416 + $0x660] sm:$0xff]
        %v1096 = vld [vmem:[%s416 + $0x668] sm:$0xff]
        %v1097 = vld [vmem:[%s416 + $0x670] sm:$0xff]
        %v1098 = vld [vmem:[%s416 + $0x678] sm:$0xff]
        %v1099 = vld [vmem:[%s416 + $0x680] sm:$0xff]
        %v1100 = vld [vmem:[%s416 + $0x688] sm:$0xff]
        %v1101 = vld [vmem:[%s416 + $0x690] sm:$0xff]
        %v1102 = vld [vmem:[%s416 + $0x698] sm:$0xff]
        %v1103 = vld [vmem:[%s416 + $0x6a0] sm:$0xff]
        %v1104 = vld [vmem:[%s416 + $0x6a8] sm:$0xff]
        %v1105 = vld [vmem:[%s416 + $0x6b0] sm:$0xff]
        %v1106 = vld [vmem:[%s416 + $0x6b8] sm:$0xff]
        %v1107 = vld [vmem:[%s416 + $0x6c0] sm:$0xff]
        %v1108 = vld [vmem:[%s416 + $0x6c8] sm:$0xff]
        %v1109 = vld [vmem:[%s416 + $0x6d0] sm:$0xff]
        %v1110 = vld [vmem:[%s416 + $0x6d8] sm:$0xff]
        %v1111 = vld [vmem:[%s416 + $0x6e0] sm:$0xff]
        %v1112 = vld [vmem:[%s416 + $0x6e8] sm:$0xff]
        %v1113 = vld [vmem:[%s416 + $0x6f0] sm:$0xff]
        %v1114 = vld [vmem:[%s416 + $0x6f8] sm:$0xff]
        %v1115 = vld [vmem:[%s416 + $0x700] sm:$0xff]
        %v1116 = vld [vmem:[%s416 + $0x708] sm:$0xff]
        %v1117 = vld [vmem:[%s416 + $0x710] sm:$0xff]
        %v1118 = vld [vmem:[%s416 + $0x718] sm:$0xff]
        %v1119 = vld [vmem:[%s416 + $0x720] sm:$0xff]
        %v1120 = vld [vmem:[%s416 + $0x728] sm:$0xff]
        %v1121 = vld [vmem:[%s416 + $0x730] sm:$0xff]
        %v1122 = vld [vmem:[%s416 + $0x738] sm:$0xff]
        %v1123 = vld [vmem:[%s416 + $0x740] sm:$0xff]
        %v1124 = vld [vmem:[%s416 + $0x748] sm:$0xff]
        %v1125 = vld [vmem:[%s416 + $0x750] sm:$0xff]
        %v1126 = vld [vmem:[%s416 + $0x758] sm:$0xff]
        %v1127 = vld [vmem:[%s416 + $0x760] sm:$0xff]
        %v1128 = vld [vmem:[%s416 + $0x768] sm:$0xff]
        %v1129 = vld [vmem:[%s416 + $0x770] sm:$0xff]
        %v1130 = vld [vmem:[%s416 + $0x778] sm:$0xff]
        %v1131 = vld [vmem:[%s416 + $0x780] sm:$0xff]
        %v1132 = vld [vmem:[%s416 + $0x788] sm:$0xff]
        %v1133 = vld [vmem:[%s416 + $0x790] sm:$0xff]
        %v1134 = vld [vmem:[%s416 + $0x798] sm:$0xff]
        %v1135 = vld [vmem:[%s416 + $0x7a0] sm:$0xff]
        %v1136 = vld [vmem:[%s416 + $0x7a8] sm:$0xff]
        %v1137 = vld [vmem:[%s416 + $0x7b0] sm:$0xff]
        %v1138 = vld [vmem:[%s416 + $0x7b8] sm:$0xff]
        %v1139 = vld [vmem:[%s416 + $0x7c0] sm:$0xff]
        %v1140 = vld [vmem:[%s416 + $0x7c8] sm:$0xff]
        %v1141 = vunpack.c.l.s8.bf16 %v891
        %v1142 = vunpack.c.l.s8.bf16 %v892
        %v1143 = vunpack.c.l.s8.bf16 %v893
        %v1144 = vunpack.c.l.s8.bf16 %v894
        %v1145 = vunpack.c.l.s8.bf16 %v895
        %v1146 = vunpack.c.l.s8.bf16 %v896
        %v1147 = vunpack.c.l.s8.bf16 %v897
        %v1148 = vunpack.c.l.s8.bf16 %v898
        %v1149 = vunpack.c.l.s8.bf16 %v899
        %v1150 = vunpack.c.l.s8.bf16 %v900
        %v1151 = vunpack.c.h.s8.bf16 %v891
        %v1152 = vunpack.c.h.s8.bf16 %v892
        %v1153 = vunpack.c.h.s8.bf16 %v893
        %v1154 = vunpack.c.h.s8.bf16 %v894
        %v1155 = vunpack.c.h.s8.bf16 %v895
        %v1156 = vunpack.c.h.s8.bf16 %v896
        %v1157 = vunpack.c.h.s8.bf16 %v897
        %v1158 = vunpack.c.h.s8.bf16 %v898
        %v1159 = vunpack.c.h.s8.bf16 %v899
        %v1160 = vunpack.c.h.s8.bf16 %v900
        %v1161 = vunpack.c.l.s8.bf16 %v901
        %v1162 = vunpack.c.l.s8.bf16 %v902
        %v1163 = vunpack.c.l.s8.bf16 %v903
        %v1164 = vunpack.c.l.s8.bf16 %v904
        %v1165 = vunpack.c.l.s8.bf16 %v905
        %v1166 = vunpack.c.l.s8.bf16 %v906
        %v1167 = vunpack.c.l.s8.bf16 %v907
        %v1168 = vunpack.c.l.s8.bf16 %v908
        %v1169 = vunpack.c.l.s8.bf16 %v909
        %v1170 = vunpack.c.l.s8.bf16 %v910
        %v1171 = vunpack.c.h.s8.bf16 %v901
        %v1172 = vunpack.c.h.s8.bf16 %v902
        %v1173 = vunpack.c.h.s8.bf16 %v903
        %v1174 = vunpack.c.h.s8.bf16 %v904
        %v1175 = vunpack.c.h.s8.bf16 %v905
        %v1176 = vunpack.c.h.s8.bf16 %v906
        %v1177 = vunpack.c.h.s8.bf16 %v907
        %v1178 = vunpack.c.h.s8.bf16 %v908
        %v1179 = vunpack.c.h.s8.bf16 %v909
        %v1180 = vunpack.c.h.s8.bf16 %v910
        %v1181 = vunpack.c.l.s8.bf16 %v911
        %v1182 = vunpack.c.l.s8.bf16 %v912
        %v1183 = vunpack.c.l.s8.bf16 %v913
        %v1184 = vunpack.c.l.s8.bf16 %v914
        %v1185 = vunpack.c.l.s8.bf16 %v915
        %v1186 = vunpack.c.l.s8.bf16 %v916
        %v1187 = vunpack.c.l.s8.bf16 %v917
        %v1188 = vunpack.c.l.s8.bf16 %v918
        %v1189 = vunpack.c.l.s8.bf16 %v919
        %v1190 = vunpack.c.l.s8.bf16 %v920
        %v1191 = vunpack.c.h.s8.bf16 %v911
        %v1192 = vunpack.c.h.s8.bf16 %v912
        %v1193 = vunpack.c.h.s8.bf16 %v913
        %v1194 = vunpack.c.h.s8.bf16 %v914
        %v1195 = vunpack.c.h.s8.bf16 %v915
        %v1196 = vunpack.c.h.s8.bf16 %v916
        %v1197 = vunpack.c.h.s8.bf16 %v917
        %v1198 = vunpack.c.h.s8.bf16 %v918
        %v1199 = vunpack.c.h.s8.bf16 %v919
        %v1200 = vunpack.c.h.s8.bf16 %v920
        %v1201 = vunpack.c.l.s8.bf16 %v921
        %v1202 = vunpack.c.l.s8.bf16 %v922
        %v1203 = vunpack.c.l.s8.bf16 %v923
        %v1204 = vunpack.c.l.s8.bf16 %v924
        %v1205 = vunpack.c.l.s8.bf16 %v925
        %v1206 = vunpack.c.l.s8.bf16 %v926
        %v1207 = vunpack.c.l.s8.bf16 %v927
        %v1208 = vunpack.c.l.s8.bf16 %v928
        %v1209 = vunpack.c.l.s8.bf16 %v929
        %v1210 = vunpack.c.l.s8.bf16 %v930
        %v1211 = vunpack.c.h.s8.bf16 %v921
        %v1212 = vunpack.c.h.s8.bf16 %v922
        %v1213 = vunpack.c.h.s8.bf16 %v923
        %v1214 = vunpack.c.h.s8.bf16 %v924
        %v1215 = vunpack.c.h.s8.bf16 %v925
        %v1216 = vunpack.c.h.s8.bf16 %v926
        %v1217 = vunpack.c.h.s8.bf16 %v927
        %v1218 = vunpack.c.h.s8.bf16 %v928
        %v1219 = vunpack.c.h.s8.bf16 %v929
        %v1220 = vunpack.c.h.s8.bf16 %v930
        %v1221 = vunpack.c.l.s8.bf16 %v931
        %v1222 = vunpack.c.l.s8.bf16 %v932
        %v1223 = vunpack.c.l.s8.bf16 %v933
        %v1224 = vunpack.c.l.s8.bf16 %v934
        %v1225 = vunpack.c.l.s8.bf16 %v935
        %v1226 = vunpack.c.l.s8.bf16 %v936
        %v1227 = vunpack.c.l.s8.bf16 %v937
        %v1228 = vunpack.c.l.s8.bf16 %v938
        %v1229 = vunpack.c.l.s8.bf16 %v939
        %v1230 = vunpack.c.l.s8.bf16 %v940
        %v1231 = vunpack.c.h.s8.bf16 %v931
        %v1232 = vunpack.c.h.s8.bf16 %v932
        %v1233 = vunpack.c.h.s8.bf16 %v933
        %v1234 = vunpack.c.h.s8.bf16 %v934
        %v1235 = vunpack.c.h.s8.bf16 %v935
        %v1236 = vunpack.c.h.s8.bf16 %v936
        %v1237 = vunpack.c.h.s8.bf16 %v937
        %v1238 = vunpack.c.h.s8.bf16 %v938
        %v1239 = vunpack.c.h.s8.bf16 %v939
        %v1240 = vunpack.c.h.s8.bf16 %v940
        %v1241 = vunpack.c.l.s8.bf16 %v941
        %v1242 = vunpack.c.l.s8.bf16 %v942
        %v1243 = vunpack.c.l.s8.bf16 %v943
        %v1244 = vunpack.c.l.s8.bf16 %v944
        %v1245 = vunpack.c.l.s8.bf16 %v945
        %v1246 = vunpack.c.l.s8.bf16 %v946
        %v1247 = vunpack.c.l.s8.bf16 %v947
        %v1248 = vunpack.c.l.s8.bf16 %v948
        %v1249 = vunpack.c.l.s8.bf16 %v949
        %v1250 = vunpack.c.l.s8.bf16 %v950
        %v1251 = vunpack.c.h.s8.bf16 %v941
        %v1252 = vunpack.c.h.s8.bf16 %v942
        %v1253 = vunpack.c.h.s8.bf16 %v943
        %v1254 = vunpack.c.h.s8.bf16 %v944
        %v1255 = vunpack.c.h.s8.bf16 %v945
        %v1256 = vunpack.c.h.s8.bf16 %v946
        %v1257 = vunpack.c.h.s8.bf16 %v947
        %v1258 = vunpack.c.h.s8.bf16 %v948
        %v1259 = vunpack.c.h.s8.bf16 %v949
        %v1260 = vunpack.c.h.s8.bf16 %v950
        %v1261 = vunpack.c.l.s8.bf16 %v951
        %v1262 = vunpack.c.l.s8.bf16 %v952
        %v1263 = vunpack.c.l.s8.bf16 %v953
        %v1264 = vunpack.c.l.s8.bf16 %v954
        %v1265 = vunpack.c.l.s8.bf16 %v955
        %v1266 = vunpack.c.l.s8.bf16 %v956
        %v1267 = vunpack.c.l.s8.bf16 %v957
        %v1268 = vunpack.c.l.s8.bf16 %v958
        %v1269 = vunpack.c.l.s8.bf16 %v959
        %v1270 = vunpack.c.l.s8.bf16 %v960
        %v1271 = vunpack.c.h.s8.bf16 %v951
        %v1272 = vunpack.c.h.s8.bf16 %v952
        %v1273 = vunpack.c.h.s8.bf16 %v953
        %v1274 = vunpack.c.h.s8.bf16 %v954
        %v1275 = vunpack.c.h.s8.bf16 %v955
        %v1276 = vunpack.c.h.s8.bf16 %v956
        %v1277 = vunpack.c.h.s8.bf16 %v957
        %v1278 = vunpack.c.h.s8.bf16 %v958
        %v1279 = vunpack.c.h.s8.bf16 %v959
        %v1280 = vunpack.c.h.s8.bf16 %v960
        %v1281 = vunpack.c.l.s8.bf16 %v961
        %v1282 = vunpack.c.l.s8.bf16 %v962
        %v1283 = vunpack.c.l.s8.bf16 %v963
        %v1284 = vunpack.c.l.s8.bf16 %v964
        %v1285 = vunpack.c.l.s8.bf16 %v965
        %v1286 = vunpack.c.l.s8.bf16 %v966
        %v1287 = vunpack.c.l.s8.bf16 %v967
        %v1288 = vunpack.c.l.s8.bf16 %v968
        %v1289 = vunpack.c.l.s8.bf16 %v969
        %v1290 = vunpack.c.l.s8.bf16 %v970
        %v1291 = vunpack.c.h.s8.bf16 %v961
        %v1292 = vunpack.c.h.s8.bf16 %v962
        %v1293 = vunpack.c.h.s8.bf16 %v963
        %v1294 = vunpack.c.h.s8.bf16 %v964
        %v1295 = vunpack.c.h.s8.bf16 %v965
        %v1296 = vunpack.c.h.s8.bf16 %v966
        %v1297 = vunpack.c.h.s8.bf16 %v967
        %v1298 = vunpack.c.h.s8.bf16 %v968
        %v1299 = vunpack.c.h.s8.bf16 %v969
        %v1300 = vunpack.c.h.s8.bf16 %v970
        %v1301 = vunpack.c.l.s8.bf16 %v971
        %v1302 = vunpack.c.l.s8.bf16 %v972
        %v1303 = vunpack.c.l.s8.bf16 %v973
        %v1304 = vunpack.c.l.s8.bf16 %v974
        %v1305 = vunpack.c.l.s8.bf16 %v975
        %v1306 = vunpack.c.l.s8.bf16 %v976
        %v1307 = vunpack.c.l.s8.bf16 %v977
        %v1308 = vunpack.c.l.s8.bf16 %v978
        %v1309 = vunpack.c.l.s8.bf16 %v979
        %v1310 = vunpack.c.l.s8.bf16 %v980
        %v1311 = vunpack.c.h.s8.bf16 %v971
        %v1312 = vunpack.c.h.s8.bf16 %v972
        %v1313 = vunpack.c.h.s8.bf16 %v973
        %v1314 = vunpack.c.h.s8.bf16 %v974
        %v1315 = vunpack.c.h.s8.bf16 %v975
        %v1316 = vunpack.c.h.s8.bf16 %v976
        %v1317 = vunpack.c.h.s8.bf16 %v977
        %v1318 = vunpack.c.h.s8.bf16 %v978
        %v1319 = vunpack.c.h.s8.bf16 %v979
        %v1320 = vunpack.c.h.s8.bf16 %v980
        %v1321 = vunpack.c.l.s8.bf16 %v981
        %v1322 = vunpack.c.l.s8.bf16 %v982
        %v1323 = vunpack.c.l.s8.bf16 %v983
        %v1324 = vunpack.c.l.s8.bf16 %v984
        %v1325 = vunpack.c.l.s8.bf16 %v985
        %v1326 = vunpack.c.l.s8.bf16 %v986
        %v1327 = vunpack.c.l.s8.bf16 %v987
        %v1328 = vunpack.c.l.s8.bf16 %v988
        %v1329 = vunpack.c.l.s8.bf16 %v989
        %v1330 = vunpack.c.l.s8.bf16 %v990
        %v1331 = vunpack.c.h.s8.bf16 %v981
        %v1332 = vunpack.c.h.s8.bf16 %v982
        %v1333 = vunpack.c.h.s8.bf16 %v983
        %v1334 = vunpack.c.h.s8.bf16 %v984
        %v1335 = vunpack.c.h.s8.bf16 %v985
        %v1336 = vunpack.c.h.s8.bf16 %v986
        %v1337 = vunpack.c.h.s8.bf16 %v987
        %v1338 = vunpack.c.h.s8.bf16 %v988
        %v1339 = vunpack.c.h.s8.bf16 %v989
        %v1340 = vunpack.c.h.s8.bf16 %v990
        %v1341 = vunpack.c.l.s8.bf16 %v991
        %v1342 = vunpack.c.l.s8.bf16 %v992
        %v1343 = vunpack.c.l.s8.bf16 %v993
        %v1344 = vunpack.c.l.s8.bf16 %v994
        %v1345 = vunpack.c.l.s8.bf16 %v995
        %v1346 = vunpack.c.l.s8.bf16 %v996
        %v1347 = vunpack.c.l.s8.bf16 %v997
        %v1348 = vunpack.c.l.s8.bf16 %v998
        %v1349 = vunpack.c.l.s8.bf16 %v999
        %v1350 = vunpack.c.l.s8.bf16 %v1000
        %v1351 = vunpack.c.h.s8.bf16 %v991
        %v1352 = vunpack.c.h.s8.bf16 %v992
        %v1353 = vunpack.c.h.s8.bf16 %v993
        %v1354 = vunpack.c.h.s8.bf16 %v994
        %v1355 = vunpack.c.h.s8.bf16 %v995
        %v1356 = vunpack.c.h.s8.bf16 %v996
        %v1357 = vunpack.c.h.s8.bf16 %v997
        %v1358 = vunpack.c.h.s8.bf16 %v998
        %v1359 = vunpack.c.h.s8.bf16 %v999
        %v1360 = vunpack.c.h.s8.bf16 %v1000
        %v1361 = vunpack.c.l.s8.bf16 %v1001
        %v1362 = vunpack.c.l.s8.bf16 %v1002
        %v1363 = vunpack.c.l.s8.bf16 %v1003
        %v1364 = vunpack.c.l.s8.bf16 %v1004
        %v1365 = vunpack.c.l.s8.bf16 %v1005
        %v1366 = vunpack.c.l.s8.bf16 %v1006
        %v1367 = vunpack.c.l.s8.bf16 %v1007
        %v1368 = vunpack.c.l.s8.bf16 %v1008
        %v1369 = vunpack.c.l.s8.bf16 %v1009
        %v1370 = vunpack.c.l.s8.bf16 %v1010
        %v1371 = vunpack.c.h.s8.bf16 %v1001
        %v1372 = vunpack.c.h.s8.bf16 %v1002
        %v1373 = vunpack.c.h.s8.bf16 %v1003
        %v1374 = vunpack.c.h.s8.bf16 %v1004
        %v1375 = vunpack.c.h.s8.bf16 %v1005
        %v1376 = vunpack.c.h.s8.bf16 %v1006
        %v1377 = vunpack.c.h.s8.bf16 %v1007
        %v1378 = vunpack.c.h.s8.bf16 %v1008
        %v1379 = vunpack.c.h.s8.bf16 %v1009
        %v1380 = vunpack.c.h.s8.bf16 %v1010
        %v1381 = vunpack.c.l.s8.bf16 %v1011
        %v1382 = vunpack.c.l.s8.bf16 %v1012
        %v1383 = vunpack.c.l.s8.bf16 %v1013
        %v1384 = vunpack.c.l.s8.bf16 %v1014
        %v1385 = vunpack.c.l.s8.bf16 %v1015
        %v1386 = vunpack.c.l.s8.bf16 %v1016
        %v1387 = vunpack.c.l.s8.bf16 %v1017
        %v1388 = vunpack.c.l.s8.bf16 %v1018
        %v1389 = vunpack.c.l.s8.bf16 %v1019
        %v1390 = vunpack.c.l.s8.bf16 %v1020
        %v1391 = vunpack.c.h.s8.bf16 %v1011
        %v1392 = vunpack.c.h.s8.bf16 %v1012
        %v1393 = vunpack.c.h.s8.bf16 %v1013
        %v1394 = vunpack.c.h.s8.bf16 %v1014
        %v1395 = vunpack.c.h.s8.bf16 %v1015
        %v1396 = vunpack.c.h.s8.bf16 %v1016
        %v1397 = vunpack.c.h.s8.bf16 %v1017
        %v1398 = vunpack.c.h.s8.bf16 %v1018
        %v1399 = vunpack.c.h.s8.bf16 %v1019
        %v1400 = vunpack.c.h.s8.bf16 %v1020
        %v1401 = vunpack.c.l.s8.bf16 %v1021
        %v1402 = vunpack.c.l.s8.bf16 %v1022
        %v1403 = vunpack.c.l.s8.bf16 %v1023
        %v1404 = vunpack.c.l.s8.bf16 %v1024
        %v1405 = vunpack.c.l.s8.bf16 %v1025
        %v1406 = vunpack.c.l.s8.bf16 %v1026
        %v1407 = vunpack.c.l.s8.bf16 %v1027
        %v1408 = vunpack.c.l.s8.bf16 %v1028
        %v1409 = vunpack.c.l.s8.bf16 %v1029
        %v1410 = vunpack.c.l.s8.bf16 %v1030
        %v1411 = vunpack.c.h.s8.bf16 %v1021
        %v1412 = vunpack.c.h.s8.bf16 %v1022
        %v1413 = vunpack.c.h.s8.bf16 %v1023
        %v1414 = vunpack.c.h.s8.bf16 %v1024
        %v1415 = vunpack.c.h.s8.bf16 %v1025
        %v1416 = vunpack.c.h.s8.bf16 %v1026
        %v1417 = vunpack.c.h.s8.bf16 %v1027
        %v1418 = vunpack.c.h.s8.bf16 %v1028
        %v1419 = vunpack.c.h.s8.bf16 %v1029
        %v1420 = vunpack.c.h.s8.bf16 %v1030
        %v1421 = vunpack.c.l.s8.bf16 %v1031
        %v1422 = vunpack.c.l.s8.bf16 %v1032
        %v1423 = vunpack.c.l.s8.bf16 %v1033
        %v1424 = vunpack.c.l.s8.bf16 %v1034
        %v1425 = vunpack.c.l.s8.bf16 %v1035
        %v1426 = vunpack.c.l.s8.bf16 %v1036
        %v1427 = vunpack.c.l.s8.bf16 %v1037
        %v1428 = vunpack.c.l.s8.bf16 %v1038
        %v1429 = vunpack.c.l.s8.bf16 %v1039
        %v1430 = vunpack.c.l.s8.bf16 %v1040
        %v1431 = vunpack.c.h.s8.bf16 %v1031
        %v1432 = vunpack.c.h.s8.bf16 %v1032
        %v1433 = vunpack.c.h.s8.bf16 %v1033
        %v1434 = vunpack.c.h.s8.bf16 %v1034
        %v1435 = vunpack.c.h.s8.bf16 %v1035
        %v1436 = vunpack.c.h.s8.bf16 %v1036
        %v1437 = vunpack.c.h.s8.bf16 %v1037
        %v1438 = vunpack.c.h.s8.bf16 %v1038
        %v1439 = vunpack.c.h.s8.bf16 %v1039
        %v1440 = vunpack.c.h.s8.bf16 %v1040
        %v1441 = vunpack.c.l.s8.bf16 %v1041
        %v1442 = vunpack.c.l.s8.bf16 %v1042
        %v1443 = vunpack.c.l.s8.bf16 %v1043
        %v1444 = vunpack.c.l.s8.bf16 %v1044
        %v1445 = vunpack.c.l.s8.bf16 %v1045
        %v1446 = vunpack.c.l.s8.bf16 %v1046
        %v1447 = vunpack.c.l.s8.bf16 %v1047
        %v1448 = vunpack.c.l.s8.bf16 %v1048
        %v1449 = vunpack.c.l.s8.bf16 %v1049
        %v1450 = vunpack.c.l.s8.bf16 %v1050
        %v1451 = vunpack.c.h.s8.bf16 %v1041
        %v1452 = vunpack.c.h.s8.bf16 %v1042
        %v1453 = vunpack.c.h.s8.bf16 %v1043
        %v1454 = vunpack.c.h.s8.bf16 %v1044
        %v1455 = vunpack.c.h.s8.bf16 %v1045
        %v1456 = vunpack.c.h.s8.bf16 %v1046
        %v1457 = vunpack.c.h.s8.bf16 %v1047
        %v1458 = vunpack.c.h.s8.bf16 %v1048
        %v1459 = vunpack.c.h.s8.bf16 %v1049
        %v1460 = vunpack.c.h.s8.bf16 %v1050
        %v1461 = vunpack.c.l.s8.bf16 %v1051
        %v1462 = vunpack.c.l.s8.bf16 %v1052
        %v1463 = vunpack.c.l.s8.bf16 %v1053
        %v1464 = vunpack.c.l.s8.bf16 %v1054
        %v1465 = vunpack.c.l.s8.bf16 %v1055
        %v1466 = vunpack.c.l.s8.bf16 %v1056
        %v1467 = vunpack.c.l.s8.bf16 %v1057
        %v1468 = vunpack.c.l.s8.bf16 %v1058
        %v1469 = vunpack.c.l.s8.bf16 %v1059
        %v1470 = vunpack.c.l.s8.bf16 %v1060
        %v1471 = vunpack.c.h.s8.bf16 %v1051
        %v1472 = vunpack.c.h.s8.bf16 %v1052
        %v1473 = vunpack.c.h.s8.bf16 %v1053
        %v1474 = vunpack.c.h.s8.bf16 %v1054
        %v1475 = vunpack.c.h.s8.bf16 %v1055
        %v1476 = vunpack.c.h.s8.bf16 %v1056
        %v1477 = vunpack.c.h.s8.bf16 %v1057
        %v1478 = vunpack.c.h.s8.bf16 %v1058
        %v1479 = vunpack.c.h.s8.bf16 %v1059
        %v1480 = vunpack.c.h.s8.bf16 %v1060
        %v1481 = vunpack.c.l.s8.bf16 %v1061
        %v1482 = vunpack.c.l.s8.bf16 %v1062
        %v1483 = vunpack.c.l.s8.bf16 %v1063
        %v1484 = vunpack.c.l.s8.bf16 %v1064
        %v1485 = vunpack.c.l.s8.bf16 %v1065
        %v1486 = vunpack.c.l.s8.bf16 %v1066
        %v1487 = vunpack.c.l.s8.bf16 %v1067
        %v1488 = vunpack.c.l.s8.bf16 %v1068
        %v1489 = vunpack.c.l.s8.bf16 %v1069
        %v1490 = vunpack.c.l.s8.bf16 %v1070
        %v1491 = vunpack.c.h.s8.bf16 %v1061
        %v1492 = vunpack.c.h.s8.bf16 %v1062
        %v1493 = vunpack.c.h.s8.bf16 %v1063
        %v1494 = vunpack.c.h.s8.bf16 %v1064
        %v1495 = vunpack.c.h.s8.bf16 %v1065
        %v1496 = vunpack.c.h.s8.bf16 %v1066
        %v1497 = vunpack.c.h.s8.bf16 %v1067
        %v1498 = vunpack.c.h.s8.bf16 %v1068
        %v1499 = vunpack.c.h.s8.bf16 %v1069
        %v1500 = vunpack.c.h.s8.bf16 %v1070
        %v1501 = vunpack.c.l.s8.bf16 %v1071
        %v1502 = vunpack.c.l.s8.bf16 %v1072
        %v1503 = vunpack.c.l.s8.bf16 %v1073
        %v1504 = vunpack.c.l.s8.bf16 %v1074
        %v1505 = vunpack.c.l.s8.bf16 %v1075
        %v1506 = vunpack.c.l.s8.bf16 %v1076
        %v1507 = vunpack.c.l.s8.bf16 %v1077
        %v1508 = vunpack.c.l.s8.bf16 %v1078
        %v1509 = vunpack.c.l.s8.bf16 %v1079
        %v1510 = vunpack.c.l.s8.bf16 %v1080
        %v1511 = vunpack.c.h.s8.bf16 %v1071
        %v1512 = vunpack.c.h.s8.bf16 %v1072
        %v1513 = vunpack.c.h.s8.bf16 %v1073
        %v1514 = vunpack.c.h.s8.bf16 %v1074
        %v1515 = vunpack.c.h.s8.bf16 %v1075
        %v1516 = vunpack.c.h.s8.bf16 %v1076
        %v1517 = vunpack.c.h.s8.bf16 %v1077
        %v1518 = vunpack.c.h.s8.bf16 %v1078
        %v1519 = vunpack.c.h.s8.bf16 %v1079
        %v1520 = vunpack.c.h.s8.bf16 %v1080
        %v1521 = vunpack.c.l.s8.bf16 %v1081
        %v1522 = vunpack.c.l.s8.bf16 %v1082
        %v1523 = vunpack.c.l.s8.bf16 %v1083
        %v1524 = vunpack.c.l.s8.bf16 %v1084
        %v1525 = vunpack.c.l.s8.bf16 %v1085
        %v1526 = vunpack.c.l.s8.bf16 %v1086
        %v1527 = vunpack.c.l.s8.bf16 %v1087
        %v1528 = vunpack.c.l.s8.bf16 %v1088
        %v1529 = vunpack.c.l.s8.bf16 %v1089
        %v1530 = vunpack.c.l.s8.bf16 %v1090
        %v1531 = vunpack.c.h.s8.bf16 %v1081
        %v1532 = vunpack.c.h.s8.bf16 %v1082
        %v1533 = vunpack.c.h.s8.bf16 %v1083
        %v1534 = vunpack.c.h.s8.bf16 %v1084
        %v1535 = vunpack.c.h.s8.bf16 %v1085
        %v1536 = vunpack.c.h.s8.bf16 %v1086
        %v1537 = vunpack.c.h.s8.bf16 %v1087
        %v1538 = vunpack.c.h.s8.bf16 %v1088
        %v1539 = vunpack.c.h.s8.bf16 %v1089
        %v1540 = vunpack.c.h.s8.bf16 %v1090
        %v1541 = vunpack.c.l.s8.bf16 %v1091
        %v1542 = vunpack.c.l.s8.bf16 %v1092
        %v1543 = vunpack.c.l.s8.bf16 %v1093
        %v1544 = vunpack.c.l.s8.bf16 %v1094
        %v1545 = vunpack.c.l.s8.bf16 %v1095
        %v1546 = vunpack.c.l.s8.bf16 %v1096
        %v1547 = vunpack.c.l.s8.bf16 %v1097
        %v1548 = vunpack.c.l.s8.bf16 %v1098
        %v1549 = vunpack.c.l.s8.bf16 %v1099
        %v1550 = vunpack.c.l.s8.bf16 %v1100
        %v1551 = vunpack.c.h.s8.bf16 %v1091
        %v1552 = vunpack.c.h.s8.bf16 %v1092
        %v1553 = vunpack.c.h.s8.bf16 %v1093
        %v1554 = vunpack.c.h.s8.bf16 %v1094
        %v1555 = vunpack.c.h.s8.bf16 %v1095
        %v1556 = vunpack.c.h.s8.bf16 %v1096
        %v1557 = vunpack.c.h.s8.bf16 %v1097
        %v1558 = vunpack.c.h.s8.bf16 %v1098
        %v1559 = vunpack.c.h.s8.bf16 %v1099
        %v1560 = vunpack.c.h.s8.bf16 %v1100
        %v1561 = vunpack.c.l.s8.bf16 %v1101
        %v1562 = vunpack.c.l.s8.bf16 %v1102
        %v1563 = vunpack.c.l.s8.bf16 %v1103
        %v1564 = vunpack.c.l.s8.bf16 %v1104
        %v1565 = vunpack.c.l.s8.bf16 %v1105
        %v1566 = vunpack.c.l.s8.bf16 %v1106
        %v1567 = vunpack.c.l.s8.bf16 %v1107
        %v1568 = vunpack.c.l.s8.bf16 %v1108
        %v1569 = vunpack.c.l.s8.bf16 %v1109
        %v1570 = vunpack.c.l.s8.bf16 %v1110
        %v1571 = vunpack.c.h.s8.bf16 %v1101
        %v1572 = vunpack.c.h.s8.bf16 %v1102
        %v1573 = vunpack.c.h.s8.bf16 %v1103
        %v1574 = vunpack.c.h.s8.bf16 %v1104
        %v1575 = vunpack.c.h.s8.bf16 %v1105
        %v1576 = vunpack.c.h.s8.bf16 %v1106
        %v1577 = vunpack.c.h.s8.bf16 %v1107
        %v1578 = vunpack.c.h.s8.bf16 %v1108
        %v1579 = vunpack.c.h.s8.bf16 %v1109
        %v1580 = vunpack.c.h.s8.bf16 %v1110
        %v1581 = vunpack.c.l.s8.bf16 %v1111
        %v1582 = vunpack.c.l.s8.bf16 %v1112
        %v1583 = vunpack.c.l.s8.bf16 %v1113
        %v1584 = vunpack.c.l.s8.bf16 %v1114
        %v1585 = vunpack.c.l.s8.bf16 %v1115
        %v1586 = vunpack.c.l.s8.bf16 %v1116
        %v1587 = vunpack.c.l.s8.bf16 %v1117
        %v1588 = vunpack.c.l.s8.bf16 %v1118
        %v1589 = vunpack.c.l.s8.bf16 %v1119
        %v1590 = vunpack.c.l.s8.bf16 %v1120
        %v1591 = vunpack.c.h.s8.bf16 %v1111
        %v1592 = vunpack.c.h.s8.bf16 %v1112
        %v1593 = vunpack.c.h.s8.bf16 %v1113
        %v1594 = vunpack.c.h.s8.bf16 %v1114
        %v1595 = vunpack.c.h.s8.bf16 %v1115
        %v1596 = vunpack.c.h.s8.bf16 %v1116
        %v1597 = vunpack.c.h.s8.bf16 %v1117
        %v1598 = vunpack.c.h.s8.bf16 %v1118
        %v1599 = vunpack.c.h.s8.bf16 %v1119
        %v1600 = vunpack.c.h.s8.bf16 %v1120
        %v1601 = vunpack.c.l.s8.bf16 %v1121
        %v1602 = vunpack.c.l.s8.bf16 %v1122
        %v1603 = vunpack.c.l.s8.bf16 %v1123
        %v1604 = vunpack.c.l.s8.bf16 %v1124
        %v1605 = vunpack.c.l.s8.bf16 %v1125
        %v1606 = vunpack.c.l.s8.bf16 %v1126
        %v1607 = vunpack.c.l.s8.bf16 %v1127
        %v1608 = vunpack.c.l.s8.bf16 %v1128
        %v1609 = vunpack.c.l.s8.bf16 %v1129
        %v1610 = vunpack.c.l.s8.bf16 %v1130
        %v1611 = vunpack.c.h.s8.bf16 %v1121
        %v1612 = vunpack.c.h.s8.bf16 %v1122
        %v1613 = vunpack.c.h.s8.bf16 %v1123
        %v1614 = vunpack.c.h.s8.bf16 %v1124
        %v1615 = vunpack.c.h.s8.bf16 %v1125
        %v1616 = vunpack.c.h.s8.bf16 %v1126
        %v1617 = vunpack.c.h.s8.bf16 %v1127
        %v1618 = vunpack.c.h.s8.bf16 %v1128
        %v1619 = vunpack.c.h.s8.bf16 %v1129
        %v1620 = vunpack.c.h.s8.bf16 %v1130
        %v1621 = vunpack.c.l.s8.bf16 %v1131
        %v1622 = vunpack.c.l.s8.bf16 %v1132
        %v1623 = vunpack.c.l.s8.bf16 %v1133
        %v1624 = vunpack.c.l.s8.bf16 %v1134
        %v1625 = vunpack.c.l.s8.bf16 %v1135
        %v1626 = vunpack.c.l.s8.bf16 %v1136
        %v1627 = vunpack.c.l.s8.bf16 %v1137
        %v1628 = vunpack.c.l.s8.bf16 %v1138
        %v1629 = vunpack.c.l.s8.bf16 %v1139
        %v1630 = vunpack.c.l.s8.bf16 %v1140
        %v1631 = vunpack.c.h.s8.bf16 %v1131
        %v1632 = vunpack.c.h.s8.bf16 %v1132
        %v1633 = vunpack.c.h.s8.bf16 %v1133
        %v1634 = vunpack.c.h.s8.bf16 %v1134
        %v1635 = vunpack.c.h.s8.bf16 %v1135
        %v1636 = vunpack.c.h.s8.bf16 %v1136
        %v1637 = vunpack.c.h.s8.bf16 %v1137
        %v1638 = vunpack.c.h.s8.bf16 %v1138
        %v1639 = vunpack.c.h.s8.bf16 %v1139
        %v1640 = vunpack.c.h.s8.bf16 %v1140
        %v1641 = vld [vmem:[#allocation2] sm:$0xff]
        %v1642 = vld [vmem:[#allocation2 + $0x8] sm:$0xff]
        %v1643 = vld [vmem:[#allocation2 + $0x10] sm:$0xff]
        %v1644 = vld [vmem:[#allocation2 + $0x18] sm:$0xff]
        %v1645 = vld [vmem:[#allocation2 + $0x20] sm:$0xff]
        %v1651 = vunpack.c.l.b16 %v1641
        %v1652 = vunpack.c.h.b16 %v1641
        %v1653 = vunpack.c.l.b16 %v1642
        %v1654 = vunpack.c.h.b16 %v1642
        %v1655 = vunpack.c.l.b16 %v1643
        %v1656 = vunpack.c.h.b16 %v1643
        %v1657 = vunpack.c.l.b16 %v1644
        %v1658 = vunpack.c.h.b16 %v1644
        %v1659 = vunpack.c.l.b16 %v1645
        %v1660 = vunpack.c.h.b16 %v1645
        %v1661 = vpack.c.b16 %v1651, %v1651
        %v1662 = vpack.c.b16 %v1652, %v1652
        %v1663 = vpack.c.b16 %v1653, %v1653
        %v1664 = vpack.c.b16 %v1654, %v1654
        %v1665 = vpack.c.b16 %v1655, %v1655
        %v1666 = vpack.c.b16 %v1656, %v1656
        %v1667 = vpack.c.b16 %v1657, %v1657
        %v1668 = vpack.c.b16 %v1658, %v1658
        %v1669 = vpack.c.b16 %v1659, %v1659
        %v1670 = vpack.c.b16 %v1660, %v1660
        %vm1680 = vcmask 392192
        %v1682 = vsel %vm1680, %v1670, 0
        %v1685 = vsel %vm1680, %v1150, 0
        %v1688 = vsel %vm1680, %v1160, 0
        %v1691 = vsel %vm1680, %v1170, 0
        %v1694 = vsel %vm1680, %v1180, 0
        %v1697 = vsel %vm1680, %v1190, 0
        %v1700 = vsel %vm1680, %v1200, 0
        %v1703 = vsel %vm1680, %v1210, 0
        %v1706 = vsel %vm1680, %v1220, 0
        %v1709 = vsel %vm1680, %v1230, 0
        %v1712 = vsel %vm1680, %v1240, 0
        %v1715 = vsel %vm1680, %v1250, 0
        %v1718 = vsel %vm1680, %v1260, 0
        %v1721 = vsel %vm1680, %v1270, 0
        %v1724 = vsel %vm1680, %v1280, 0
        %v1727 = vsel %vm1680, %v1290, 0
        %v1730 = vsel %vm1680, %v1300, 0
        %v1733 = vsel %vm1680, %v1310, 0
        %v1736 = vsel %vm1680, %v1320, 0
        %v1739 = vsel %vm1680, %v1330, 0
        %v1742 = vsel %vm1680, %v1340, 0
        %v1745 = vsel %vm1680, %v1350, 0
        %v1748 = vsel %vm1680, %v1360, 0
        %v1751 = vsel %vm1680, %v1370, 0
        %v1754 = vsel %vm1680, %v1380, 0
        %v1757 = vsel %vm1680, %v1390, 0
        %v1760 = vsel %vm1680, %v1400, 0
        %v1763 = vsel %vm1680, %v1410, 0
        %v1766 = vsel %vm1680, %v1420, 0
        %v1769 = vsel %vm1680, %v1430, 0
        %v1772 = vsel %vm1680, %v1440, 0
        %v1775 = vsel %vm1680, %v1450, 0
        %v1778 = vsel %vm1680, %v1460, 0
        %v1781 = vsel %vm1680, %v1470, 0
        %v1784 = vsel %vm1680, %v1480, 0
        %v1787 = vsel %vm1680, %v1490, 0
        %v1790 = vsel %vm1680, %v1500, 0
        %v1793 = vsel %vm1680, %v1510, 0
        %v1796 = vsel %vm1680, %v1520, 0
        %v1799 = vsel %vm1680, %v1530, 0
        %v1802 = vsel %vm1680, %v1540, 0
        %v1805 = vsel %vm1680, %v1550, 0
        %v1808 = vsel %vm1680, %v1560, 0
        %v1811 = vsel %vm1680, %v1570, 0
        %v1814 = vsel %vm1680, %v1580, 0
        %v1817 = vsel %vm1680, %v1590, 0
        %v1820 = vsel %vm1680, %v1600, 0
        %v1823 = vsel %vm1680, %v1610, 0
        %v1826 = vsel %vm1680, %v1620, 0
        %v1829 = vsel %vm1680, %v1630, 0
        %v1832 = vsel %vm1680, %v1640, 0
        %1834 = vmatprep.subr.bf16.mxu0 %v1212
        %1835 = vmatpush1.bf16.xpose.msra.mxu0 %v1211
        %1836 = vmatprep.subr.bf16.mxu0 %v1202
        %1837 = vmatpush1.bf16.xpose.msra.mxu0 %v1201
        %1838 = vmatprep.subr.bf16.mxu0 %v1192
        %1839 = vmatpush1.bf16.xpose.msra.mxu0 %v1191
        %1840 = vmatprep.subr.bf16.mxu0 %v1182
        %1841 = vmatpush1.bf16.xpose.msra.mxu0 %v1181
        %1842 = vmatprep.subr.bf16.mxu0 %v1172
        %1843 = vmatpush1.bf16.xpose.msra.mxu0 %v1171
        %1844 = vmatprep.subr.bf16.mxu0 %v1162
        %1845 = vmatpush1.bf16.xpose.msra.mxu0 %v1161
        %1846 = vmatprep.subr.bf16.mxu0 %v1152
        %1847 = vmatpush1.bf16.xpose.msra.mxu0 %v1151
        %1848 = vmatprep.subr.bf16.mxu0 %v1142
        %1849 = vmatpush1.bf16.xpose.msra.mxu0 %v1141
        %1850 = vmatprep.subr.bf16.mxu0 %v1292
        %1851 = vmatpush2.bf16.xpose.msra.mxu0 %v1291
        %1852 = vmatprep.subr.bf16.mxu0 %v1282
        %1853 = vmatpush2.bf16.xpose.msra.mxu0 %v1281
        %1854 = vmatprep.subr.bf16.mxu0 %v1272
        %1855 = vmatpush2.bf16.xpose.msra.mxu0 %v1271
        %1856 = vmatprep.subr.bf16.mxu0 %v1262
        %1857 = vmatpush2.bf16.xpose.msra.mxu0 %v1261
        %1858 = vmatprep.subr.bf16.mxu0 %v1252
        %1859 = vmatpush2.bf16.xpose.msra.mxu0 %v1251
        %1860 = vmatprep.subr.bf16.mxu0 %v1242
        %1861 = vmatpush2.bf16.xpose.msra.mxu0 %v1241
        %1862 = vmatprep.subr.bf16.mxu0 %v1232
        %1863 = vmatpush2.bf16.xpose.msra.mxu0 %v1231
        %1864 = vmatprep.subr.bf16.mxu0 %v1222
        %1865 = vmatpush2.bf16.xpose.msra.mxu0 %v1221
        %1866 = vmatprep.mubr.bf16.mxu0 %v1662
        %1867 = vmatmul.mubr.bf16.gmra.mxu0 %v1661
        %v1868 = vpop.f32.mrf.mxu0
        %v1869 = vadd.f32 0.0, %v1868
        %v1870 = vpop.f32.mrf.mxu0
        %v1871 = vadd.f32 0.0, %v1870
        %v1872 = vpop.f32.mrf.mxu0
        %v1873 = vpop.f32.mrf.mxu0
        %1874 = vdwg.mxu0
        %1875 = vmatprep.subr.bf16.mxu0 %v1214
        %1876 = vmatpush1.bf16.xpose.msra.mxu0 %v1213
        %1877 = vmatprep.subr.bf16.mxu0 %v1204
        %1878 = vmatpush1.bf16.xpose.msra.mxu0 %v1203
        %1879 = vmatprep.subr.bf16.mxu0 %v1194
        %1880 = vmatpush1.bf16.xpose.msra.mxu0 %v1193
        %1881 = vmatprep.subr.bf16.mxu0 %v1184
        %1882 = vmatpush1.bf16.xpose.msra.mxu0 %v1183
        %1883 = vmatprep.subr.bf16.mxu0 %v1174
        %1884 = vmatpush1.bf16.xpose.msra.mxu0 %v1173
        %1885 = vmatprep.subr.bf16.mxu0 %v1164
        %1886 = vmatpush1.bf16.xpose.msra.mxu0 %v1163
        %1887 = vmatprep.subr.bf16.mxu0 %v1154
        %1888 = vmatpush1.bf16.xpose.msra.mxu0 %v1153
        %1889 = vmatprep.subr.bf16.mxu0 %v1144
        %1890 = vmatpush1.bf16.xpose.msra.mxu0 %v1143
        %1891 = vmatprep.subr.bf16.mxu0 %v1294
        %1892 = vmatpush2.bf16.xpose.msra.mxu0 %v1293
        %1893 = vmatprep.subr.bf16.mxu0 %v1284
        %1894 = vmatpush2.bf16.xpose.msra.mxu0 %v1283
        %1895 = vmatprep.subr.bf16.mxu0 %v1274
        %1896 = vmatpush2.bf16.xpose.msra.mxu0 %v1273
        %1897 = vmatprep.subr.bf16.mxu0 %v1264
        %1898 = vmatpush2.bf16.xpose.msra.mxu0 %v1263
        %1899 = vmatprep.subr.bf16.mxu0 %v1254
        %1900 = vmatpush2.bf16.xpose.msra.mxu0 %v1253
        %1901 = vmatprep.subr.bf16.mxu0 %v1244
        %1902 = vmatpush2.bf16.xpose.msra.mxu0 %v1243
        %1903 = vmatprep.subr.bf16.mxu0 %v1234
        %1904 = vmatpush2.bf16.xpose.msra.mxu0 %v1233
        %1905 = vmatprep.subr.bf16.mxu0 %v1224
        %1906 = vmatpush2.bf16.xpose.msra.mxu0 %v1223
        %1907 = vmatprep.mubr.bf16.mxu0 %v1664
        %1908 = vmatmul.mubr.bf16.gmra.mxu0 %v1663
        %v1909 = vpop.f32.mrf.mxu0
        %v1910 = vadd.f32 %v1869, %v1909
        %v1911 = vpop.f32.mrf.mxu0
        %v1912 = vadd.f32 %v1871, %v1911
        %v1913 = vpop.f32.mrf.mxu0
        %v1914 = vpop.f32.mrf.mxu0
        %1915 = vdwg.mxu0
        %1916 = vmatprep.subr.bf16.mxu0 %v1216
        %1917 = vmatpush1.bf16.xpose.msra.mxu0 %v1215
        %1918 = vmatprep.subr.bf16.mxu0 %v1206
        %1919 = vmatpush1.bf16.xpose.msra.mxu0 %v1205
        %1920 = vmatprep.subr.bf16.mxu0 %v1196
        %1921 = vmatpush1.bf16.xpose.msra.mxu0 %v1195
        %1922 = vmatprep.subr.bf16.mxu0 %v1186
        %1923 = vmatpush1.bf16.xpose.msra.mxu0 %v1185
        %1924 = vmatprep.subr.bf16.mxu0 %v1176
        %1925 = vmatpush1.bf16.xpose.msra.mxu0 %v1175
        %1926 = vmatprep.subr.bf16.mxu0 %v1166
        %1927 = vmatpush1.bf16.xpose.msra.mxu0 %v1165
        %1928 = vmatprep.subr.bf16.mxu0 %v1156
        %1929 = vmatpush1.bf16.xpose.msra.mxu0 %v1155
        %1930 = vmatprep.subr.bf16.mxu0 %v1146
        %1931 = vmatpush1.bf16.xpose.msra.mxu0 %v1145
        %1932 = vmatprep.subr.bf16.mxu0 %v1296
        %1933 = vmatpush2.bf16.xpose.msra.mxu0 %v1295
        %1934 = vmatprep.subr.bf16.mxu0 %v1286
        %1935 = vmatpush2.bf16.xpose.msra.mxu0 %v1285
        %1936 = vmatprep.subr.bf16.mxu0 %v1276
        %1937 = vmatpush2.bf16.xpose.msra.mxu0 %v1275
        %1938 = vmatprep.subr.bf16.mxu0 %v1266
        %1939 = vmatpush2.bf16.xpose.msra.mxu0 %v1265
        %1940 = vmatprep.subr.bf16.mxu0 %v1256
        %1941 = vmatpush2.bf16.xpose.msra.mxu0 %v1255
        %1942 = vmatprep.subr.bf16.mxu0 %v1246
        %1943 = vmatpush2.bf16.xpose.msra.mxu0 %v1245
        %1944 = vmatprep.subr.bf16.mxu0 %v1236
        %1945 = vmatpush2.bf16.xpose.msra.mxu0 %v1235
        %1946 = vmatprep.subr.bf16.mxu0 %v1226
        %1947 = vmatpush2.bf16.xpose.msra.mxu0 %v1225
        %1948 = vmatprep.mubr.bf16.mxu0 %v1666
        %1949 = vmatmul.mubr.bf16.gmra.mxu0 %v1665
        %v1950 = vpop.f32.mrf.mxu0
        %v1951 = vadd.f32 %v1910, %v1950
        %v1952 = vpop.f32.mrf.mxu0
        %v1953 = vadd.f32 %v1912, %v1952
        %v1954 = vpop.f32.mrf.mxu0
        %v1955 = vpop.f32.mrf.mxu0
        %1956 = vdwg.mxu0
        %1957 = vmatprep.subr.bf16.mxu0 %v1218
        %1958 = vmatpush1.bf16.xpose.msra.mxu0 %v1217
        %1959 = vmatprep.subr.bf16.mxu0 %v1208
        %1960 = vmatpush1.bf16.xpose.msra.mxu0 %v1207
        %1961 = vmatprep.subr.bf16.mxu0 %v1198
        %1962 = vmatpush1.bf16.xpose.msra.mxu0 %v1197
        %1963 = vmatprep.subr.bf16.mxu0 %v1188
        %1964 = vmatpush1.bf16.xpose.msra.mxu0 %v1187
        %1965 = vmatprep.subr.bf16.mxu0 %v1178
        %1966 = vmatpush1.bf16.xpose.msra.mxu0 %v1177
        %1967 = vmatprep.subr.bf16.mxu0 %v1168
        %1968 = vmatpush1.bf16.xpose.msra.mxu0 %v1167
        %1969 = vmatprep.subr.bf16.mxu0 %v1158
        %1970 = vmatpush1.bf16.xpose.msra.mxu0 %v1157
        %1971 = vmatprep.subr.bf16.mxu0 %v1148
        %1972 = vmatpush1.bf16.xpose.msra.mxu0 %v1147
        %1973 = vmatprep.subr.bf16.mxu0 %v1298
        %1974 = vmatpush2.bf16.xpose.msra.mxu0 %v1297
        %1975 = vmatprep.subr.bf16.mxu0 %v1288
        %1976 = vmatpush2.bf16.xpose.msra.mxu0 %v1287
        %1977 = vmatprep.subr.bf16.mxu0 %v1278
        %1978 = vmatpush2.bf16.xpose.msra.mxu0 %v1277
        %1979 = vmatprep.subr.bf16.mxu0 %v1268
        %1980 = vmatpush2.bf16.xpose.msra.mxu0 %v1267
        %1981 = vmatprep.subr.bf16.mxu0 %v1258
        %1982 = vmatpush2.bf16.xpose.msra.mxu0 %v1257
        %1983 = vmatprep.subr.bf16.mxu0 %v1248
        %1984 = vmatpush2.bf16.xpose.msra.mxu0 %v1247
        %1985 = vmatprep.subr.bf16.mxu0 %v1238
        %1986 = vmatpush2.bf16.xpose.msra.mxu0 %v1237
        %1987 = vmatprep.subr.bf16.mxu0 %v1228
        %1988 = vmatpush2.bf16.xpose.msra.mxu0 %v1227
        %1989 = vmatprep.mubr.bf16.mxu0 %v1668
        %1990 = vmatmul.mubr.bf16.gmra.mxu0 %v1667
        %v1991 = vpop.f32.mrf.mxu0
        %v1992 = vadd.f32 %v1951, %v1991
        %v1993 = vpop.f32.mrf.mxu0
        %v1994 = vadd.f32 %v1953, %v1993
        %v1995 = vpop.f32.mrf.mxu0
        %v1996 = vpop.f32.mrf.mxu0
        %1997 = vdwg.mxu0
        %1998 = vmatprep.subr.bf16.mxu0 %v1706
        %1999 = vmatpush1.bf16.xpose.msra.mxu0 %v1219
        %2000 = vmatprep.subr.bf16.mxu0 %v1703
        %2001 = vmatpush1.bf16.xpose.msra.mxu0 %v1209
        %2002 = vmatprep.subr.bf16.mxu0 %v1700
        %2003 = vmatpush1.bf16.xpose.msra.mxu0 %v1199
        %2004 = vmatprep.subr.bf16.mxu0 %v1697
        %2005 = vmatpush1.bf16.xpose.msra.mxu0 %v1189
        %2006 = vmatprep.subr.bf16.mxu0 %v1694
        %2007 = vmatpush1.bf16.xpose.msra.mxu0 %v1179
        %2008 = vmatprep.subr.bf16.mxu0 %v1691
        %2009 = vmatpush1.bf16.xpose.msra.mxu0 %v1169
        %2010 = vmatprep.subr.bf16.mxu0 %v1688
        %2011 = vmatpush1.bf16.xpose.msra.mxu0 %v1159
        %2012 = vmatprep.subr.bf16.mxu0 %v1685
        %2013 = vmatpush1.bf16.xpose.msra.mxu0 %v1149
        %2014 = vmatprep.subr.bf16.mxu0 %v1730
        %2015 = vmatpush2.bf16.xpose.msra.mxu0 %v1299
        %2016 = vmatprep.subr.bf16.mxu0 %v1727
        %2017 = vmatpush2.bf16.xpose.msra.mxu0 %v1289
        %2018 = vmatprep.subr.bf16.mxu0 %v1724
        %2019 = vmatpush2.bf16.xpose.msra.mxu0 %v1279
        %2020 = vmatprep.subr.bf16.mxu0 %v1721
        %2021 = vmatpush2.bf16.xpose.msra.mxu0 %v1269
        %2022 = vmatprep.subr.bf16.mxu0 %v1718
        %2023 = vmatpush2.bf16.xpose.msra.mxu0 %v1259
        %2024 = vmatprep.subr.bf16.mxu0 %v1715
        %2025 = vmatpush2.bf16.xpose.msra.mxu0 %v1249
        %2026 = vmatprep.subr.bf16.mxu0 %v1712
        %2027 = vmatpush2.bf16.xpose.msra.mxu0 %v1239
        %2028 = vmatprep.subr.bf16.mxu0 %v1709
        %2029 = vmatpush2.bf16.xpose.msra.mxu0 %v1229
        %2030 = vmatprep.mubr.bf16.mxu0 %v1682
        %2031 = vmatmul.mubr.bf16.gmra.mxu0 %v1669
        %v2032 = vpop.f32.mrf.mxu0
        %v2033 = vadd.f32 %v1992, %v2032
        %v2034 = vpop.f32.mrf.mxu0
        %v2035 = vadd.f32 %v1994, %v2034
        %v2036 = vpop.f32.mrf.mxu0
        %v2037 = vpop.f32.mrf.mxu0
        %2038 = vdwg.mxu0
        %2039 = vmatprep.subr.bf16.mxu0 %v1372
        %2040 = vmatpush1.bf16.xpose.msra.mxu0 %v1371
        %2041 = vmatprep.subr.bf16.mxu0 %v1362
        %2042 = vmatpush1.bf16.xpose.msra.mxu0 %v1361
        %2043 = vmatprep.subr.bf16.mxu0 %v1352
        %2044 = vmatpush1.bf16.xpose.msra.mxu0 %v1351
        %2045 = vmatprep.subr.bf16.mxu0 %v1342
        %2046 = vmatpush1.bf16.xpose.msra.mxu0 %v1341
        %2047 = vmatprep.subr.bf16.mxu0 %v1332
        %2048 = vmatpush1.bf16.xpose.msra.mxu0 %v1331
        %2049 = vmatprep.subr.bf16.mxu0 %v1322
        %2050 = vmatpush1.bf16.xpose.msra.mxu0 %v1321
        %2051 = vmatprep.subr.bf16.mxu0 %v1312
        %2052 = vmatpush1.bf16.xpose.msra.mxu0 %v1311
        %2053 = vmatprep.subr.bf16.mxu0 %v1302
        %2054 = vmatpush1.bf16.xpose.msra.mxu0 %v1301
        %2055 = vmatprep.subr.bf16.mxu0 %v1452
        %2056 = vmatpush2.bf16.xpose.msra.mxu0 %v1451
        %2057 = vmatprep.subr.bf16.mxu0 %v1442
        %2058 = vmatpush2.bf16.xpose.msra.mxu0 %v1441
        %2059 = vmatprep.subr.bf16.mxu0 %v1432
        %2060 = vmatpush2.bf16.xpose.msra.mxu0 %v1431
        %2061 = vmatprep.subr.bf16.mxu0 %v1422
        %2062 = vmatpush2.bf16.xpose.msra.mxu0 %v1421
        %2063 = vmatprep.subr.bf16.mxu0 %v1412
        %2064 = vmatpush2.bf16.xpose.msra.mxu0 %v1411
        %2065 = vmatprep.subr.bf16.mxu0 %v1402
        %2066 = vmatpush2.bf16.xpose.msra.mxu0 %v1401
        %2067 = vmatprep.subr.bf16.mxu0 %v1392
        %2068 = vmatpush2.bf16.xpose.msra.mxu0 %v1391
        %2069 = vmatprep.subr.bf16.mxu0 %v1382
        %2070 = vmatpush2.bf16.xpose.msra.mxu0 %v1381
        %2071 = vmatprep.mubr.bf16.mxu0 %v1662
        %2072 = vmatmul.mubr.bf16.gmra.mxu0 %v1661
        %v2073 = vpop.f32.mrf.mxu0
        %v2074 = vadd.f32 0.0, %v2073
        %v2075 = vpop.f32.mrf.mxu0
        %v2076 = vadd.f32 0.0, %v2075
        %v2077 = vpop.f32.mrf.mxu0
        %v2078 = vpop.f32.mrf.mxu0
        %2079 = vdwg.mxu0
        %2080 = vmatprep.subr.bf16.mxu0 %v1374
        %2081 = vmatpush1.bf16.xpose.msra.mxu0 %v1373
        %2082 = vmatprep.subr.bf16.mxu0 %v1364
        %2083 = vmatpush1.bf16.xpose.msra.mxu0 %v1363
        %2084 = vmatprep.subr.bf16.mxu0 %v1354
        %2085 = vmatpush1.bf16.xpose.msra.mxu0 %v1353
        %2086 = vmatprep.subr.bf16.mxu0 %v1344
        %2087 = vmatpush1.bf16.xpose.msra.mxu0 %v1343
        %2088 = vmatprep.subr.bf16.mxu0 %v1334
        %2089 = vmatpush1.bf16.xpose.msra.mxu0 %v1333
        %2090 = vmatprep.subr.bf16.mxu0 %v1324
        %2091 = vmatpush1.bf16.xpose.msra.mxu0 %v1323
        %2092 = vmatprep.subr.bf16.mxu0 %v1314
        %2093 = vmatpush1.bf16.xpose.msra.mxu0 %v1313
        %2094 = vmatprep.subr.bf16.mxu0 %v1304
        %2095 = vmatpush1.bf16.xpose.msra.mxu0 %v1303
        %2096 = vmatprep.subr.bf16.mxu0 %v1454
        %2097 = vmatpush2.bf16.xpose.msra.mxu0 %v1453
        %2098 = vmatprep.subr.bf16.mxu0 %v1444
        %2099 = vmatpush2.bf16.xpose.msra.mxu0 %v1443
        %2100 = vmatprep.subr.bf16.mxu0 %v1434
        %2101 = vmatpush2.bf16.xpose.msra.mxu0 %v1433
        %2102 = vmatprep.subr.bf16.mxu0 %v1424
        %2103 = vmatpush2.bf16.xpose.msra.mxu0 %v1423
        %2104 = vmatprep.subr.bf16.mxu0 %v1414
        %2105 = vmatpush2.bf16.xpose.msra.mxu0 %v1413
        %2106 = vmatprep.subr.bf16.mxu0 %v1404
        %2107 = vmatpush2.bf16.xpose.msra.mxu0 %v1403
        %2108 = vmatprep.subr.bf16.mxu0 %v1394
        %2109 = vmatpush2.bf16.xpose.msra.mxu0 %v1393
        %2110 = vmatprep.subr.bf16.mxu0 %v1384
        %2111 = vmatpush2.bf16.xpose.msra.mxu0 %v1383
        %2112 = vmatprep.mubr.bf16.mxu0 %v1664
        %2113 = vmatmul.mubr.bf16.gmra.mxu0 %v1663
        %v2114 = vpop.f32.mrf.mxu0
        %v2115 = vadd.f32 %v2074, %v2114
        %v2116 = vpop.f32.mrf.mxu0
        %v2117 = vadd.f32 %v2076, %v2116
        %v2118 = vpop.f32.mrf.mxu0
        %v2119 = vpop.f32.mrf.mxu0
        %2120 = vdwg.mxu0
        %2121 = vmatprep.subr.bf16.mxu0 %v1376
        %2122 = vmatpush1.bf16.xpose.msra.mxu0 %v1375
        %2123 = vmatprep.subr.bf16.mxu0 %v1366
        %2124 = vmatpush1.bf16.xpose.msra.mxu0 %v1365
        %2125 = vmatprep.subr.bf16.mxu0 %v1356
        %2126 = vmatpush1.bf16.xpose.msra.mxu0 %v1355
        %2127 = vmatprep.subr.bf16.mxu0 %v1346
        %2128 = vmatpush1.bf16.xpose.msra.mxu0 %v1345
        %2129 = vmatprep.subr.bf16.mxu0 %v1336
        %2130 = vmatpush1.bf16.xpose.msra.mxu0 %v1335
        %2131 = vmatprep.subr.bf16.mxu0 %v1326
        %2132 = vmatpush1.bf16.xpose.msra.mxu0 %v1325
        %2133 = vmatprep.subr.bf16.mxu0 %v1316
        %2134 = vmatpush1.bf16.xpose.msra.mxu0 %v1315
        %2135 = vmatprep.subr.bf16.mxu0 %v1306
        %2136 = vmatpush1.bf16.xpose.msra.mxu0 %v1305
        %2137 = vmatprep.subr.bf16.mxu0 %v1456
        %2138 = vmatpush2.bf16.xpose.msra.mxu0 %v1455
        %2139 = vmatprep.subr.bf16.mxu0 %v1446
        %2140 = vmatpush2.bf16.xpose.msra.mxu0 %v1445
        %2141 = vmatprep.subr.bf16.mxu0 %v1436
        %2142 = vmatpush2.bf16.xpose.msra.mxu0 %v1435
        %2143 = vmatprep.subr.bf16.mxu0 %v1426
        %2144 = vmatpush2.bf16.xpose.msra.mxu0 %v1425
        %2145 = vmatprep.subr.bf16.mxu0 %v1416
        %2146 = vmatpush2.bf16.xpose.msra.mxu0 %v1415
        %2147 = vmatprep.subr.bf16.mxu0 %v1406
        %2148 = vmatpush2.bf16.xpose.msra.mxu0 %v1405
        %2149 = vmatprep.subr.bf16.mxu0 %v1396
        %2150 = vmatpush2.bf16.xpose.msra.mxu0 %v1395
        %2151 = vmatprep.subr.bf16.mxu0 %v1386
        %2152 = vmatpush2.bf16.xpose.msra.mxu0 %v1385
        %2153 = vmatprep.mubr.bf16.mxu0 %v1666
        %2154 = vmatmul.mubr.bf16.gmra.mxu0 %v1665
        %v2155 = vpop.f32.mrf.mxu0
        %v2156 = vadd.f32 %v2115, %v2155
        %v2157 = vpop.f32.mrf.mxu0
        %v2158 = vadd.f32 %v2117, %v2157
        %v2159 = vpop.f32.mrf.mxu0
        %v2160 = vpop.f32.mrf.mxu0
        %2161 = vdwg.mxu0
        %2162 = vmatprep.subr.bf16.mxu0 %v1378
        %2163 = vmatpush1.bf16.xpose.msra.mxu0 %v1377
        %2164 = vmatprep.subr.bf16.mxu0 %v1368
        %2165 = vmatpush1.bf16.xpose.msra.mxu0 %v1367
        %2166 = vmatprep.subr.bf16.mxu0 %v1358
        %2167 = vmatpush1.bf16.xpose.msra.mxu0 %v1357
        %2168 = vmatprep.subr.bf16.mxu0 %v1348
        %2169 = vmatpush1.bf16.xpose.msra.mxu0 %v1347
        %2170 = vmatprep.subr.bf16.mxu0 %v1338
        %2171 = vmatpush1.bf16.xpose.msra.mxu0 %v1337
        %2172 = vmatprep.subr.bf16.mxu0 %v1328
        %2173 = vmatpush1.bf16.xpose.msra.mxu0 %v1327
        %2174 = vmatprep.subr.bf16.mxu0 %v1318
        %2175 = vmatpush1.bf16.xpose.msra.mxu0 %v1317
        %2176 = vmatprep.subr.bf16.mxu0 %v1308
        %2177 = vmatpush1.bf16.xpose.msra.mxu0 %v1307
        %2178 = vmatprep.subr.bf16.mxu0 %v1458
        %2179 = vmatpush2.bf16.xpose.msra.mxu0 %v1457
        %2180 = vmatprep.subr.bf16.mxu0 %v1448
        %2181 = vmatpush2.bf16.xpose.msra.mxu0 %v1447
        %2182 = vmatprep.subr.bf16.mxu0 %v1438
        %2183 = vmatpush2.bf16.xpose.msra.mxu0 %v1437
        %2184 = vmatprep.subr.bf16.mxu0 %v1428
        %2185 = vmatpush2.bf16.xpose.msra.mxu0 %v1427
        %2186 = vmatprep.subr.bf16.mxu0 %v1418
        %2187 = vmatpush2.bf16.xpose.msra.mxu0 %v1417
        %2188 = vmatprep.subr.bf16.mxu0 %v1408
        %2189 = vmatpush2.bf16.xpose.msra.mxu0 %v1407
        %2190 = vmatprep.subr.bf16.mxu0 %v1398
        %2191 = vmatpush2.bf16.xpose.msra.mxu0 %v1397
        %2192 = vmatprep.subr.bf16.mxu0 %v1388
        %2193 = vmatpush2.bf16.xpose.msra.mxu0 %v1387
        %2194 = vmatprep.mubr.bf16.mxu0 %v1668
        %2195 = vmatmul.mubr.bf16.gmra.mxu0 %v1667
        %v2196 = vpop.f32.mrf.mxu0
        %v2197 = vadd.f32 %v2156, %v2196
        %v2198 = vpop.f32.mrf.mxu0
        %v2199 = vadd.f32 %v2158, %v2198
        %v2200 = vpop.f32.mrf.mxu0
        %v2201 = vpop.f32.mrf.mxu0
        %2202 = vdwg.mxu0
        %2203 = vmatprep.subr.bf16.mxu0 %v1754
        %2204 = vmatpush1.bf16.xpose.msra.mxu0 %v1379
        %2205 = vmatprep.subr.bf16.mxu0 %v1751
        %2206 = vmatpush1.bf16.xpose.msra.mxu0 %v1369
        %2207 = vmatprep.subr.bf16.mxu0 %v1748
        %2208 = vmatpush1.bf16.xpose.msra.mxu0 %v1359
        %2209 = vmatprep.subr.bf16.mxu0 %v1745
        %2210 = vmatpush1.bf16.xpose.msra.mxu0 %v1349
        %2211 = vmatprep.subr.bf16.mxu0 %v1742
        %2212 = vmatpush1.bf16.xpose.msra.mxu0 %v1339
        %2213 = vmatprep.subr.bf16.mxu0 %v1739
        %2214 = vmatpush1.bf16.xpose.msra.mxu0 %v1329
        %2215 = vmatprep.subr.bf16.mxu0 %v1736
        %2216 = vmatpush1.bf16.xpose.msra.mxu0 %v1319
        %2217 = vmatprep.subr.bf16.mxu0 %v1733
        %2218 = vmatpush1.bf16.xpose.msra.mxu0 %v1309
        %2219 = vmatprep.subr.bf16.mxu0 %v1778
        %2220 = vmatpush2.bf16.xpose.msra.mxu0 %v1459
        %2221 = vmatprep.subr.bf16.mxu0 %v1775
        %2222 = vmatpush2.bf16.xpose.msra.mxu0 %v1449
        %2223 = vmatprep.subr.bf16.mxu0 %v1772
        %2224 = vmatpush2.bf16.xpose.msra.mxu0 %v1439
        %2225 = vmatprep.subr.bf16.mxu0 %v1769
        %2226 = vmatpush2.bf16.xpose.msra.mxu0 %v1429
        %2227 = vmatprep.subr.bf16.mxu0 %v1766
        %2228 = vmatpush2.bf16.xpose.msra.mxu0 %v1419
        %2229 = vmatprep.subr.bf16.mxu0 %v1763
        %2230 = vmatpush2.bf16.xpose.msra.mxu0 %v1409
        %2231 = vmatprep.subr.bf16.mxu0 %v1760
        %2232 = vmatpush2.bf16.xpose.msra.mxu0 %v1399
        %2233 = vmatprep.subr.bf16.mxu0 %v1757
        %2234 = vmatpush2.bf16.xpose.msra.mxu0 %v1389
        %2235 = vmatprep.mubr.bf16.mxu0 %v1682
        %2236 = vmatmul.mubr.bf16.gmra.mxu0 %v1669
        %v2237 = vpop.f32.mrf.mxu0
        %v2238 = vadd.f32 %v2197, %v2237
        %v2239 = vpop.f32.mrf.mxu0
        %v2240 = vadd.f32 %v2199, %v2239
        %v2241 = vpop.f32.mrf.mxu0
        %v2242 = vpop.f32.mrf.mxu0
        %2243 = vdwg.mxu0
        %2244 = vmatprep.subr.bf16.mxu0 %v1532
        %2245 = vmatpush1.bf16.xpose.msra.mxu0 %v1531
        %2246 = vmatprep.subr.bf16.mxu0 %v1522
        %2247 = vmatpush1.bf16.xpose.msra.mxu0 %v1521
        %2248 = vmatprep.subr.bf16.mxu0 %v1512
        %2249 = vmatpush1.bf16.xpose.msra.mxu0 %v1511
        %2250 = vmatprep.subr.bf16.mxu0 %v1502
        %2251 = vmatpush1.bf16.xpose.msra.mxu0 %v1501
        %2252 = vmatprep.subr.bf16.mxu0 %v1492
        %2253 = vmatpush1.bf16.xpose.msra.mxu0 %v1491
        %2254 = vmatprep.subr.bf16.mxu0 %v1482
        %2255 = vmatpush1.bf16.xpose.msra.mxu0 %v1481
        %2256 = vmatprep.subr.bf16.mxu0 %v1472
        %2257 = vmatpush1.bf16.xpose.msra.mxu0 %v1471
        %2258 = vmatprep.subr.bf16.mxu0 %v1462
        %2259 = vmatpush1.bf16.xpose.msra.mxu0 %v1461
        %2260 = vmatprep.subr.bf16.mxu0 %v1612
        %2261 = vmatpush2.bf16.xpose.msra.mxu0 %v1611
        %2262 = vmatprep.subr.bf16.mxu0 %v1602
        %2263 = vmatpush2.bf16.xpose.msra.mxu0 %v1601
        %2264 = vmatprep.subr.bf16.mxu0 %v1592
        %2265 = vmatpush2.bf16.xpose.msra.mxu0 %v1591
        %2266 = vmatprep.subr.bf16.mxu0 %v1582
        %2267 = vmatpush2.bf16.xpose.msra.mxu0 %v1581
        %2268 = vmatprep.subr.bf16.mxu0 %v1572
        %2269 = vmatpush2.bf16.xpose.msra.mxu0 %v1571
        %2270 = vmatprep.subr.bf16.mxu0 %v1562
        %2271 = vmatpush2.bf16.xpose.msra.mxu0 %v1561
        %2272 = vmatprep.subr.bf16.mxu0 %v1552
        %2273 = vmatpush2.bf16.xpose.msra.mxu0 %v1551
        %2274 = vmatprep.subr.bf16.mxu0 %v1542
        %2275 = vmatpush2.bf16.xpose.msra.mxu0 %v1541
        %2276 = vmatprep.mubr.bf16.mxu0 %v1662
        %2277 = vmatmul.mubr.bf16.gmra.mxu0 %v1661
        %v2278 = vpop.f32.mrf.mxu0
        %v2279 = vadd.f32 0.0, %v2278
        %v2280 = vpop.f32.mrf.mxu0
        %v2281 = vadd.f32 0.0, %v2280
        %v2282 = vpop.f32.mrf.mxu0
        %v2283 = vpop.f32.mrf.mxu0
        %2284 = vdwg.mxu0
        %2285 = vmatprep.subr.bf16.mxu0 %v1534
        %2286 = vmatpush1.bf16.xpose.msra.mxu0 %v1533
        %2287 = vmatprep.subr.bf16.mxu0 %v1524
        %2288 = vmatpush1.bf16.xpose.msra.mxu0 %v1523
        %2289 = vmatprep.subr.bf16.mxu0 %v1514
        %2290 = vmatpush1.bf16.xpose.msra.mxu0 %v1513
        %2291 = vmatprep.subr.bf16.mxu0 %v1504
        %2292 = vmatpush1.bf16.xpose.msra.mxu0 %v1503
        %2293 = vmatprep.subr.bf16.mxu0 %v1494
        %2294 = vmatpush1.bf16.xpose.msra.mxu0 %v1493
        %2295 = vmatprep.subr.bf16.mxu0 %v1484
        %2296 = vmatpush1.bf16.xpose.msra.mxu0 %v1483
        %2297 = vmatprep.subr.bf16.mxu0 %v1474
        %2298 = vmatpush1.bf16.xpose.msra.mxu0 %v1473
        %2299 = vmatprep.subr.bf16.mxu0 %v1464
        %2300 = vmatpush1.bf16.xpose.msra.mxu0 %v1463
        %2301 = vmatprep.subr.bf16.mxu0 %v1614
        %2302 = vmatpush2.bf16.xpose.msra.mxu0 %v1613
        %2303 = vmatprep.subr.bf16.mxu0 %v1604
        %2304 = vmatpush2.bf16.xpose.msra.mxu0 %v1603
        %2305 = vmatprep.subr.bf16.mxu0 %v1594
        %2306 = vmatpush2.bf16.xpose.msra.mxu0 %v1593
        %2307 = vmatprep.subr.bf16.mxu0 %v1584
        %2308 = vmatpush2.bf16.xpose.msra.mxu0 %v1583
        %2309 = vmatprep.subr.bf16.mxu0 %v1574
        %2310 = vmatpush2.bf16.xpose.msra.mxu0 %v1573
        %2311 = vmatprep.subr.bf16.mxu0 %v1564
        %2312 = vmatpush2.bf16.xpose.msra.mxu0 %v1563
        %2313 = vmatprep.subr.bf16.mxu0 %v1554
        %2314 = vmatpush2.bf16.xpose.msra.mxu0 %v1553
        %2315 = vmatprep.subr.bf16.mxu0 %v1544
        %2316 = vmatpush2.bf16.xpose.msra.mxu0 %v1543
        %2317 = vmatprep.mubr.bf16.mxu0 %v1664
        %2318 = vmatmul.mubr.bf16.gmra.mxu0 %v1663
        %v2319 = vpop.f32.mrf.mxu0
        %v2320 = vadd.f32 %v2279, %v2319
        %v2321 = vpop.f32.mrf.mxu0
        %v2322 = vadd.f32 %v2281, %v2321
        %v2323 = vpop.f32.mrf.mxu0
        %v2324 = vpop.f32.mrf.mxu0
        %2325 = vdwg.mxu0
        %2326 = vmatprep.subr.bf16.mxu0 %v1536
        %2327 = vmatpush1.bf16.xpose.msra.mxu0 %v1535
        %2328 = vmatprep.subr.bf16.mxu0 %v1526
        %2329 = vmatpush1.bf16.xpose.msra.mxu0 %v1525
        %2330 = vmatprep.subr.bf16.mxu0 %v1516
        %2331 = vmatpush1.bf16.xpose.msra.mxu0 %v1515
        %2332 = vmatprep.subr.bf16.mxu0 %v1506
        %2333 = vmatpush1.bf16.xpose.msra.mxu0 %v1505
        %2334 = vmatprep.subr.bf16.mxu0 %v1496
        %2335 = vmatpush1.bf16.xpose.msra.mxu0 %v1495
        %2336 = vmatprep.subr.bf16.mxu0 %v1486
        %2337 = vmatpush1.bf16.xpose.msra.mxu0 %v1485
        %2338 = vmatprep.subr.bf16.mxu0 %v1476
        %2339 = vmatpush1.bf16.xpose.msra.mxu0 %v1475
        %2340 = vmatprep.subr.bf16.mxu0 %v1466
        %2341 = vmatpush1.bf16.xpose.msra.mxu0 %v1465
        %2342 = vmatprep.subr.bf16.mxu0 %v1616
        %2343 = vmatpush2.bf16.xpose.msra.mxu0 %v1615
        %2344 = vmatprep.subr.bf16.mxu0 %v1606
        %2345 = vmatpush2.bf16.xpose.msra.mxu0 %v1605
        %2346 = vmatprep.subr.bf16.mxu0 %v1596
        %2347 = vmatpush2.bf16.xpose.msra.mxu0 %v1595
        %2348 = vmatprep.subr.bf16.mxu0 %v1586
        %2349 = vmatpush2.bf16.xpose.msra.mxu0 %v1585
        %2350 = vmatprep.subr.bf16.mxu0 %v1576
        %2351 = vmatpush2.bf16.xpose.msra.mxu0 %v1575
        %2352 = vmatprep.subr.bf16.mxu0 %v1566
        %2353 = vmatpush2.bf16.xpose.msra.mxu0 %v1565
        %2354 = vmatprep.subr.bf16.mxu0 %v1556
        %2355 = vmatpush2.bf16.xpose.msra.mxu0 %v1555
        %2356 = vmatprep.subr.bf16.mxu0 %v1546
        %2357 = vmatpush2.bf16.xpose.msra.mxu0 %v1545
        %2358 = vmatprep.mubr.bf16.mxu0 %v1666
        %2359 = vmatmul.mubr.bf16.gmra.mxu0 %v1665
        %v2360 = vpop.f32.mrf.mxu0
        %v2361 = vadd.f32 %v2320, %v2360
        %v2362 = vpop.f32.mrf.mxu0
        %v2363 = vadd.f32 %v2322, %v2362
        %v2364 = vpop.f32.mrf.mxu0
        %v2365 = vpop.f32.mrf.mxu0
        %2366 = vdwg.mxu0
        %2367 = vmatprep.subr.bf16.mxu0 %v1538
        %2368 = vmatpush1.bf16.xpose.msra.mxu0 %v1537
        %2369 = vmatprep.subr.bf16.mxu0 %v1528
        %2370 = vmatpush1.bf16.xpose.msra.mxu0 %v1527
        %2371 = vmatprep.subr.bf16.mxu0 %v1518
        %2372 = vmatpush1.bf16.xpose.msra.mxu0 %v1517
        %2373 = vmatprep.subr.bf16.mxu0 %v1508
        %2374 = vmatpush1.bf16.xpose.msra.mxu0 %v1507
        %2375 = vmatprep.subr.bf16.mxu0 %v1498
        %2376 = vmatpush1.bf16.xpose.msra.mxu0 %v1497
        %2377 = vmatprep.subr.bf16.mxu0 %v1488
        %2378 = vmatpush1.bf16.xpose.msra.mxu0 %v1487
        %2379 = vmatprep.subr.bf16.mxu0 %v1478
        %2380 = vmatpush1.bf16.xpose.msra.mxu0 %v1477
        %2381 = vmatprep.subr.bf16.mxu0 %v1468
        %2382 = vmatpush1.bf16.xpose.msra.mxu0 %v1467
        %2383 = vmatprep.subr.bf16.mxu0 %v1618
        %2384 = vmatpush2.bf16.xpose.msra.mxu0 %v1617
        %2385 = vmatprep.subr.bf16.mxu0 %v1608
        %2386 = vmatpush2.bf16.xpose.msra.mxu0 %v1607
        %2387 = vmatprep.subr.bf16.mxu0 %v1598
        %2388 = vmatpush2.bf16.xpose.msra.mxu0 %v1597
        %2389 = vmatprep.subr.bf16.mxu0 %v1588
        %2390 = vmatpush2.bf16.xpose.msra.mxu0 %v1587
        %2391 = vmatprep.subr.bf16.mxu0 %v1578
        %2392 = vmatpush2.bf16.xpose.msra.mxu0 %v1577
        %2393 = vmatprep.subr.bf16.mxu0 %v1568
        %2394 = vmatpush2.bf16.xpose.msra.mxu0 %v1567
        %2395 = vmatprep.subr.bf16.mxu0 %v1558
        %2396 = vmatpush2.bf16.xpose.msra.mxu0 %v1557
        %2397 = vmatprep.subr.bf16.mxu0 %v1548
        %2398 = vmatpush2.bf16.xpose.msra.mxu0 %v1547
        %2399 = vmatprep.mubr.bf16.mxu0 %v1668
        %2400 = vmatmul.mubr.bf16.gmra.mxu0 %v1667
        %v2401 = vpop.f32.mrf.mxu0
        %v2402 = vadd.f32 %v2361, %v2401
        %v2403 = vpop.f32.mrf.mxu0
        %v2404 = vadd.f32 %v2363, %v2403
        %v2405 = vpop.f32.mrf.mxu0
        %v2406 = vpop.f32.mrf.mxu0
        %2407 = vdwg.mxu0
        %2408 = vmatprep.subr.bf16.mxu0 %v1802
        %2409 = vmatpush1.bf16.xpose.msra.mxu0 %v1539
        %2410 = vmatprep.subr.bf16.mxu0 %v1799
        %2411 = vmatpush1.bf16.xpose.msra.mxu0 %v1529
        %2412 = vmatprep.subr.bf16.mxu0 %v1796
        %2413 = vmatpush1.bf16.xpose.msra.mxu0 %v1519
        %2414 = vmatprep.subr.bf16.mxu0 %v1793
        %2415 = vmatpush1.bf16.xpose.msra.mxu0 %v1509
        %2416 = vmatprep.subr.bf16.mxu0 %v1790
        %2417 = vmatpush1.bf16.xpose.msra.mxu0 %v1499
        %2418 = vmatprep.subr.bf16.mxu0 %v1787
        %2419 = vmatpush1.bf16.xpose.msra.mxu0 %v1489
        %2420 = vmatprep.subr.bf16.mxu0 %v1784
        %2421 = vmatpush1.bf16.xpose.msra.mxu0 %v1479
        %2422 = vmatprep.subr.bf16.mxu0 %v1781
        %2423 = vmatpush1.bf16.xpose.msra.mxu0 %v1469
        %2424 = vmatprep.subr.bf16.mxu0 %v1826
        %2425 = vmatpush2.bf16.xpose.msra.mxu0 %v1619
        %2426 = vmatprep.subr.bf16.mxu0 %v1823
        %2427 = vmatpush2.bf16.xpose.msra.mxu0 %v1609
        %2428 = vmatprep.subr.bf16.mxu0 %v1820
        %2429 = vmatpush2.bf16.xpose.msra.mxu0 %v1599
        %2430 = vmatprep.subr.bf16.mxu0 %v1817
        %2431 = vmatpush2.bf16.xpose.msra.mxu0 %v1589
        %2432 = vmatprep.subr.bf16.mxu0 %v1814
        %2433 = vmatpush2.bf16.xpose.msra.mxu0 %v1579
        %2434 = vmatprep.subr.bf16.mxu0 %v1811
        %2435 = vmatpush2.bf16.xpose.msra.mxu0 %v1569
        %2436 = vmatprep.subr.bf16.mxu0 %v1808
        %2437 = vmatpush2.bf16.xpose.msra.mxu0 %v1559
        %2438 = vmatprep.subr.bf16.mxu0 %v1805
        %2439 = vmatpush2.bf16.xpose.msra.mxu0 %v1549
        %2440 = vmatprep.mubr.bf16.mxu0 %v1682
        %2441 = vmatmul.mubr.bf16.gmra.mxu0 %v1669
        %v2442 = vpop.f32.mrf.mxu0
        %v2443 = vadd.f32 %v2402, %v2442
        %v2444 = vpop.f32.mrf.mxu0
        %v2445 = vadd.f32 %v2404, %v2444
        %v2446 = vpop.f32.mrf.mxu0
        %v2447 = vpop.f32.mrf.mxu0
        %2448 = vdwg.mxu0
        %2449 = vmatprep.subr.bf16.mxu0 0
        %2450 = vmatpush1.bf16.xpose.msra.mxu0 0
        %2451 = vmatprep.subr.bf16.mxu0 0
        %2452 = vmatpush1.bf16.xpose.msra.mxu0 0
        %2453 = vmatprep.subr.bf16.mxu0 0
        %2454 = vmatpush1.bf16.xpose.msra.mxu0 0
        %2455 = vmatprep.subr.bf16.mxu0 0
        %2456 = vmatpush1.bf16.xpose.msra.mxu0 0
        %2457 = vmatprep.subr.bf16.mxu0 0
        %2458 = vmatpush1.bf16.xpose.msra.mxu0 0
        %2459 = vmatprep.subr.bf16.mxu0 0
        %2460 = vmatpush1.bf16.xpose.msra.mxu0 0
        %2461 = vmatprep.subr.bf16.mxu0 %v1632
        %2462 = vmatpush1.bf16.xpose.msra.mxu0 %v1631
        %2463 = vmatprep.subr.bf16.mxu0 %v1622
        %2464 = vmatpush1.bf16.xpose.msra.mxu0 %v1621
        %2465 = vmatprep.subr.bf16.mxu0 0
        %2466 = vmatpush2.bf16.xpose.msra.mxu0 0
        %2467 = vmatprep.subr.bf16.mxu0 0
        %2468 = vmatpush2.bf16.xpose.msra.mxu0 0
        %2469 = vmatprep.subr.bf16.mxu0 0
        %2470 = vmatpush2.bf16.xpose.msra.mxu0 0
        %2471 = vmatprep.subr.bf16.mxu0 0
        %2472 = vmatpush2.bf16.xpose.msra.mxu0 0
        %2473 = vmatprep.subr.bf16.mxu0 0
        %2474 = vmatpush2.bf16.xpose.msra.mxu0 0
        %2475 = vmatprep.subr.bf16.mxu0 0
        %2476 = vmatpush2.bf16.xpose.msra.mxu0 0
        %2477 = vmatprep.subr.bf16.mxu0 0
        %2478 = vmatpush2.bf16.xpose.msra.mxu0 0
        %2479 = vmatprep.subr.bf16.mxu0 0
        %2480 = vmatpush2.bf16.xpose.msra.mxu0 0
        %2481 = vmatprep.mubr.bf16.mxu0 %v1662
        %2482 = vmatmul.mubr.bf16.gmra.mxu0 %v1661
        %v2483 = vpop.f32.mrf.mxu0
        %v2484 = vadd.f32 0.0, %v2483
        %v2485 = vpop.f32.mrf.mxu0
        %v2486 = vpop.f32.mrf.mxu0
        %v2487 = vpop.f32.mrf.mxu0
        %2488 = vdwg.mxu0
        %2489 = vmatprep.subr.bf16.mxu0 0
        %2490 = vmatpush1.bf16.xpose.msra.mxu0 0
        %2491 = vmatprep.subr.bf16.mxu0 0
        %2492 = vmatpush1.bf16.xpose.msra.mxu0 0
        %2493 = vmatprep.subr.bf16.mxu0 0
        %2494 = vmatpush1.bf16.xpose.msra.mxu0 0
        %2495 = vmatprep.subr.bf16.mxu0 0
        %2496 = vmatpush1.bf16.xpose.msra.mxu0 0
        %2497 = vmatprep.subr.bf16.mxu0 0
        %2498 = vmatpush1.bf16.xpose.msra.mxu0 0
        %2499 = vmatprep.subr.bf16.mxu0 0
        %2500 = vmatpush1.bf16.xpose.msra.mxu0 0
        %2501 = vmatprep.subr.bf16.mxu0 %v1634
        %2502 = vmatpush1.bf16.xpose.msra.mxu0 %v1633
        %2503 = vmatprep.subr.bf16.mxu0 %v1624
        %2504 = vmatpush1.bf16.xpose.msra.mxu0 %v1623
        %2505 = vmatprep.subr.bf16.mxu0 0
        %2506 = vmatpush2.bf16.xpose.msra.mxu0 0
        %2507 = vmatprep.subr.bf16.mxu0 0
        %2508 = vmatpush2.bf16.xpose.msra.mxu0 0
        %2509 = vmatprep.subr.bf16.mxu0 0
        %2510 = vmatpush2.bf16.xpose.msra.mxu0 0
        %2511 = vmatprep.subr.bf16.mxu0 0
        %2512 = vmatpush2.bf16.xpose.msra.mxu0 0
        %2513 = vmatprep.subr.bf16.mxu0 0
        %2514 = vmatpush2.bf16.xpose.msra.mxu0 0
        %2515 = vmatprep.subr.bf16.mxu0 0
        %2516 = vmatpush2.bf16.xpose.msra.mxu0 0
        %2517 = vmatprep.subr.bf16.mxu0 0
        %2518 = vmatpush2.bf16.xpose.msra.mxu0 0
        %2519 = vmatprep.subr.bf16.mxu0 0
        %2520 = vmatpush2.bf16.xpose.msra.mxu0 0
        %2521 = vmatprep.mubr.bf16.mxu0 %v1664
        %2522 = vmatmul.mubr.bf16.gmra.mxu0 %v1663
        %v2523 = vpop.f32.mrf.mxu0
        %v2524 = vadd.f32 %v2484, %v2523
        %v2525 = vpop.f32.mrf.mxu0
        %v2526 = vpop.f32.mrf.mxu0
        %v2527 = vpop.f32.mrf.mxu0
        %2528 = vdwg.mxu0
        %2529 = vmatprep.subr.bf16.mxu0 0
        %2530 = vmatpush1.bf16.xpose.msra.mxu0 0
        %2531 = vmatprep.subr.bf16.mxu0 0
        %2532 = vmatpush1.bf16.xpose.msra.mxu0 0
        %2533 = vmatprep.subr.bf16.mxu0 0
        %2534 = vmatpush1.bf16.xpose.msra.mxu0 0
        %2535 = vmatprep.subr.bf16.mxu0 0
        %2536 = vmatpush1.bf16.xpose.msra.mxu0 0
        %2537 = vmatprep.subr.bf16.mxu0 0
        %2538 = vmatpush1.bf16.xpose.msra.mxu0 0
        %2539 = vmatprep.subr.bf16.mxu0 0
        %2540 = vmatpush1.bf16.xpose.msra.mxu0 0
        %2541 = vmatprep.subr.bf16.mxu0 %v1636
        %2542 = vmatpush1.bf16.xpose.msra.mxu0 %v1635
        %2543 = vmatprep.subr.bf16.mxu0 %v1626
        %2544 = vmatpush1.bf16.xpose.msra.mxu0 %v1625
        %2545 = vmatprep.subr.bf16.mxu0 0
        %2546 = vmatpush2.bf16.xpose.msra.mxu0 0
        %2547 = vmatprep.subr.bf16.mxu0 0
        %2548 = vmatpush2.bf16.xpose.msra.mxu0 0
        %2549 = vmatprep.subr.bf16.mxu0 0
        %2550 = vmatpush2.bf16.xpose.msra.mxu0 0
        %2551 = vmatprep.subr.bf16.mxu0 0
        %2552 = vmatpush2.bf16.xpose.msra.mxu0 0
        %2553 = vmatprep.subr.bf16.mxu0 0
        %2554 = vmatpush2.bf16.xpose.msra.mxu0 0
        %2555 = vmatprep.subr.bf16.mxu0 0
        %2556 = vmatpush2.bf16.xpose.msra.mxu0 0
        %2557 = vmatprep.subr.bf16.mxu0 0
        %2558 = vmatpush2.bf16.xpose.msra.mxu0 0
        %2559 = vmatprep.subr.bf16.mxu0 0
        %2560 = vmatpush2.bf16.xpose.msra.mxu0 0
        %2561 = vmatprep.mubr.bf16.mxu0 %v1666
        %2562 = vmatmul.mubr.bf16.gmra.mxu0 %v1665
        %v2563 = vpop.f32.mrf.mxu0
        %v2564 = vadd.f32 %v2524, %v2563
        %v2565 = vpop.f32.mrf.mxu0
        %v2566 = vpop.f32.mrf.mxu0
        %v2567 = vpop.f32.mrf.mxu0
        %2568 = vdwg.mxu0
        %2569 = vmatprep.subr.bf16.mxu0 0
        %2570 = vmatpush1.bf16.xpose.msra.mxu0 0
        %2571 = vmatprep.subr.bf16.mxu0 0
        %2572 = vmatpush1.bf16.xpose.msra.mxu0 0
        %2573 = vmatprep.subr.bf16.mxu0 0
        %2574 = vmatpush1.bf16.xpose.msra.mxu0 0
        %2575 = vmatprep.subr.bf16.mxu0 0
        %2576 = vmatpush1.bf16.xpose.msra.mxu0 0
        %2577 = vmatprep.subr.bf16.mxu0 0
        %2578 = vmatpush1.bf16.xpose.msra.mxu0 0
        %2579 = vmatprep.subr.bf16.mxu0 0
        %2580 = vmatpush1.bf16.xpose.msra.mxu0 0
        %2581 = vmatprep.subr.bf16.mxu0 %v1638
        %2582 = vmatpush1.bf16.xpose.msra.mxu0 %v1637
        %2583 = vmatprep.subr.bf16.mxu0 %v1628
        %2584 = vmatpush1.bf16.xpose.msra.mxu0 %v1627
        %2585 = vmatprep.subr.bf16.mxu0 0
        %2586 = vmatpush2.bf16.xpose.msra.mxu0 0
        %2587 = vmatprep.subr.bf16.mxu0 0
        %2588 = vmatpush2.bf16.xpose.msra.mxu0 0
        %2589 = vmatprep.subr.bf16.mxu0 0
        %2590 = vmatpush2.bf16.xpose.msra.mxu0 0
        %2591 = vmatprep.subr.bf16.mxu0 0
        %2592 = vmatpush2.bf16.xpose.msra.mxu0 0
        %2593 = vmatprep.subr.bf16.mxu0 0
        %2594 = vmatpush2.bf16.xpose.msra.mxu0 0
        %2595 = vmatprep.subr.bf16.mxu0 0
        %2596 = vmatpush2.bf16.xpose.msra.mxu0 0
        %2597 = vmatprep.subr.bf16.mxu0 0
        %2598 = vmatpush2.bf16.xpose.msra.mxu0 0
        %2599 = vmatprep.subr.bf16.mxu0 0
        %2600 = vmatpush2.bf16.xpose.msra.mxu0 0
        %2601 = vmatprep.mubr.bf16.mxu0 %v1668
        %2602 = vmatmul.mubr.bf16.gmra.mxu0 %v1667
        %v2603 = vpop.f32.mrf.mxu0
        %v2604 = vadd.f32 %v2564, %v2603
        %v2605 = vpop.f32.mrf.mxu0
        %v2606 = vpop.f32.mrf.mxu0
        %v2607 = vpop.f32.mrf.mxu0
        %2608 = vdwg.mxu0
        %2609 = vmatprep.subr.bf16.mxu0 0
        %2610 = vmatpush1.bf16.xpose.msra.mxu0 0
        %2611 = vmatprep.subr.bf16.mxu0 0
        %2612 = vmatpush1.bf16.xpose.msra.mxu0 0
        %2613 = vmatprep.subr.bf16.mxu0 0
        %2614 = vmatpush1.bf16.xpose.msra.mxu0 0
        %2615 = vmatprep.subr.bf16.mxu0 0
        %2616 = vmatpush1.bf16.xpose.msra.mxu0 0
        %2617 = vmatprep.subr.bf16.mxu0 0
        %2618 = vmatpush1.bf16.xpose.msra.mxu0 0
        %2619 = vmatprep.subr.bf16.mxu0 0
        %2620 = vmatpush1.bf16.xpose.msra.mxu0 0
        %2621 = vmatprep.subr.bf16.mxu0 %v1832
        %2622 = vmatpush1.bf16.xpose.msra.mxu0 %v1639
        %2623 = vmatprep.subr.bf16.mxu0 %v1829
        %2624 = vmatpush1.bf16.xpose.msra.mxu0 %v1629
        %2625 = vmatprep.subr.bf16.mxu0 0
        %2626 = vmatpush2.bf16.xpose.msra.mxu0 0
        %2627 = vmatprep.subr.bf16.mxu0 0
        %2628 = vmatpush2.bf16.xpose.msra.mxu0 0
        %2629 = vmatprep.subr.bf16.mxu0 0
        %2630 = vmatpush2.bf16.xpose.msra.mxu0 0
        %2631 = vmatprep.subr.bf16.mxu0 0
        %2632 = vmatpush2.bf16.xpose.msra.mxu0 0
        %2633 = vmatprep.subr.bf16.mxu0 0
        %2634 = vmatpush2.bf16.xpose.msra.mxu0 0
        %2635 = vmatprep.subr.bf16.mxu0 0
        %2636 = vmatpush2.bf16.xpose.msra.mxu0 0
        %2637 = vmatprep.subr.bf16.mxu0 0
        %2638 = vmatpush2.bf16.xpose.msra.mxu0 0
        %2639 = vmatprep.subr.bf16.mxu0 0
        %2640 = vmatpush2.bf16.xpose.msra.mxu0 0
        %2641 = vmatprep.mubr.bf16.mxu0 %v1682
        %2642 = vmatmul.mubr.bf16.gmra.mxu0 %v1669
        %v2643 = vpop.f32.mrf.mxu0
        %v2644 = vadd.f32 %v2604, %v2643
        %v2645 = vpop.f32.mrf.mxu0
        %v2646 = vpop.f32.mrf.mxu0
        %v2647 = vpop.f32.mrf.mxu0
        %2648 = vdwg.mxu0
        %v2649 = vld [vmem:[%s420] sm:$0x7f]
        %v2651 = vlaneseq
        %v2652 = vshrl.u32 %v2651, 7
        %v2653 = vsub.s32 0, %v2652
        %v2654 = vrot.slane %v2649, %v2653
        %v2655 = vlaneseq
        %v2656 = vshrl.u32 %v2655, 7
        %v2657 = vsub.s32 1, %v2656
        %v2658 = vrot.slane %v2649, %v2657
        %v2659 = vlaneseq
        %v2660 = vshrl.u32 %v2659, 7
        %v2661 = vsub.s32 2, %v2660
        %v2662 = vrot.slane %v2649, %v2661
        %v2663 = vlaneseq
        %v2664 = vshrl.u32 %v2663, 7
        %v2665 = vsub.s32 3, %v2664
        %v2666 = vrot.slane %v2649, %v2665
        %v2667 = vlaneseq
        %v2668 = vshrl.u32 %v2667, 7
        %v2669 = vsub.s32 4, %v2668
        %v2670 = vrot.slane %v2649, %v2669
        %v2671 = vlaneseq
        %v2672 = vshrl.u32 %v2671, 7
        %v2673 = vsub.s32 5, %v2672
        %v2674 = vrot.slane %v2649, %v2673
        %v2675 = vlaneseq
        %v2676 = vshrl.u32 %v2675, 7
        %v2677 = vsub.s32 6, %v2676
        %v2678 = vrot.slane %v2649, %v2677
        %v2686 = vmul.f32 %v2033, %v2654
        %v2687 = vmul.f32 %v2035, %v2658
        %v2688 = vmul.f32 %v2238, %v2662
        %v2689 = vmul.f32 %v2240, %v2666
        %v2690 = vmul.f32 %v2443, %v2670
        %v2691 = vmul.f32 %v2445, %v2674
        %v2692 = vmul.f32 %v2644, %v2678
        %v2693 = vld [vmem:[%s424] sm:$0x7f]
        %v2695 = vlaneseq
        %v2696 = vshrl.u32 %v2695, 7
        %v2697 = vsub.s32 0, %v2696
        %v2698 = vrot.slane %v2693, %v2697
        %v2699 = vlaneseq
        %v2700 = vshrl.u32 %v2699, 7
        %v2701 = vsub.s32 1, %v2700
        %v2702 = vrot.slane %v2693, %v2701
        %v2703 = vlaneseq
        %v2704 = vshrl.u32 %v2703, 7
        %v2705 = vsub.s32 2, %v2704
        %v2706 = vrot.slane %v2693, %v2705
        %v2707 = vlaneseq
        %v2708 = vshrl.u32 %v2707, 7
        %v2709 = vsub.s32 3, %v2708
        %v2710 = vrot.slane %v2693, %v2709
        %v2711 = vlaneseq
        %v2712 = vshrl.u32 %v2711, 7
        %v2713 = vsub.s32 4, %v2712
        %v2714 = vrot.slane %v2693, %v2713
        %v2715 = vlaneseq
        %v2716 = vshrl.u32 %v2715, 7
        %v2717 = vsub.s32 5, %v2716
        %v2718 = vrot.slane %v2693, %v2717
        %v2719 = vlaneseq
        %v2720 = vshrl.u32 %v2719, 7
        %v2721 = vsub.s32 6, %v2720
        %v2722 = vrot.slane %v2693, %v2721
        %v2730 = vadd.f32 %v2686, %v2698
        %v2731 = vadd.f32 %v2687, %v2702
        %v2732 = vadd.f32 %v2688, %v2706
        %v2733 = vadd.f32 %v2689, %v2710
        %v2734 = vadd.f32 %v2690, %v2714
        %v2735 = vadd.f32 %v2691, %v2718
        %v2736 = vadd.f32 %v2692, %v2722
        %v2737 = vmax.f32 %v2730, 0.0
        %v2738 = vmax.f32 %v2731, 0.0
        %v2739 = vmax.f32 %v2732, 0.0
        %v2740 = vmax.f32 %v2733, 0.0
        %v2741 = vmax.f32 %v2734, 0.0
        %v2742 = vmax.f32 %v2735, 0.0
        %v2743 = vmax.f32 %v2736, 0.0
        %v2744 = vpack.c.bf16 %v2737, %v2737
        %v2745 = vpack.c.bf16 %v2738, %v2738
        %v2746 = vpack.c.bf16 %v2739, %v2739
        %v2747 = vpack.c.bf16 %v2740, %v2740
        %v2748 = vpack.c.bf16 %v2741, %v2741
        %v2749 = vpack.c.bf16 %v2742, %v2742
        %v2750 = vpack.c.bf16 %v2743, %v2743
        %v2751 = vld [vmem:[%s430] sm:$0xff]
        %v2752 = vld [vmem:[%s430 + $0x8] sm:$0xff]
        %v2753 = vld [vmem:[%s430 + $0x10] sm:$0xff]
        %v2754 = vld [vmem:[%s430 + $0x18] sm:$0xff]
        %v2755 = vld [vmem:[%s430 + $0x20] sm:$0xff]
        %v2756 = vld [vmem:[%s430 + $0x28] sm:$0xff]
        %v2757 = vld [vmem:[%s430 + $0x30] sm:$0xff]
        %v2758 = vld [vmem:[%s430 + $0x38] sm:$0xff]
        %v2759 = vld [vmem:[%s430 + $0x40] sm:$0xff]
        %v2760 = vld [vmem:[%s430 + $0x48] sm:$0xff]
        %v2761 = vld [vmem:[%s430 + $0x50] sm:$0xff]
        %v2762 = vld [vmem:[%s430 + $0x58] sm:$0xff]
        %v2763 = vld [vmem:[%s430 + $0x60] sm:$0xff]
        %v2764 = vld [vmem:[%s430 + $0x68] sm:$0xff]
        %v2765 = vld [vmem:[%s430 + $0x70] sm:$0xff]
        %v2766 = vld [vmem:[%s430 + $0x78] sm:$0xff]
        %v2767 = vld [vmem:[%s430 + $0x80] sm:$0xff]
        %v2768 = vld [vmem:[%s430 + $0x88] sm:$0xff]
        %v2769 = vld [vmem:[%s430 + $0x90] sm:$0xff]
        %v2770 = vld [vmem:[%s430 + $0x98] sm:$0xff]
        %v2771 = vld [vmem:[%s430 + $0xa0] sm:$0xff]
        %v2772 = vld [vmem:[%s430 + $0xa8] sm:$0xff]
        %v2773 = vld [vmem:[%s430 + $0xb0] sm:$0xff]
        %v2774 = vld [vmem:[%s430 + $0xb8] sm:$0xff]
        %v2775 = vld [vmem:[%s430 + $0xc0] sm:$0xff]
        %v2776 = vld [vmem:[%s430 + $0xc8] sm:$0xff]
        %v2777 = vld [vmem:[%s430 + $0xd0] sm:$0xff]
        %v2778 = vld [vmem:[%s430 + $0xd8] sm:$0xff]
        %v2779 = vld [vmem:[%s430 + $0xe0] sm:$0xff]
        %v2780 = vld [vmem:[%s430 + $0xe8] sm:$0xff]
        %v2781 = vld [vmem:[%s430 + $0xf0] sm:$0xff]
        %v2782 = vld [vmem:[%s430 + $0xf8] sm:$0xff]
        %v2783 = vld [vmem:[%s430 + $0x100] sm:$0xff]
        %v2784 = vld [vmem:[%s430 + $0x108] sm:$0xff]
        %v2785 = vld [vmem:[%s430 + $0x110] sm:$0xff]
        %v2786 = vld [vmem:[%s430 + $0x118] sm:$0xff]
        %v2787 = vld [vmem:[%s430 + $0x120] sm:$0xff]
        %v2788 = vld [vmem:[%s430 + $0x128] sm:$0xff]
        %v2789 = vld [vmem:[%s430 + $0x130] sm:$0xff]
        %v2790 = vld [vmem:[%s430 + $0x138] sm:$0xff]
        %v2791 = vld [vmem:[%s430 + $0x140] sm:$0xff]
        %v2792 = vld [vmem:[%s430 + $0x148] sm:$0xff]
        %v2793 = vld [vmem:[%s430 + $0x150] sm:$0xff]
        %v2794 = vld [vmem:[%s430 + $0x158] sm:$0xff]
        %v2795 = vld [vmem:[%s430 + $0x160] sm:$0xff]
        %v2796 = vld [vmem:[%s430 + $0x168] sm:$0xff]
        %v2797 = vld [vmem:[%s430 + $0x170] sm:$0xff]
        %v2798 = vld [vmem:[%s430 + $0x178] sm:$0xff]
        %v2799 = vld [vmem:[%s430 + $0x180] sm:$0xff]
        %v2800 = vld [vmem:[%s430 + $0x188] sm:$0xff]
        %v2801 = vld [vmem:[%s430 + $0x190] sm:$0xff]
        %v2802 = vld [vmem:[%s430 + $0x198] sm:$0xff]
        %v2803 = vld [vmem:[%s430 + $0x1a0] sm:$0xff]
        %v2804 = vld [vmem:[%s430 + $0x1a8] sm:$0xff]
        %v2805 = vld [vmem:[%s430 + $0x1b0] sm:$0xff]
        %v2806 = vld [vmem:[%s430 + $0x1b8] sm:$0xff]
        %v2807 = vld [vmem:[%s430 + $0x1c0] sm:$0xff]
        %v2808 = vld [vmem:[%s430 + $0x1c8] sm:$0xff]
        %v2809 = vld [vmem:[%s430 + $0x1d0] sm:$0xff]
        %v2810 = vld [vmem:[%s430 + $0x1d8] sm:$0xff]
        %v2811 = vld [vmem:[%s430 + $0x1e0] sm:$0xff]
        %v2812 = vld [vmem:[%s430 + $0x1e8] sm:$0xff]
        %v2813 = vld [vmem:[%s430 + $0x1f0] sm:$0xff]
        %v2814 = vld [vmem:[%s430 + $0x1f8] sm:$0xff]
        %v2815 = vld [vmem:[%s430 + $0x200] sm:$0xff]
        %v2816 = vld [vmem:[%s430 + $0x208] sm:$0xff]
        %v2817 = vld [vmem:[%s430 + $0x210] sm:$0xff]
        %v2818 = vld [vmem:[%s430 + $0x218] sm:$0xff]
        %v2819 = vld [vmem:[%s430 + $0x220] sm:$0xff]
        %v2820 = vld [vmem:[%s430 + $0x228] sm:$0xff]
        %v2821 = vld [vmem:[%s430 + $0x230] sm:$0xff]
        %v2822 = vld [vmem:[%s430 + $0x238] sm:$0xff]
        %v2823 = vld [vmem:[%s430 + $0x240] sm:$0xff]
        %v2824 = vld [vmem:[%s430 + $0x248] sm:$0xff]
        %v2825 = vld [vmem:[%s430 + $0x250] sm:$0xff]
        %v2826 = vld [vmem:[%s430 + $0x258] sm:$0xff]
        %v2827 = vld [vmem:[%s430 + $0x260] sm:$0xff]
        %v2828 = vld [vmem:[%s430 + $0x268] sm:$0xff]
        %v2829 = vld [vmem:[%s430 + $0x270] sm:$0xff]
        %v2830 = vld [vmem:[%s430 + $0x278] sm:$0xff]
        %v2831 = vld [vmem:[%s430 + $0x280] sm:$0xff]
        %v2832 = vld [vmem:[%s430 + $0x288] sm:$0xff]
        %v2833 = vld [vmem:[%s430 + $0x290] sm:$0xff]
        %v2834 = vld [vmem:[%s430 + $0x298] sm:$0xff]
        %v2835 = vld [vmem:[%s430 + $0x2a0] sm:$0xff]
        %v2836 = vld [vmem:[%s430 + $0x2a8] sm:$0xff]
        %v2837 = vld [vmem:[%s430 + $0x2b0] sm:$0xff]
        %v2838 = vld [vmem:[%s430 + $0x2b8] sm:$0xff]
        %v2839 = vld [vmem:[%s430 + $0x2c0] sm:$0xff]
        %v2840 = vld [vmem:[%s430 + $0x2c8] sm:$0xff]
        %v2841 = vld [vmem:[%s430 + $0x2d0] sm:$0xff]
        %v2842 = vld [vmem:[%s430 + $0x2d8] sm:$0xff]
        %v2843 = vld [vmem:[%s430 + $0x2e0] sm:$0xff]
        %v2844 = vld [vmem:[%s430 + $0x2e8] sm:$0xff]
        %v2845 = vld [vmem:[%s430 + $0x2f0] sm:$0xff]
        %v2846 = vld [vmem:[%s430 + $0x2f8] sm:$0xff]
        %v2847 = vld [vmem:[%s430 + $0x300] sm:$0xff]
        %v2848 = vld [vmem:[%s430 + $0x308] sm:$0xff]
        %v2849 = vld [vmem:[%s430 + $0x310] sm:$0xff]
        %v2850 = vld [vmem:[%s430 + $0x318] sm:$0xff]
        %v2851 = vld [vmem:[%s430 + $0x320] sm:$0xff]
        %v2852 = vld [vmem:[%s430 + $0x328] sm:$0xff]
        %v2853 = vld [vmem:[%s430 + $0x330] sm:$0xff]
        %v2854 = vld [vmem:[%s430 + $0x338] sm:$0xff]
        %v2855 = vld [vmem:[%s430 + $0x340] sm:$0xff]
        %v2856 = vld [vmem:[%s430 + $0x348] sm:$0xff]
        %v2857 = vld [vmem:[%s430 + $0x350] sm:$0xff]
        %v2858 = vld [vmem:[%s430 + $0x358] sm:$0xff]
        %v2859 = vld [vmem:[%s430 + $0x360] sm:$0xff]
        %v2860 = vld [vmem:[%s430 + $0x368] sm:$0xff]
        %v2861 = vld [vmem:[%s430 + $0x370] sm:$0xff]
        %v2862 = vld [vmem:[%s430 + $0x378] sm:$0xff]
        %v2863 = vld [vmem:[%s430 + $0x380] sm:$0xff]
        %v2864 = vld [vmem:[%s430 + $0x388] sm:$0xff]
        %v2865 = vld [vmem:[%s430 + $0x390] sm:$0xff]
        %v2866 = vld [vmem:[%s430 + $0x398] sm:$0xff]
        %v2867 = vld [vmem:[%s430 + $0x3a0] sm:$0xff]
        %v2868 = vld [vmem:[%s430 + $0x3a8] sm:$0xff]
        %v2869 = vld [vmem:[%s430 + $0x3b0] sm:$0xff]
        %v2870 = vld [vmem:[%s430 + $0x3b8] sm:$0xff]
        %v2871 = vld [vmem:[%s430 + $0x3c0] sm:$0xff]
        %v2872 = vld [vmem:[%s430 + $0x3c8] sm:$0xff]
        %v2873 = vld [vmem:[%s430 + $0x3d0] sm:$0xff]
        %v2874 = vld [vmem:[%s430 + $0x3d8] sm:$0xff]
        %v2875 = vld [vmem:[%s430 + $0x3e0] sm:$0xff]
        %v2876 = vld [vmem:[%s430 + $0x3e8] sm:$0xff]
        %v2877 = vld [vmem:[%s430 + $0x3f0] sm:$0xff]
        %v2878 = vld [vmem:[%s430 + $0x3f8] sm:$0xff]
        %v2879 = vld [vmem:[%s430 + $0x400] sm:$0xff]
        %v2880 = vld [vmem:[%s430 + $0x408] sm:$0xff]
        %v2881 = vld [vmem:[%s430 + $0x410] sm:$0xff]
        %v2882 = vld [vmem:[%s430 + $0x418] sm:$0xff]
        %v2883 = vld [vmem:[%s430 + $0x420] sm:$0xff]
        %v2884 = vld [vmem:[%s430 + $0x428] sm:$0xff]
        %v2885 = vld [vmem:[%s430 + $0x430] sm:$0xff]
        %v2886 = vld [vmem:[%s430 + $0x438] sm:$0xff]
        %v2887 = vld [vmem:[%s430 + $0x440] sm:$0xff]
        %v2888 = vld [vmem:[%s430 + $0x448] sm:$0xff]
        %v2889 = vld [vmem:[%s430 + $0x450] sm:$0xff]
        %v2890 = vld [vmem:[%s430 + $0x458] sm:$0xff]
        %v2891 = vld [vmem:[%s430 + $0x460] sm:$0xff]
        %v2892 = vld [vmem:[%s430 + $0x468] sm:$0xff]
        %v2893 = vld [vmem:[%s430 + $0x470] sm:$0xff]
        %v2894 = vld [vmem:[%s430 + $0x478] sm:$0xff]
        %v2895 = vld [vmem:[%s430 + $0x480] sm:$0xff]
        %v2896 = vld [vmem:[%s430 + $0x488] sm:$0xff]
        %v2897 = vld [vmem:[%s430 + $0x490] sm:$0xff]
        %v2898 = vld [vmem:[%s430 + $0x498] sm:$0xff]
        %v2899 = vld [vmem:[%s430 + $0x4a0] sm:$0xff]
        %v2900 = vld [vmem:[%s430 + $0x4a8] sm:$0xff]
        %v2901 = vld [vmem:[%s430 + $0x4b0] sm:$0xff]
        %v2902 = vld [vmem:[%s430 + $0x4b8] sm:$0xff]
        %v2903 = vld [vmem:[%s430 + $0x4c0] sm:$0xff]
        %v2904 = vld [vmem:[%s430 + $0x4c8] sm:$0xff]
        %v2905 = vld [vmem:[%s430 + $0x4d0] sm:$0xff]
        %v2906 = vld [vmem:[%s430 + $0x4d8] sm:$0xff]
        %v2907 = vld [vmem:[%s430 + $0x4e0] sm:$0xff]
        %v2908 = vld [vmem:[%s430 + $0x4e8] sm:$0xff]
        %v2909 = vld [vmem:[%s430 + $0x4f0] sm:$0xff]
        %v2910 = vld [vmem:[%s430 + $0x4f8] sm:$0xff]
        %v2911 = vld [vmem:[%s430 + $0x500] sm:$0xff]
        %v2912 = vld [vmem:[%s430 + $0x508] sm:$0xff]
        %v2913 = vld [vmem:[%s430 + $0x510] sm:$0xff]
        %v2914 = vld [vmem:[%s430 + $0x518] sm:$0xff]
        %v2915 = vld [vmem:[%s430 + $0x520] sm:$0xff]
        %v2916 = vld [vmem:[%s430 + $0x528] sm:$0xff]
        %v2917 = vld [vmem:[%s430 + $0x530] sm:$0xff]
        %v2918 = vld [vmem:[%s430 + $0x538] sm:$0xff]
        %v2919 = vld [vmem:[%s430 + $0x540] sm:$0xff]
        %v2920 = vld [vmem:[%s430 + $0x548] sm:$0xff]
        %v2921 = vld [vmem:[%s430 + $0x550] sm:$0xff]
        %v2922 = vld [vmem:[%s430 + $0x558] sm:$0xff]
        %v2923 = vld [vmem:[%s430 + $0x560] sm:$0xff]
        %v2924 = vld [vmem:[%s430 + $0x568] sm:$0xff]
        %v2925 = vld [vmem:[%s430 + $0x570] sm:$0xff]
        %v2926 = vld [vmem:[%s430 + $0x578] sm:$0xff]
        %v2927 = vld [vmem:[%s430 + $0x580] sm:$0xff]
        %v2928 = vld [vmem:[%s430 + $0x588] sm:$0xff]
        %v2929 = vld [vmem:[%s430 + $0x590] sm:$0xff]
        %v2930 = vld [vmem:[%s430 + $0x598] sm:$0xff]
        %v2931 = vld [vmem:[%s430 + $0x5a0] sm:$0xff]
        %v2932 = vld [vmem:[%s430 + $0x5a8] sm:$0xff]
        %v2933 = vld [vmem:[%s430 + $0x5b0] sm:$0xff]
        %v2934 = vld [vmem:[%s430 + $0x5b8] sm:$0xff]
        %v2935 = vld [vmem:[%s430 + $0x5c0] sm:$0xff]
        %v2936 = vld [vmem:[%s430 + $0x5c8] sm:$0xff]
        %v2937 = vld [vmem:[%s430 + $0x5d0] sm:$0xff]
        %v2938 = vld [vmem:[%s430 + $0x5d8] sm:$0xff]
        %v2939 = vld [vmem:[%s430 + $0x5e0] sm:$0xff]
        %v2940 = vld [vmem:[%s430 + $0x5e8] sm:$0xff]
        %v2941 = vld [vmem:[%s430 + $0x5f0] sm:$0xff]
        %v2942 = vld [vmem:[%s430 + $0x5f8] sm:$0xff]
        %v2943 = vld [vmem:[%s430 + $0x600] sm:$0xff]
        %v2944 = vld [vmem:[%s430 + $0x608] sm:$0xff]
        %v2945 = vld [vmem:[%s430 + $0x610] sm:$0xff]
        %v2946 = vld [vmem:[%s430 + $0x618] sm:$0xff]
        %v2947 = vld [vmem:[%s430 + $0x620] sm:$0xff]
        %v2948 = vld [vmem:[%s430 + $0x628] sm:$0xff]
        %v2949 = vld [vmem:[%s430 + $0x630] sm:$0xff]
        %v2950 = vld [vmem:[%s430 + $0x638] sm:$0xff]
        %v2951 = vld [vmem:[%s430 + $0x640] sm:$0xff]
        %v2952 = vld [vmem:[%s430 + $0x648] sm:$0xff]
        %v2953 = vld [vmem:[%s430 + $0x650] sm:$0xff]
        %v2954 = vld [vmem:[%s430 + $0x658] sm:$0xff]
        %v2955 = vld [vmem:[%s430 + $0x660] sm:$0xff]
        %v2956 = vld [vmem:[%s430 + $0x668] sm:$0xff]
        %v2957 = vld [vmem:[%s430 + $0x670] sm:$0xff]
        %v2958 = vld [vmem:[%s430 + $0x678] sm:$0xff]
        %v2959 = vld [vmem:[%s430 + $0x680] sm:$0xff]
        %v2960 = vld [vmem:[%s430 + $0x688] sm:$0xff]
        %v2961 = vld [vmem:[%s430 + $0x690] sm:$0xff]
        %v2962 = vld [vmem:[%s430 + $0x698] sm:$0xff]
        %v2963 = vld [vmem:[%s430 + $0x6a0] sm:$0xff]
        %v2964 = vld [vmem:[%s430 + $0x6a8] sm:$0xff]
        %v2965 = vld [vmem:[%s430 + $0x6b0] sm:$0xff]
        %v2966 = vld [vmem:[%s430 + $0x6b8] sm:$0xff]
        %v2967 = vld [vmem:[%s430 + $0x6c0] sm:$0xff]
        %v2968 = vld [vmem:[%s430 + $0x6c8] sm:$0xff]
        %v2969 = vld [vmem:[%s430 + $0x6d0] sm:$0xff]
        %v2970 = vld [vmem:[%s430 + $0x6d8] sm:$0xff]
        %v2971 = vld [vmem:[%s430 + $0x6e0] sm:$0xff]
        %v2972 = vld [vmem:[%s430 + $0x6e8] sm:$0xff]
        %v2973 = vld [vmem:[%s430 + $0x6f0] sm:$0xff]
        %v2974 = vld [vmem:[%s430 + $0x6f8] sm:$0xff]
        %v2975 = vld [vmem:[%s430 + $0x700] sm:$0xff]
        %v2976 = vld [vmem:[%s430 + $0x708] sm:$0xff]
        %v2977 = vld [vmem:[%s430 + $0x710] sm:$0xff]
        %v2978 = vld [vmem:[%s430 + $0x718] sm:$0xff]
        %v2979 = vld [vmem:[%s430 + $0x720] sm:$0xff]
        %v2980 = vld [vmem:[%s430 + $0x728] sm:$0xff]
        %v2981 = vld [vmem:[%s430 + $0x730] sm:$0xff]
        %v2982 = vld [vmem:[%s430 + $0x738] sm:$0xff]
        %v2983 = vld [vmem:[%s430 + $0x740] sm:$0xff]
        %v2984 = vld [vmem:[%s430 + $0x748] sm:$0xff]
        %v2985 = vld [vmem:[%s430 + $0x750] sm:$0xff]
        %v2986 = vld [vmem:[%s430 + $0x758] sm:$0xff]
        %v2987 = vld [vmem:[%s430 + $0x760] sm:$0xff]
        %v2988 = vld [vmem:[%s430 + $0x768] sm:$0xff]
        %v2989 = vld [vmem:[%s430 + $0x770] sm:$0xff]
        %v2990 = vld [vmem:[%s430 + $0x778] sm:$0xff]
        %v2991 = vld [vmem:[%s430 + $0x780] sm:$0xff]
        %v2992 = vld [vmem:[%s430 + $0x788] sm:$0xff]
        %v2993 = vld [vmem:[%s430 + $0x790] sm:$0xff]
        %v2994 = vld [vmem:[%s430 + $0x798] sm:$0xff]
        %v2995 = vld [vmem:[%s430 + $0x7a0] sm:$0xff]
        %v2996 = vld [vmem:[%s430 + $0x7a8] sm:$0xff]
        %v2997 = vld [vmem:[%s430 + $0x7b0] sm:$0xff]
        %v2998 = vld [vmem:[%s430 + $0x7b8] sm:$0xff]
        %v2999 = vld [vmem:[%s430 + $0x7c0] sm:$0xff]
        %v3000 = vld [vmem:[%s430 + $0x7c8] sm:$0xff]
        %v3001 = vunpack.c.l.s8.bf16 %v2751
        %v3002 = vunpack.c.l.s8.bf16 %v2752
        %v3003 = vunpack.c.l.s8.bf16 %v2753
        %v3004 = vunpack.c.l.s8.bf16 %v2754
        %v3005 = vunpack.c.l.s8.bf16 %v2755
        %v3006 = vunpack.c.l.s8.bf16 %v2756
        %v3007 = vunpack.c.l.s8.bf16 %v2757
        %v3008 = vunpack.c.l.s8.bf16 %v2758
        %v3009 = vunpack.c.l.s8.bf16 %v2759
        %v3010 = vunpack.c.l.s8.bf16 %v2760
        %v3011 = vunpack.c.h.s8.bf16 %v2751
        %v3012 = vunpack.c.h.s8.bf16 %v2752
        %v3013 = vunpack.c.h.s8.bf16 %v2753
        %v3014 = vunpack.c.h.s8.bf16 %v2754
        %v3015 = vunpack.c.h.s8.bf16 %v2755
        %v3016 = vunpack.c.h.s8.bf16 %v2756
        %v3017 = vunpack.c.h.s8.bf16 %v2757
        %v3018 = vunpack.c.h.s8.bf16 %v2758
        %v3019 = vunpack.c.h.s8.bf16 %v2759
        %v3020 = vunpack.c.h.s8.bf16 %v2760
        %v3021 = vunpack.c.l.s8.bf16 %v2761
        %v3022 = vunpack.c.l.s8.bf16 %v2762
        %v3023 = vunpack.c.l.s8.bf16 %v2763
        %v3024 = vunpack.c.l.s8.bf16 %v2764
        %v3025 = vunpack.c.l.s8.bf16 %v2765
        %v3026 = vunpack.c.l.s8.bf16 %v2766
        %v3027 = vunpack.c.l.s8.bf16 %v2767
        %v3028 = vunpack.c.l.s8.bf16 %v2768
        %v3029 = vunpack.c.l.s8.bf16 %v2769
        %v3030 = vunpack.c.l.s8.bf16 %v2770
        %v3031 = vunpack.c.h.s8.bf16 %v2761
        %v3032 = vunpack.c.h.s8.bf16 %v2762
        %v3033 = vunpack.c.h.s8.bf16 %v2763
        %v3034 = vunpack.c.h.s8.bf16 %v2764
        %v3035 = vunpack.c.h.s8.bf16 %v2765
        %v3036 = vunpack.c.h.s8.bf16 %v2766
        %v3037 = vunpack.c.h.s8.bf16 %v2767
        %v3038 = vunpack.c.h.s8.bf16 %v2768
        %v3039 = vunpack.c.h.s8.bf16 %v2769
        %v3040 = vunpack.c.h.s8.bf16 %v2770
        %v3041 = vunpack.c.l.s8.bf16 %v2771
        %v3042 = vunpack.c.l.s8.bf16 %v2772
        %v3043 = vunpack.c.l.s8.bf16 %v2773
        %v3044 = vunpack.c.l.s8.bf16 %v2774
        %v3045 = vunpack.c.l.s8.bf16 %v2775
        %v3046 = vunpack.c.l.s8.bf16 %v2776
        %v3047 = vunpack.c.l.s8.bf16 %v2777
        %v3048 = vunpack.c.l.s8.bf16 %v2778
        %v3049 = vunpack.c.l.s8.bf16 %v2779
        %v3050 = vunpack.c.l.s8.bf16 %v2780
        %v3051 = vunpack.c.h.s8.bf16 %v2771
        %v3052 = vunpack.c.h.s8.bf16 %v2772
        %v3053 = vunpack.c.h.s8.bf16 %v2773
        %v3054 = vunpack.c.h.s8.bf16 %v2774
        %v3055 = vunpack.c.h.s8.bf16 %v2775
        %v3056 = vunpack.c.h.s8.bf16 %v2776
        %v3057 = vunpack.c.h.s8.bf16 %v2777
        %v3058 = vunpack.c.h.s8.bf16 %v2778
        %v3059 = vunpack.c.h.s8.bf16 %v2779
        %v3060 = vunpack.c.h.s8.bf16 %v2780
        %v3061 = vunpack.c.l.s8.bf16 %v2781
        %v3062 = vunpack.c.l.s8.bf16 %v2782
        %v3063 = vunpack.c.l.s8.bf16 %v2783
        %v3064 = vunpack.c.l.s8.bf16 %v2784
        %v3065 = vunpack.c.l.s8.bf16 %v2785
        %v3066 = vunpack.c.l.s8.bf16 %v2786
        %v3067 = vunpack.c.l.s8.bf16 %v2787
        %v3068 = vunpack.c.l.s8.bf16 %v2788
        %v3069 = vunpack.c.l.s8.bf16 %v2789
        %v3070 = vunpack.c.l.s8.bf16 %v2790
        %v3071 = vunpack.c.h.s8.bf16 %v2781
        %v3072 = vunpack.c.h.s8.bf16 %v2782
        %v3073 = vunpack.c.h.s8.bf16 %v2783
        %v3074 = vunpack.c.h.s8.bf16 %v2784
        %v3075 = vunpack.c.h.s8.bf16 %v2785
        %v3076 = vunpack.c.h.s8.bf16 %v2786
        %v3077 = vunpack.c.h.s8.bf16 %v2787
        %v3078 = vunpack.c.h.s8.bf16 %v2788
        %v3079 = vunpack.c.h.s8.bf16 %v2789
        %v3080 = vunpack.c.h.s8.bf16 %v2790
        %v3081 = vunpack.c.l.s8.bf16 %v2791
        %v3082 = vunpack.c.l.s8.bf16 %v2792
        %v3083 = vunpack.c.l.s8.bf16 %v2793
        %v3084 = vunpack.c.l.s8.bf16 %v2794
        %v3085 = vunpack.c.l.s8.bf16 %v2795
        %v3086 = vunpack.c.l.s8.bf16 %v2796
        %v3087 = vunpack.c.l.s8.bf16 %v2797
        %v3088 = vunpack.c.l.s8.bf16 %v2798
        %v3089 = vunpack.c.l.s8.bf16 %v2799
        %v3090 = vunpack.c.l.s8.bf16 %v2800
        %v3091 = vunpack.c.h.s8.bf16 %v2791
        %v3092 = vunpack.c.h.s8.bf16 %v2792
        %v3093 = vunpack.c.h.s8.bf16 %v2793
        %v3094 = vunpack.c.h.s8.bf16 %v2794
        %v3095 = vunpack.c.h.s8.bf16 %v2795
        %v3096 = vunpack.c.h.s8.bf16 %v2796
        %v3097 = vunpack.c.h.s8.bf16 %v2797
        %v3098 = vunpack.c.h.s8.bf16 %v2798
        %v3099 = vunpack.c.h.s8.bf16 %v2799
        %v3100 = vunpack.c.h.s8.bf16 %v2800
        %v3101 = vunpack.c.l.s8.bf16 %v2801
        %v3102 = vunpack.c.l.s8.bf16 %v2802
        %v3103 = vunpack.c.l.s8.bf16 %v2803
        %v3104 = vunpack.c.l.s8.bf16 %v2804
        %v3105 = vunpack.c.l.s8.bf16 %v2805
        %v3106 = vunpack.c.l.s8.bf16 %v2806
        %v3107 = vunpack.c.l.s8.bf16 %v2807
        %v3108 = vunpack.c.l.s8.bf16 %v2808
        %v3109 = vunpack.c.l.s8.bf16 %v2809
        %v3110 = vunpack.c.l.s8.bf16 %v2810
        %v3111 = vunpack.c.h.s8.bf16 %v2801
        %v3112 = vunpack.c.h.s8.bf16 %v2802
        %v3113 = vunpack.c.h.s8.bf16 %v2803
        %v3114 = vunpack.c.h.s8.bf16 %v2804
        %v3115 = vunpack.c.h.s8.bf16 %v2805
        %v3116 = vunpack.c.h.s8.bf16 %v2806
        %v3117 = vunpack.c.h.s8.bf16 %v2807
        %v3118 = vunpack.c.h.s8.bf16 %v2808
        %v3119 = vunpack.c.h.s8.bf16 %v2809
        %v3120 = vunpack.c.h.s8.bf16 %v2810
        %v3121 = vunpack.c.l.s8.bf16 %v2811
        %v3122 = vunpack.c.l.s8.bf16 %v2812
        %v3123 = vunpack.c.l.s8.bf16 %v2813
        %v3124 = vunpack.c.l.s8.bf16 %v2814
        %v3125 = vunpack.c.l.s8.bf16 %v2815
        %v3126 = vunpack.c.l.s8.bf16 %v2816
        %v3127 = vunpack.c.l.s8.bf16 %v2817
        %v3128 = vunpack.c.l.s8.bf16 %v2818
        %v3129 = vunpack.c.l.s8.bf16 %v2819
        %v3130 = vunpack.c.l.s8.bf16 %v2820
        %v3131 = vunpack.c.h.s8.bf16 %v2811
        %v3132 = vunpack.c.h.s8.bf16 %v2812
        %v3133 = vunpack.c.h.s8.bf16 %v2813
        %v3134 = vunpack.c.h.s8.bf16 %v2814
        %v3135 = vunpack.c.h.s8.bf16 %v2815
        %v3136 = vunpack.c.h.s8.bf16 %v2816
        %v3137 = vunpack.c.h.s8.bf16 %v2817
        %v3138 = vunpack.c.h.s8.bf16 %v2818
        %v3139 = vunpack.c.h.s8.bf16 %v2819
        %v3140 = vunpack.c.h.s8.bf16 %v2820
        %v3141 = vunpack.c.l.s8.bf16 %v2821
        %v3142 = vunpack.c.l.s8.bf16 %v2822
        %v3143 = vunpack.c.l.s8.bf16 %v2823
        %v3144 = vunpack.c.l.s8.bf16 %v2824
        %v3145 = vunpack.c.l.s8.bf16 %v2825
        %v3146 = vunpack.c.l.s8.bf16 %v2826
        %v3147 = vunpack.c.l.s8.bf16 %v2827
        %v3148 = vunpack.c.l.s8.bf16 %v2828
        %v3149 = vunpack.c.l.s8.bf16 %v2829
        %v3150 = vunpack.c.l.s8.bf16 %v2830
        %v3151 = vunpack.c.h.s8.bf16 %v2821
        %v3152 = vunpack.c.h.s8.bf16 %v2822
        %v3153 = vunpack.c.h.s8.bf16 %v2823
        %v3154 = vunpack.c.h.s8.bf16 %v2824
        %v3155 = vunpack.c.h.s8.bf16 %v2825
        %v3156 = vunpack.c.h.s8.bf16 %v2826
        %v3157 = vunpack.c.h.s8.bf16 %v2827
        %v3158 = vunpack.c.h.s8.bf16 %v2828
        %v3159 = vunpack.c.h.s8.bf16 %v2829
        %v3160 = vunpack.c.h.s8.bf16 %v2830
        %v3161 = vunpack.c.l.s8.bf16 %v2831
        %v3162 = vunpack.c.l.s8.bf16 %v2832
        %v3163 = vunpack.c.l.s8.bf16 %v2833
        %v3164 = vunpack.c.l.s8.bf16 %v2834
        %v3165 = vunpack.c.l.s8.bf16 %v2835
        %v3166 = vunpack.c.l.s8.bf16 %v2836
        %v3167 = vunpack.c.l.s8.bf16 %v2837
        %v3168 = vunpack.c.l.s8.bf16 %v2838
        %v3169 = vunpack.c.l.s8.bf16 %v2839
        %v3170 = vunpack.c.l.s8.bf16 %v2840
        %v3171 = vunpack.c.h.s8.bf16 %v2831
        %v3172 = vunpack.c.h.s8.bf16 %v2832
        %v3173 = vunpack.c.h.s8.bf16 %v2833
        %v3174 = vunpack.c.h.s8.bf16 %v2834
        %v3175 = vunpack.c.h.s8.bf16 %v2835
        %v3176 = vunpack.c.h.s8.bf16 %v2836
        %v3177 = vunpack.c.h.s8.bf16 %v2837
        %v3178 = vunpack.c.h.s8.bf16 %v2838
        %v3179 = vunpack.c.h.s8.bf16 %v2839
        %v3180 = vunpack.c.h.s8.bf16 %v2840
        %v3181 = vunpack.c.l.s8.bf16 %v2841
        %v3182 = vunpack.c.l.s8.bf16 %v2842
        %v3183 = vunpack.c.l.s8.bf16 %v2843
        %v3184 = vunpack.c.l.s8.bf16 %v2844
        %v3185 = vunpack.c.l.s8.bf16 %v2845
        %v3186 = vunpack.c.l.s8.bf16 %v2846
        %v3187 = vunpack.c.l.s8.bf16 %v2847
        %v3188 = vunpack.c.l.s8.bf16 %v2848
        %v3189 = vunpack.c.l.s8.bf16 %v2849
        %v3190 = vunpack.c.l.s8.bf16 %v2850
        %v3191 = vunpack.c.h.s8.bf16 %v2841
        %v3192 = vunpack.c.h.s8.bf16 %v2842
        %v3193 = vunpack.c.h.s8.bf16 %v2843
        %v3194 = vunpack.c.h.s8.bf16 %v2844
        %v3195 = vunpack.c.h.s8.bf16 %v2845
        %v3196 = vunpack.c.h.s8.bf16 %v2846
        %v3197 = vunpack.c.h.s8.bf16 %v2847
        %v3198 = vunpack.c.h.s8.bf16 %v2848
        %v3199 = vunpack.c.h.s8.bf16 %v2849
        %v3200 = vunpack.c.h.s8.bf16 %v2850
        %v3201 = vunpack.c.l.s8.bf16 %v2851
        %v3202 = vunpack.c.l.s8.bf16 %v2852
        %v3203 = vunpack.c.l.s8.bf16 %v2853
        %v3204 = vunpack.c.l.s8.bf16 %v2854
        %v3205 = vunpack.c.l.s8.bf16 %v2855
        %v3206 = vunpack.c.l.s8.bf16 %v2856
        %v3207 = vunpack.c.l.s8.bf16 %v2857
        %v3208 = vunpack.c.l.s8.bf16 %v2858
        %v3209 = vunpack.c.l.s8.bf16 %v2859
        %v3210 = vunpack.c.l.s8.bf16 %v2860
        %v3211 = vunpack.c.h.s8.bf16 %v2851
        %v3212 = vunpack.c.h.s8.bf16 %v2852
        %v3213 = vunpack.c.h.s8.bf16 %v2853
        %v3214 = vunpack.c.h.s8.bf16 %v2854
        %v3215 = vunpack.c.h.s8.bf16 %v2855
        %v3216 = vunpack.c.h.s8.bf16 %v2856
        %v3217 = vunpack.c.h.s8.bf16 %v2857
        %v3218 = vunpack.c.h.s8.bf16 %v2858
        %v3219 = vunpack.c.h.s8.bf16 %v2859
        %v3220 = vunpack.c.h.s8.bf16 %v2860
        %v3221 = vunpack.c.l.s8.bf16 %v2861
        %v3222 = vunpack.c.l.s8.bf16 %v2862
        %v3223 = vunpack.c.l.s8.bf16 %v2863
        %v3224 = vunpack.c.l.s8.bf16 %v2864
        %v3225 = vunpack.c.l.s8.bf16 %v2865
        %v3226 = vunpack.c.l.s8.bf16 %v2866
        %v3227 = vunpack.c.l.s8.bf16 %v2867
        %v3228 = vunpack.c.l.s8.bf16 %v2868
        %v3229 = vunpack.c.l.s8.bf16 %v2869
        %v3230 = vunpack.c.l.s8.bf16 %v2870
        %v3231 = vunpack.c.h.s8.bf16 %v2861
        %v3232 = vunpack.c.h.s8.bf16 %v2862
        %v3233 = vunpack.c.h.s8.bf16 %v2863
        %v3234 = vunpack.c.h.s8.bf16 %v2864
        %v3235 = vunpack.c.h.s8.bf16 %v2865
        %v3236 = vunpack.c.h.s8.bf16 %v2866
        %v3237 = vunpack.c.h.s8.bf16 %v2867
        %v3238 = vunpack.c.h.s8.bf16 %v2868
        %v3239 = vunpack.c.h.s8.bf16 %v2869
        %v3240 = vunpack.c.h.s8.bf16 %v2870
        %v3241 = vunpack.c.l.s8.bf16 %v2871
        %v3242 = vunpack.c.l.s8.bf16 %v2872
        %v3243 = vunpack.c.l.s8.bf16 %v2873
        %v3244 = vunpack.c.l.s8.bf16 %v2874
        %v3245 = vunpack.c.l.s8.bf16 %v2875
        %v3246 = vunpack.c.l.s8.bf16 %v2876
        %v3247 = vunpack.c.l.s8.bf16 %v2877
        %v3248 = vunpack.c.l.s8.bf16 %v2878
        %v3249 = vunpack.c.l.s8.bf16 %v2879
        %v3250 = vunpack.c.l.s8.bf16 %v2880
        %v3251 = vunpack.c.h.s8.bf16 %v2871
        %v3252 = vunpack.c.h.s8.bf16 %v2872
        %v3253 = vunpack.c.h.s8.bf16 %v2873
        %v3254 = vunpack.c.h.s8.bf16 %v2874
        %v3255 = vunpack.c.h.s8.bf16 %v2875
        %v3256 = vunpack.c.h.s8.bf16 %v2876
        %v3257 = vunpack.c.h.s8.bf16 %v2877
        %v3258 = vunpack.c.h.s8.bf16 %v2878
        %v3259 = vunpack.c.h.s8.bf16 %v2879
        %v3260 = vunpack.c.h.s8.bf16 %v2880
        %v3261 = vunpack.c.l.s8.bf16 %v2881
        %v3262 = vunpack.c.l.s8.bf16 %v2882
        %v3263 = vunpack.c.l.s8.bf16 %v2883
        %v3264 = vunpack.c.l.s8.bf16 %v2884
        %v3265 = vunpack.c.l.s8.bf16 %v2885
        %v3266 = vunpack.c.l.s8.bf16 %v2886
        %v3267 = vunpack.c.l.s8.bf16 %v2887
        %v3268 = vunpack.c.l.s8.bf16 %v2888
        %v3269 = vunpack.c.l.s8.bf16 %v2889
        %v3270 = vunpack.c.l.s8.bf16 %v2890
        %v3271 = vunpack.c.h.s8.bf16 %v2881
        %v3272 = vunpack.c.h.s8.bf16 %v2882
        %v3273 = vunpack.c.h.s8.bf16 %v2883
        %v3274 = vunpack.c.h.s8.bf16 %v2884
        %v3275 = vunpack.c.h.s8.bf16 %v2885
        %v3276 = vunpack.c.h.s8.bf16 %v2886
        %v3277 = vunpack.c.h.s8.bf16 %v2887
        %v3278 = vunpack.c.h.s8.bf16 %v2888
        %v3279 = vunpack.c.h.s8.bf16 %v2889
        %v3280 = vunpack.c.h.s8.bf16 %v2890
        %v3281 = vunpack.c.l.s8.bf16 %v2891
        %v3282 = vunpack.c.l.s8.bf16 %v2892
        %v3283 = vunpack.c.l.s8.bf16 %v2893
        %v3284 = vunpack.c.l.s8.bf16 %v2894
        %v3285 = vunpack.c.l.s8.bf16 %v2895
        %v3286 = vunpack.c.l.s8.bf16 %v2896
        %v3287 = vunpack.c.l.s8.bf16 %v2897
        %v3288 = vunpack.c.l.s8.bf16 %v2898
        %v3289 = vunpack.c.l.s8.bf16 %v2899
        %v3290 = vunpack.c.l.s8.bf16 %v2900
        %v3291 = vunpack.c.h.s8.bf16 %v2891
        %v3292 = vunpack.c.h.s8.bf16 %v2892
        %v3293 = vunpack.c.h.s8.bf16 %v2893
        %v3294 = vunpack.c.h.s8.bf16 %v2894
        %v3295 = vunpack.c.h.s8.bf16 %v2895
        %v3296 = vunpack.c.h.s8.bf16 %v2896
        %v3297 = vunpack.c.h.s8.bf16 %v2897
        %v3298 = vunpack.c.h.s8.bf16 %v2898
        %v3299 = vunpack.c.h.s8.bf16 %v2899
        %v3300 = vunpack.c.h.s8.bf16 %v2900
        %v3301 = vunpack.c.l.s8.bf16 %v2901
        %v3302 = vunpack.c.l.s8.bf16 %v2902
        %v3303 = vunpack.c.l.s8.bf16 %v2903
        %v3304 = vunpack.c.l.s8.bf16 %v2904
        %v3305 = vunpack.c.l.s8.bf16 %v2905
        %v3306 = vunpack.c.l.s8.bf16 %v2906
        %v3307 = vunpack.c.l.s8.bf16 %v2907
        %v3308 = vunpack.c.l.s8.bf16 %v2908
        %v3309 = vunpack.c.l.s8.bf16 %v2909
        %v3310 = vunpack.c.l.s8.bf16 %v2910
        %v3311 = vunpack.c.h.s8.bf16 %v2901
        %v3312 = vunpack.c.h.s8.bf16 %v2902
        %v3313 = vunpack.c.h.s8.bf16 %v2903
        %v3314 = vunpack.c.h.s8.bf16 %v2904
        %v3315 = vunpack.c.h.s8.bf16 %v2905
        %v3316 = vunpack.c.h.s8.bf16 %v2906
        %v3317 = vunpack.c.h.s8.bf16 %v2907
        %v3318 = vunpack.c.h.s8.bf16 %v2908
        %v3319 = vunpack.c.h.s8.bf16 %v2909
        %v3320 = vunpack.c.h.s8.bf16 %v2910
        %v3321 = vunpack.c.l.s8.bf16 %v2911
        %v3322 = vunpack.c.l.s8.bf16 %v2912
        %v3323 = vunpack.c.l.s8.bf16 %v2913
        %v3324 = vunpack.c.l.s8.bf16 %v2914
        %v3325 = vunpack.c.l.s8.bf16 %v2915
        %v3326 = vunpack.c.l.s8.bf16 %v2916
        %v3327 = vunpack.c.l.s8.bf16 %v2917
        %v3328 = vunpack.c.l.s8.bf16 %v2918
        %v3329 = vunpack.c.l.s8.bf16 %v2919
        %v3330 = vunpack.c.l.s8.bf16 %v2920
        %v3331 = vunpack.c.h.s8.bf16 %v2911
        %v3332 = vunpack.c.h.s8.bf16 %v2912
        %v3333 = vunpack.c.h.s8.bf16 %v2913
        %v3334 = vunpack.c.h.s8.bf16 %v2914
        %v3335 = vunpack.c.h.s8.bf16 %v2915
        %v3336 = vunpack.c.h.s8.bf16 %v2916
        %v3337 = vunpack.c.h.s8.bf16 %v2917
        %v3338 = vunpack.c.h.s8.bf16 %v2918
        %v3339 = vunpack.c.h.s8.bf16 %v2919
        %v3340 = vunpack.c.h.s8.bf16 %v2920
        %v3341 = vunpack.c.l.s8.bf16 %v2921
        %v3342 = vunpack.c.l.s8.bf16 %v2922
        %v3343 = vunpack.c.l.s8.bf16 %v2923
        %v3344 = vunpack.c.l.s8.bf16 %v2924
        %v3345 = vunpack.c.l.s8.bf16 %v2925
        %v3346 = vunpack.c.l.s8.bf16 %v2926
        %v3347 = vunpack.c.l.s8.bf16 %v2927
        %v3348 = vunpack.c.l.s8.bf16 %v2928
        %v3349 = vunpack.c.l.s8.bf16 %v2929
        %v3350 = vunpack.c.l.s8.bf16 %v2930
        %v3351 = vunpack.c.h.s8.bf16 %v2921
        %v3352 = vunpack.c.h.s8.bf16 %v2922
        %v3353 = vunpack.c.h.s8.bf16 %v2923
        %v3354 = vunpack.c.h.s8.bf16 %v2924
        %v3355 = vunpack.c.h.s8.bf16 %v2925
        %v3356 = vunpack.c.h.s8.bf16 %v2926
        %v3357 = vunpack.c.h.s8.bf16 %v2927
        %v3358 = vunpack.c.h.s8.bf16 %v2928
        %v3359 = vunpack.c.h.s8.bf16 %v2929
        %v3360 = vunpack.c.h.s8.bf16 %v2930
        %v3361 = vunpack.c.l.s8.bf16 %v2931
        %v3362 = vunpack.c.l.s8.bf16 %v2932
        %v3363 = vunpack.c.l.s8.bf16 %v2933
        %v3364 = vunpack.c.l.s8.bf16 %v2934
        %v3365 = vunpack.c.l.s8.bf16 %v2935
        %v3366 = vunpack.c.l.s8.bf16 %v2936
        %v3367 = vunpack.c.l.s8.bf16 %v2937
        %v3368 = vunpack.c.l.s8.bf16 %v2938
        %v3369 = vunpack.c.l.s8.bf16 %v2939
        %v3370 = vunpack.c.l.s8.bf16 %v2940
        %v3371 = vunpack.c.h.s8.bf16 %v2931
        %v3372 = vunpack.c.h.s8.bf16 %v2932
        %v3373 = vunpack.c.h.s8.bf16 %v2933
        %v3374 = vunpack.c.h.s8.bf16 %v2934
        %v3375 = vunpack.c.h.s8.bf16 %v2935
        %v3376 = vunpack.c.h.s8.bf16 %v2936
        %v3377 = vunpack.c.h.s8.bf16 %v2937
        %v3378 = vunpack.c.h.s8.bf16 %v2938
        %v3379 = vunpack.c.h.s8.bf16 %v2939
        %v3380 = vunpack.c.h.s8.bf16 %v2940
        %v3381 = vunpack.c.l.s8.bf16 %v2941
        %v3382 = vunpack.c.l.s8.bf16 %v2942
        %v3383 = vunpack.c.l.s8.bf16 %v2943
        %v3384 = vunpack.c.l.s8.bf16 %v2944
        %v3385 = vunpack.c.l.s8.bf16 %v2945
        %v3386 = vunpack.c.l.s8.bf16 %v2946
        %v3387 = vunpack.c.l.s8.bf16 %v2947
        %v3388 = vunpack.c.l.s8.bf16 %v2948
        %v3389 = vunpack.c.l.s8.bf16 %v2949
        %v3390 = vunpack.c.l.s8.bf16 %v2950
        %v3391 = vunpack.c.h.s8.bf16 %v2941
        %v3392 = vunpack.c.h.s8.bf16 %v2942
        %v3393 = vunpack.c.h.s8.bf16 %v2943
        %v3394 = vunpack.c.h.s8.bf16 %v2944
        %v3395 = vunpack.c.h.s8.bf16 %v2945
        %v3396 = vunpack.c.h.s8.bf16 %v2946
        %v3397 = vunpack.c.h.s8.bf16 %v2947
        %v3398 = vunpack.c.h.s8.bf16 %v2948
        %v3399 = vunpack.c.h.s8.bf16 %v2949
        %v3400 = vunpack.c.h.s8.bf16 %v2950
        %v3401 = vunpack.c.l.s8.bf16 %v2951
        %v3402 = vunpack.c.l.s8.bf16 %v2952
        %v3403 = vunpack.c.l.s8.bf16 %v2953
        %v3404 = vunpack.c.l.s8.bf16 %v2954
        %v3405 = vunpack.c.l.s8.bf16 %v2955
        %v3406 = vunpack.c.l.s8.bf16 %v2956
        %v3407 = vunpack.c.l.s8.bf16 %v2957
        %v3408 = vunpack.c.l.s8.bf16 %v2958
        %v3409 = vunpack.c.l.s8.bf16 %v2959
        %v3410 = vunpack.c.l.s8.bf16 %v2960
        %v3411 = vunpack.c.h.s8.bf16 %v2951
        %v3412 = vunpack.c.h.s8.bf16 %v2952
        %v3413 = vunpack.c.h.s8.bf16 %v2953
        %v3414 = vunpack.c.h.s8.bf16 %v2954
        %v3415 = vunpack.c.h.s8.bf16 %v2955
        %v3416 = vunpack.c.h.s8.bf16 %v2956
        %v3417 = vunpack.c.h.s8.bf16 %v2957
        %v3418 = vunpack.c.h.s8.bf16 %v2958
        %v3419 = vunpack.c.h.s8.bf16 %v2959
        %v3420 = vunpack.c.h.s8.bf16 %v2960
        %v3421 = vunpack.c.l.s8.bf16 %v2961
        %v3422 = vunpack.c.l.s8.bf16 %v2962
        %v3423 = vunpack.c.l.s8.bf16 %v2963
        %v3424 = vunpack.c.l.s8.bf16 %v2964
        %v3425 = vunpack.c.l.s8.bf16 %v2965
        %v3426 = vunpack.c.l.s8.bf16 %v2966
        %v3427 = vunpack.c.l.s8.bf16 %v2967
        %v3428 = vunpack.c.l.s8.bf16 %v2968
        %v3429 = vunpack.c.l.s8.bf16 %v2969
        %v3430 = vunpack.c.l.s8.bf16 %v2970
        %v3431 = vunpack.c.h.s8.bf16 %v2961
        %v3432 = vunpack.c.h.s8.bf16 %v2962
        %v3433 = vunpack.c.h.s8.bf16 %v2963
        %v3434 = vunpack.c.h.s8.bf16 %v2964
        %v3435 = vunpack.c.h.s8.bf16 %v2965
        %v3436 = vunpack.c.h.s8.bf16 %v2966
        %v3437 = vunpack.c.h.s8.bf16 %v2967
        %v3438 = vunpack.c.h.s8.bf16 %v2968
        %v3439 = vunpack.c.h.s8.bf16 %v2969
        %v3440 = vunpack.c.h.s8.bf16 %v2970
        %v3441 = vunpack.c.l.s8.bf16 %v2971
        %v3442 = vunpack.c.l.s8.bf16 %v2972
        %v3443 = vunpack.c.l.s8.bf16 %v2973
        %v3444 = vunpack.c.l.s8.bf16 %v2974
        %v3445 = vunpack.c.l.s8.bf16 %v2975
        %v3446 = vunpack.c.l.s8.bf16 %v2976
        %v3447 = vunpack.c.l.s8.bf16 %v2977
        %v3448 = vunpack.c.l.s8.bf16 %v2978
        %v3449 = vunpack.c.l.s8.bf16 %v2979
        %v3450 = vunpack.c.l.s8.bf16 %v2980
        %v3451 = vunpack.c.h.s8.bf16 %v2971
        %v3452 = vunpack.c.h.s8.bf16 %v2972
        %v3453 = vunpack.c.h.s8.bf16 %v2973
        %v3454 = vunpack.c.h.s8.bf16 %v2974
        %v3455 = vunpack.c.h.s8.bf16 %v2975
        %v3456 = vunpack.c.h.s8.bf16 %v2976
        %v3457 = vunpack.c.h.s8.bf16 %v2977
        %v3458 = vunpack.c.h.s8.bf16 %v2978
        %v3459 = vunpack.c.h.s8.bf16 %v2979
        %v3460 = vunpack.c.h.s8.bf16 %v2980
        %v3461 = vunpack.c.l.s8.bf16 %v2981
        %v3462 = vunpack.c.l.s8.bf16 %v2982
        %v3463 = vunpack.c.l.s8.bf16 %v2983
        %v3464 = vunpack.c.l.s8.bf16 %v2984
        %v3465 = vunpack.c.l.s8.bf16 %v2985
        %v3466 = vunpack.c.l.s8.bf16 %v2986
        %v3467 = vunpack.c.l.s8.bf16 %v2987
        %v3468 = vunpack.c.l.s8.bf16 %v2988
        %v3469 = vunpack.c.l.s8.bf16 %v2989
        %v3470 = vunpack.c.l.s8.bf16 %v2990
        %v3471 = vunpack.c.h.s8.bf16 %v2981
        %v3472 = vunpack.c.h.s8.bf16 %v2982
        %v3473 = vunpack.c.h.s8.bf16 %v2983
        %v3474 = vunpack.c.h.s8.bf16 %v2984
        %v3475 = vunpack.c.h.s8.bf16 %v2985
        %v3476 = vunpack.c.h.s8.bf16 %v2986
        %v3477 = vunpack.c.h.s8.bf16 %v2987
        %v3478 = vunpack.c.h.s8.bf16 %v2988
        %v3479 = vunpack.c.h.s8.bf16 %v2989
        %v3480 = vunpack.c.h.s8.bf16 %v2990
        %v3481 = vunpack.c.l.s8.bf16 %v2991
        %v3482 = vunpack.c.l.s8.bf16 %v2992
        %v3483 = vunpack.c.l.s8.bf16 %v2993
        %v3484 = vunpack.c.l.s8.bf16 %v2994
        %v3485 = vunpack.c.l.s8.bf16 %v2995
        %v3486 = vunpack.c.l.s8.bf16 %v2996
        %v3487 = vunpack.c.l.s8.bf16 %v2997
        %v3488 = vunpack.c.l.s8.bf16 %v2998
        %v3489 = vunpack.c.l.s8.bf16 %v2999
        %v3490 = vunpack.c.l.s8.bf16 %v3000
        %v3491 = vunpack.c.h.s8.bf16 %v2991
        %v3492 = vunpack.c.h.s8.bf16 %v2992
        %v3493 = vunpack.c.h.s8.bf16 %v2993
        %v3494 = vunpack.c.h.s8.bf16 %v2994
        %v3495 = vunpack.c.h.s8.bf16 %v2995
        %v3496 = vunpack.c.h.s8.bf16 %v2996
        %v3497 = vunpack.c.h.s8.bf16 %v2997
        %v3498 = vunpack.c.h.s8.bf16 %v2998
        %v3499 = vunpack.c.h.s8.bf16 %v2999
        %v3500 = vunpack.c.h.s8.bf16 %v3000
        %v3501 = vld [vmem:[#allocation3] sm:$0xff]
        %v3502 = vld [vmem:[#allocation3 + $0x8] sm:$0xff]
        %v3503 = vld [vmem:[#allocation3 + $0x10] sm:$0xff]
        %v3504 = vld [vmem:[#allocation3 + $0x18] sm:$0xff]
        %v3505 = vld [vmem:[#allocation3 + $0x20] sm:$0xff]
        %v3506 = vld [vmem:[#allocation3 + $0x28] sm:$0xff]
        %v3507 = vld [vmem:[#allocation3 + $0x30] sm:$0xff]
        %v3508 = vld [vmem:[#allocation3 + $0x38] sm:$0xff]
        %v3509 = vld [vmem:[#allocation3 + $0x40] sm:$0xff]
        %v3510 = vld [vmem:[#allocation3 + $0x48] sm:$0xff]
        %vm3511 = vcmask 261120
        %v3513 = vsel %vm3511, %v2750, 0
        %3515 = vmatprep.subr.bf16.mxu0 %v3072
        %3516 = vmatpush1.bf16.msra.mxu0 %v3071
        %3517 = vmatprep.subr.bf16.mxu0 %v3062
        %3518 = vmatpush1.bf16.msra.mxu0 %v3061
        %3519 = vmatprep.subr.bf16.mxu0 %v3052
        %3520 = vmatpush1.bf16.msra.mxu0 %v3051
        %3521 = vmatprep.subr.bf16.mxu0 %v3042
        %3522 = vmatpush1.bf16.msra.mxu0 %v3041
        %3523 = vmatprep.subr.bf16.mxu0 %v3032
        %3524 = vmatpush1.bf16.msra.mxu0 %v3031
        %3525 = vmatprep.subr.bf16.mxu0 %v3022
        %3526 = vmatpush1.bf16.msra.mxu0 %v3021
        %3527 = vmatprep.subr.bf16.mxu0 %v3012
        %3528 = vmatpush1.bf16.msra.mxu0 %v3011
        %3529 = vmatprep.subr.bf16.mxu0 %v3002
        %3530 = vmatpush1.bf16.msra.mxu0 %v3001
        %3531 = vmatprep.subr.bf16.mxu0 %v3152
        %3532 = vmatpush2.bf16.msra.mxu0 %v3151
        %3533 = vmatprep.subr.bf16.mxu0 %v3142
        %3534 = vmatpush2.bf16.msra.mxu0 %v3141
        %3535 = vmatprep.subr.bf16.mxu0 %v3132
        %3536 = vmatpush2.bf16.msra.mxu0 %v3131
        %3537 = vmatprep.subr.bf16.mxu0 %v3122
        %3538 = vmatpush2.bf16.msra.mxu0 %v3121
        %3539 = vmatprep.subr.bf16.mxu0 %v3112
        %3540 = vmatpush2.bf16.msra.mxu0 %v3111
        %3541 = vmatprep.subr.bf16.mxu0 %v3102
        %3542 = vmatpush2.bf16.msra.mxu0 %v3101
        %3543 = vmatprep.subr.bf16.mxu0 %v3092
        %3544 = vmatpush2.bf16.msra.mxu0 %v3091
        %3545 = vmatprep.subr.bf16.mxu0 %v3082
        %3546 = vmatpush2.bf16.msra.mxu0 %v3081
        %3547 = vmatprep.mubr.bf16.mxu0 %v2745
        %3548 = vmatmul.mubr.bf16.gmra.mxu0 %v2744
        %v3549 = vpop.f32.mrf.mxu0
        %v3550 = vadd.f32 0.0, %v3549
        %v3551 = vpop.f32.mrf.mxu0
        %v3552 = vadd.f32 0.0, %v3551
        %v3553 = vpop.f32.mrf.mxu0
        %v3554 = vpop.f32.mrf.mxu0
        %3555 = vdwg.mxu0
        %3556 = vmatprep.subr.bf16.mxu0 %v3232
        %3557 = vmatpush1.bf16.msra.mxu0 %v3231
        %3558 = vmatprep.subr.bf16.mxu0 %v3222
        %3559 = vmatpush1.bf16.msra.mxu0 %v3221
        %3560 = vmatprep.subr.bf16.mxu0 %v3212
        %3561 = vmatpush1.bf16.msra.mxu0 %v3211
        %3562 = vmatprep.subr.bf16.mxu0 %v3202
        %3563 = vmatpush1.bf16.msra.mxu0 %v3201
        %3564 = vmatprep.subr.bf16.mxu0 %v3192
        %3565 = vmatpush1.bf16.msra.mxu0 %v3191
        %3566 = vmatprep.subr.bf16.mxu0 %v3182
        %3567 = vmatpush1.bf16.msra.mxu0 %v3181
        %3568 = vmatprep.subr.bf16.mxu0 %v3172
        %3569 = vmatpush1.bf16.msra.mxu0 %v3171
        %3570 = vmatprep.subr.bf16.mxu0 %v3162
        %3571 = vmatpush1.bf16.msra.mxu0 %v3161
        %3572 = vmatprep.subr.bf16.mxu0 %v3312
        %3573 = vmatpush2.bf16.msra.mxu0 %v3311
        %3574 = vmatprep.subr.bf16.mxu0 %v3302
        %3575 = vmatpush2.bf16.msra.mxu0 %v3301
        %3576 = vmatprep.subr.bf16.mxu0 %v3292
        %3577 = vmatpush2.bf16.msra.mxu0 %v3291
        %3578 = vmatprep.subr.bf16.mxu0 %v3282
        %3579 = vmatpush2.bf16.msra.mxu0 %v3281
        %3580 = vmatprep.subr.bf16.mxu0 %v3272
        %3581 = vmatpush2.bf16.msra.mxu0 %v3271
        %3582 = vmatprep.subr.bf16.mxu0 %v3262
        %3583 = vmatpush2.bf16.msra.mxu0 %v3261
        %3584 = vmatprep.subr.bf16.mxu0 %v3252
        %3585 = vmatpush2.bf16.msra.mxu0 %v3251
        %3586 = vmatprep.subr.bf16.mxu0 %v3242
        %3587 = vmatpush2.bf16.msra.mxu0 %v3241
        %3588 = vmatprep.mubr.bf16.mxu0 %v2747
        %3589 = vmatmul.mubr.bf16.gmra.mxu0 %v2746
        %v3590 = vpop.f32.mrf.mxu0
        %v3591 = vadd.f32 %v3550, %v3590
        %v3592 = vpop.f32.mrf.mxu0
        %v3593 = vadd.f32 %v3552, %v3592
        %v3594 = vpop.f32.mrf.mxu0
        %v3595 = vpop.f32.mrf.mxu0
        %3596 = vdwg.mxu0
        %3597 = vmatprep.subr.bf16.mxu0 %v3392
        %3598 = vmatpush1.bf16.msra.mxu0 %v3391
        %3599 = vmatprep.subr.bf16.mxu0 %v3382
        %3600 = vmatpush1.bf16.msra.mxu0 %v3381
        %3601 = vmatprep.subr.bf16.mxu0 %v3372
        %3602 = vmatpush1.bf16.msra.mxu0 %v3371
        %3603 = vmatprep.subr.bf16.mxu0 %v3362
        %3604 = vmatpush1.bf16.msra.mxu0 %v3361
        %3605 = vmatprep.subr.bf16.mxu0 %v3352
        %3606 = vmatpush1.bf16.msra.mxu0 %v3351
        %3607 = vmatprep.subr.bf16.mxu0 %v3342
        %3608 = vmatpush1.bf16.msra.mxu0 %v3341
        %3609 = vmatprep.subr.bf16.mxu0 %v3332
        %3610 = vmatpush1.bf16.msra.mxu0 %v3331
        %3611 = vmatprep.subr.bf16.mxu0 %v3322
        %3612 = vmatpush1.bf16.msra.mxu0 %v3321
        %3613 = vmatprep.subr.bf16.mxu0 %v3472
        %3614 = vmatpush2.bf16.msra.mxu0 %v3471
        %3615 = vmatprep.subr.bf16.mxu0 %v3462
        %3616 = vmatpush2.bf16.msra.mxu0 %v3461
        %3617 = vmatprep.subr.bf16.mxu0 %v3452
        %3618 = vmatpush2.bf16.msra.mxu0 %v3451
        %3619 = vmatprep.subr.bf16.mxu0 %v3442
        %3620 = vmatpush2.bf16.msra.mxu0 %v3441
        %3621 = vmatprep.subr.bf16.mxu0 %v3432
        %3622 = vmatpush2.bf16.msra.mxu0 %v3431
        %3623 = vmatprep.subr.bf16.mxu0 %v3422
        %3624 = vmatpush2.bf16.msra.mxu0 %v3421
        %3625 = vmatprep.subr.bf16.mxu0 %v3412
        %3626 = vmatpush2.bf16.msra.mxu0 %v3411
        %3627 = vmatprep.subr.bf16.mxu0 %v3402
        %3628 = vmatpush2.bf16.msra.mxu0 %v3401
        %3629 = vmatprep.mubr.bf16.mxu0 %v2749
        %3630 = vmatmul.mubr.bf16.gmra.mxu0 %v2748
        %v3631 = vpop.f32.mrf.mxu0
        %v3632 = vadd.f32 %v3591, %v3631
        %v3633 = vpop.f32.mrf.mxu0
        %v3634 = vadd.f32 %v3593, %v3633
        %v3635 = vpop.f32.mrf.mxu0
        %v3636 = vpop.f32.mrf.mxu0
        %3637 = vdwg.mxu0
        %3638 = vmatprep.subr.bf16.mxu0 0
        %3639 = vmatpush1.bf16.msra.mxu0 0
        %3640 = vmatprep.subr.bf16.mxu0 0
        %3641 = vmatpush1.bf16.msra.mxu0 0
        %3642 = vmatprep.subr.bf16.mxu0 0
        %3643 = vmatpush1.bf16.msra.mxu0 0
        %3644 = vmatprep.subr.bf16.mxu0 0
        %3645 = vmatpush1.bf16.msra.mxu0 0
        %3646 = vmatprep.subr.bf16.mxu0 0
        %3647 = vmatpush1.bf16.msra.mxu0 0
        %3648 = vmatprep.subr.bf16.mxu0 0
        %3649 = vmatpush1.bf16.msra.mxu0 0
        %3650 = vmatprep.subr.bf16.mxu0 %v3492
        %3651 = vmatpush1.bf16.msra.mxu0 %v3491
        %3652 = vmatprep.subr.bf16.mxu0 %v3482
        %3653 = vmatpush1.bf16.msra.mxu0 %v3481
        %3654 = vmatprep.subr.bf16.mxu0 0
        %3655 = vmatpush2.bf16.msra.mxu0 0
        %3656 = vmatprep.subr.bf16.mxu0 0
        %3657 = vmatpush2.bf16.msra.mxu0 0
        %3658 = vmatprep.subr.bf16.mxu0 0
        %3659 = vmatpush2.bf16.msra.mxu0 0
        %3660 = vmatprep.subr.bf16.mxu0 0
        %3661 = vmatpush2.bf16.msra.mxu0 0
        %3662 = vmatprep.subr.bf16.mxu0 0
        %3663 = vmatpush2.bf16.msra.mxu0 0
        %3664 = vmatprep.subr.bf16.mxu0 0
        %3665 = vmatpush2.bf16.msra.mxu0 0
        %3666 = vmatprep.subr.bf16.mxu0 0
        %3667 = vmatpush2.bf16.msra.mxu0 0
        %3668 = vmatprep.subr.bf16.mxu0 0
        %3669 = vmatpush2.bf16.msra.mxu0 0
        %3670 = vmatprep.mubr.bf16.mxu0 0
        %3671 = vmatmul.mubr.bf16.gmra.mxu0 %v3513
        %v3672 = vpop.f32.mrf.mxu0
        %v3673 = vadd.f32 %v3632, %v3672
        %v3674 = vpop.f32.mrf.mxu0
        %v3675 = vadd.f32 %v3634, %v3674
        %v3676 = vpop.f32.mrf.mxu0
        %v3677 = vpop.f32.mrf.mxu0
        %3678 = vdwg.mxu0
        %3679 = vmatprep.subr.bf16.mxu0 %v3074
        %3680 = vmatpush1.bf16.msra.mxu0 %v3073
        %3681 = vmatprep.subr.bf16.mxu0 %v3064
        %3682 = vmatpush1.bf16.msra.mxu0 %v3063
        %3683 = vmatprep.subr.bf16.mxu0 %v3054
        %3684 = vmatpush1.bf16.msra.mxu0 %v3053
        %3685 = vmatprep.subr.bf16.mxu0 %v3044
        %3686 = vmatpush1.bf16.msra.mxu0 %v3043
        %3687 = vmatprep.subr.bf16.mxu0 %v3034
        %3688 = vmatpush1.bf16.msra.mxu0 %v3033
        %3689 = vmatprep.subr.bf16.mxu0 %v3024
        %3690 = vmatpush1.bf16.msra.mxu0 %v3023
        %3691 = vmatprep.subr.bf16.mxu0 %v3014
        %3692 = vmatpush1.bf16.msra.mxu0 %v3013
        %3693 = vmatprep.subr.bf16.mxu0 %v3004
        %3694 = vmatpush1.bf16.msra.mxu0 %v3003
        %3695 = vmatprep.subr.bf16.mxu0 %v3154
        %3696 = vmatpush2.bf16.msra.mxu0 %v3153
        %3697 = vmatprep.subr.bf16.mxu0 %v3144
        %3698 = vmatpush2.bf16.msra.mxu0 %v3143
        %3699 = vmatprep.subr.bf16.mxu0 %v3134
        %3700 = vmatpush2.bf16.msra.mxu0 %v3133
        %3701 = vmatprep.subr.bf16.mxu0 %v3124
        %3702 = vmatpush2.bf16.msra.mxu0 %v3123
        %3703 = vmatprep.subr.bf16.mxu0 %v3114
        %3704 = vmatpush2.bf16.msra.mxu0 %v3113
        %3705 = vmatprep.subr.bf16.mxu0 %v3104
        %3706 = vmatpush2.bf16.msra.mxu0 %v3103
        %3707 = vmatprep.subr.bf16.mxu0 %v3094
        %3708 = vmatpush2.bf16.msra.mxu0 %v3093
        %3709 = vmatprep.subr.bf16.mxu0 %v3084
        %3710 = vmatpush2.bf16.msra.mxu0 %v3083
        %3711 = vmatprep.mubr.bf16.mxu0 %v2745
        %3712 = vmatmul.mubr.bf16.gmra.mxu0 %v2744
        %v3713 = vpop.f32.mrf.mxu0
        %v3714 = vadd.f32 0.0, %v3713
        %v3715 = vpop.f32.mrf.mxu0
        %v3716 = vadd.f32 0.0, %v3715
        %v3717 = vpop.f32.mrf.mxu0
        %v3718 = vpop.f32.mrf.mxu0
        %3719 = vdwg.mxu0
        %3720 = vmatprep.subr.bf16.mxu0 %v3234
        %3721 = vmatpush1.bf16.msra.mxu0 %v3233
        %3722 = vmatprep.subr.bf16.mxu0 %v3224
        %3723 = vmatpush1.bf16.msra.mxu0 %v3223
        %3724 = vmatprep.subr.bf16.mxu0 %v3214
        %3725 = vmatpush1.bf16.msra.mxu0 %v3213
        %3726 = vmatprep.subr.bf16.mxu0 %v3204
        %3727 = vmatpush1.bf16.msra.mxu0 %v3203
        %3728 = vmatprep.subr.bf16.mxu0 %v3194
        %3729 = vmatpush1.bf16.msra.mxu0 %v3193
        %3730 = vmatprep.subr.bf16.mxu0 %v3184
        %3731 = vmatpush1.bf16.msra.mxu0 %v3183
        %3732 = vmatprep.subr.bf16.mxu0 %v3174
        %3733 = vmatpush1.bf16.msra.mxu0 %v3173
        %3734 = vmatprep.subr.bf16.mxu0 %v3164
        %3735 = vmatpush1.bf16.msra.mxu0 %v3163
        %3736 = vmatprep.subr.bf16.mxu0 %v3314
        %3737 = vmatpush2.bf16.msra.mxu0 %v3313
        %3738 = vmatprep.subr.bf16.mxu0 %v3304
        %3739 = vmatpush2.bf16.msra.mxu0 %v3303
        %3740 = vmatprep.subr.bf16.mxu0 %v3294
        %3741 = vmatpush2.bf16.msra.mxu0 %v3293
        %3742 = vmatprep.subr.bf16.mxu0 %v3284
        %3743 = vmatpush2.bf16.msra.mxu0 %v3283
        %3744 = vmatprep.subr.bf16.mxu0 %v3274
        %3745 = vmatpush2.bf16.msra.mxu0 %v3273
        %3746 = vmatprep.subr.bf16.mxu0 %v3264
        %3747 = vmatpush2.bf16.msra.mxu0 %v3263
        %3748 = vmatprep.subr.bf16.mxu0 %v3254
        %3749 = vmatpush2.bf16.msra.mxu0 %v3253
        %3750 = vmatprep.subr.bf16.mxu0 %v3244
        %3751 = vmatpush2.bf16.msra.mxu0 %v3243
        %3752 = vmatprep.mubr.bf16.mxu0 %v2747
        %3753 = vmatmul.mubr.bf16.gmra.mxu0 %v2746
        %v3754 = vpop.f32.mrf.mxu0
        %v3755 = vadd.f32 %v3714, %v3754
        %v3756 = vpop.f32.mrf.mxu0
        %v3757 = vadd.f32 %v3716, %v3756
        %v3758 = vpop.f32.mrf.mxu0
        %v3759 = vpop.f32.mrf.mxu0
        %3760 = vdwg.mxu0
        %3761 = vmatprep.subr.bf16.mxu0 %v3394
        %3762 = vmatpush1.bf16.msra.mxu0 %v3393
        %3763 = vmatprep.subr.bf16.mxu0 %v3384
        %3764 = vmatpush1.bf16.msra.mxu0 %v3383
        %3765 = vmatprep.subr.bf16.mxu0 %v3374
        %3766 = vmatpush1.bf16.msra.mxu0 %v3373
        %3767 = vmatprep.subr.bf16.mxu0 %v3364
        %3768 = vmatpush1.bf16.msra.mxu0 %v3363
        %3769 = vmatprep.subr.bf16.mxu0 %v3354
        %3770 = vmatpush1.bf16.msra.mxu0 %v3353
        %3771 = vmatprep.subr.bf16.mxu0 %v3344
        %3772 = vmatpush1.bf16.msra.mxu0 %v3343
        %3773 = vmatprep.subr.bf16.mxu0 %v3334
        %3774 = vmatpush1.bf16.msra.mxu0 %v3333
        %3775 = vmatprep.subr.bf16.mxu0 %v3324
        %3776 = vmatpush1.bf16.msra.mxu0 %v3323
        %3777 = vmatprep.subr.bf16.mxu0 %v3474
        %3778 = vmatpush2.bf16.msra.mxu0 %v3473
        %3779 = vmatprep.subr.bf16.mxu0 %v3464
        %3780 = vmatpush2.bf16.msra.mxu0 %v3463
        %3781 = vmatprep.subr.bf16.mxu0 %v3454
        %3782 = vmatpush2.bf16.msra.mxu0 %v3453
        %3783 = vmatprep.subr.bf16.mxu0 %v3444
        %3784 = vmatpush2.bf16.msra.mxu0 %v3443
        %3785 = vmatprep.subr.bf16.mxu0 %v3434
        %3786 = vmatpush2.bf16.msra.mxu0 %v3433
        %3787 = vmatprep.subr.bf16.mxu0 %v3424
        %3788 = vmatpush2.bf16.msra.mxu0 %v3423
        %3789 = vmatprep.subr.bf16.mxu0 %v3414
        %3790 = vmatpush2.bf16.msra.mxu0 %v3413
        %3791 = vmatprep.subr.bf16.mxu0 %v3404
        %3792 = vmatpush2.bf16.msra.mxu0 %v3403
        %3793 = vmatprep.mubr.bf16.mxu0 %v2749
        %3794 = vmatmul.mubr.bf16.gmra.mxu0 %v2748
        %v3795 = vpop.f32.mrf.mxu0
        %v3796 = vadd.f32 %v3755, %v3795
        %v3797 = vpop.f32.mrf.mxu0
        %v3798 = vadd.f32 %v3757, %v3797
        %v3799 = vpop.f32.mrf.mxu0
        %v3800 = vpop.f32.mrf.mxu0
        %3801 = vdwg.mxu0
        %3802 = vmatprep.subr.bf16.mxu0 0
        %3803 = vmatpush1.bf16.msra.mxu0 0
        %3804 = vmatprep.subr.bf16.mxu0 0
        %3805 = vmatpush1.bf16.msra.mxu0 0
        %3806 = vmatprep.subr.bf16.mxu0 0
        %3807 = vmatpush1.bf16.msra.mxu0 0
        %3808 = vmatprep.subr.bf16.mxu0 0
        %3809 = vmatpush1.bf16.msra.mxu0 0
        %3810 = vmatprep.subr.bf16.mxu0 0
        %3811 = vmatpush1.bf16.msra.mxu0 0
        %3812 = vmatprep.subr.bf16.mxu0 0
        %3813 = vmatpush1.bf16.msra.mxu0 0
        %3814 = vmatprep.subr.bf16.mxu0 %v3494
        %3815 = vmatpush1.bf16.msra.mxu0 %v3493
        %3816 = vmatprep.subr.bf16.mxu0 %v3484
        %3817 = vmatpush1.bf16.msra.mxu0 %v3483
        %3818 = vmatprep.subr.bf16.mxu0 0
        %3819 = vmatpush2.bf16.msra.mxu0 0
        %3820 = vmatprep.subr.bf16.mxu0 0
        %3821 = vmatpush2.bf16.msra.mxu0 0
        %3822 = vmatprep.subr.bf16.mxu0 0
        %3823 = vmatpush2.bf16.msra.mxu0 0
        %3824 = vmatprep.subr.bf16.mxu0 0
        %3825 = vmatpush2.bf16.msra.mxu0 0
        %3826 = vmatprep.subr.bf16.mxu0 0
        %3827 = vmatpush2.bf16.msra.mxu0 0
        %3828 = vmatprep.subr.bf16.mxu0 0
        %3829 = vmatpush2.bf16.msra.mxu0 0
        %3830 = vmatprep.subr.bf16.mxu0 0
        %3831 = vmatpush2.bf16.msra.mxu0 0
        %3832 = vmatprep.subr.bf16.mxu0 0
        %3833 = vmatpush2.bf16.msra.mxu0 0
        %3834 = vmatprep.mubr.bf16.mxu0 0
        %3835 = vmatmul.mubr.bf16.gmra.mxu0 %v3513
        %v3836 = vpop.f32.mrf.mxu0
        %v3837 = vadd.f32 %v3796, %v3836
        %v3838 = vpop.f32.mrf.mxu0
        %v3839 = vadd.f32 %v3798, %v3838
        %v3840 = vpop.f32.mrf.mxu0
        %v3841 = vpop.f32.mrf.mxu0
        %3842 = vdwg.mxu0
        %3843 = vmatprep.subr.bf16.mxu0 %v3076
        %3844 = vmatpush1.bf16.msra.mxu0 %v3075
        %3845 = vmatprep.subr.bf16.mxu0 %v3066
        %3846 = vmatpush1.bf16.msra.mxu0 %v3065
        %3847 = vmatprep.subr.bf16.mxu0 %v3056
        %3848 = vmatpush1.bf16.msra.mxu0 %v3055
        %3849 = vmatprep.subr.bf16.mxu0 %v3046
        %3850 = vmatpush1.bf16.msra.mxu0 %v3045
        %3851 = vmatprep.subr.bf16.mxu0 %v3036
        %3852 = vmatpush1.bf16.msra.mxu0 %v3035
        %3853 = vmatprep.subr.bf16.mxu0 %v3026
        %3854 = vmatpush1.bf16.msra.mxu0 %v3025
        %3855 = vmatprep.subr.bf16.mxu0 %v3016
        %3856 = vmatpush1.bf16.msra.mxu0 %v3015
        %3857 = vmatprep.subr.bf16.mxu0 %v3006
        %3858 = vmatpush1.bf16.msra.mxu0 %v3005
        %3859 = vmatprep.subr.bf16.mxu0 %v3156
        %3860 = vmatpush2.bf16.msra.mxu0 %v3155
        %3861 = vmatprep.subr.bf16.mxu0 %v3146
        %3862 = vmatpush2.bf16.msra.mxu0 %v3145
        %3863 = vmatprep.subr.bf16.mxu0 %v3136
        %3864 = vmatpush2.bf16.msra.mxu0 %v3135
        %3865 = vmatprep.subr.bf16.mxu0 %v3126
        %3866 = vmatpush2.bf16.msra.mxu0 %v3125
        %3867 = vmatprep.subr.bf16.mxu0 %v3116
        %3868 = vmatpush2.bf16.msra.mxu0 %v3115
        %3869 = vmatprep.subr.bf16.mxu0 %v3106
        %3870 = vmatpush2.bf16.msra.mxu0 %v3105
        %3871 = vmatprep.subr.bf16.mxu0 %v3096
        %3872 = vmatpush2.bf16.msra.mxu0 %v3095
        %3873 = vmatprep.subr.bf16.mxu0 %v3086
        %3874 = vmatpush2.bf16.msra.mxu0 %v3085
        %3875 = vmatprep.mubr.bf16.mxu0 %v2745
        %3876 = vmatmul.mubr.bf16.gmra.mxu0 %v2744
        %v3877 = vpop.f32.mrf.mxu0
        %v3878 = vadd.f32 0.0, %v3877
        %v3879 = vpop.f32.mrf.mxu0
        %v3880 = vadd.f32 0.0, %v3879
        %v3881 = vpop.f32.mrf.mxu0
        %v3882 = vpop.f32.mrf.mxu0
        %3883 = vdwg.mxu0
        %3884 = vmatprep.subr.bf16.mxu0 %v3236
        %3885 = vmatpush1.bf16.msra.mxu0 %v3235
        %3886 = vmatprep.subr.bf16.mxu0 %v3226
        %3887 = vmatpush1.bf16.msra.mxu0 %v3225
        %3888 = vmatprep.subr.bf16.mxu0 %v3216
        %3889 = vmatpush1.bf16.msra.mxu0 %v3215
        %3890 = vmatprep.subr.bf16.mxu0 %v3206
        %3891 = vmatpush1.bf16.msra.mxu0 %v3205
        %3892 = vmatprep.subr.bf16.mxu0 %v3196
        %3893 = vmatpush1.bf16.msra.mxu0 %v3195
        %3894 = vmatprep.subr.bf16.mxu0 %v3186
        %3895 = vmatpush1.bf16.msra.mxu0 %v3185
        %3896 = vmatprep.subr.bf16.mxu0 %v3176
        %3897 = vmatpush1.bf16.msra.mxu0 %v3175
        %3898 = vmatprep.subr.bf16.mxu0 %v3166
        %3899 = vmatpush1.bf16.msra.mxu0 %v3165
        %3900 = vmatprep.subr.bf16.mxu0 %v3316
        %3901 = vmatpush2.bf16.msra.mxu0 %v3315
        %3902 = vmatprep.subr.bf16.mxu0 %v3306
        %3903 = vmatpush2.bf16.msra.mxu0 %v3305
        %3904 = vmatprep.subr.bf16.mxu0 %v3296
        %3905 = vmatpush2.bf16.msra.mxu0 %v3295
        %3906 = vmatprep.subr.bf16.mxu0 %v3286
        %3907 = vmatpush2.bf16.msra.mxu0 %v3285
        %3908 = vmatprep.subr.bf16.mxu0 %v3276
        %3909 = vmatpush2.bf16.msra.mxu0 %v3275
        %3910 = vmatprep.subr.bf16.mxu0 %v3266
        %3911 = vmatpush2.bf16.msra.mxu0 %v3265
        %3912 = vmatprep.subr.bf16.mxu0 %v3256
        %3913 = vmatpush2.bf16.msra.mxu0 %v3255
        %3914 = vmatprep.subr.bf16.mxu0 %v3246
        %3915 = vmatpush2.bf16.msra.mxu0 %v3245
        %3916 = vmatprep.mubr.bf16.mxu0 %v2747
        %3917 = vmatmul.mubr.bf16.gmra.mxu0 %v2746
        %v3918 = vpop.f32.mrf.mxu0
        %v3919 = vadd.f32 %v3878, %v3918
        %v3920 = vpop.f32.mrf.mxu0
        %v3921 = vadd.f32 %v3880, %v3920
        %v3922 = vpop.f32.mrf.mxu0
        %v3923 = vpop.f32.mrf.mxu0
        %3924 = vdwg.mxu0
        %3925 = vmatprep.subr.bf16.mxu0 %v3396
        %3926 = vmatpush1.bf16.msra.mxu0 %v3395
        %3927 = vmatprep.subr.bf16.mxu0 %v3386
        %3928 = vmatpush1.bf16.msra.mxu0 %v3385
        %3929 = vmatprep.subr.bf16.mxu0 %v3376
        %3930 = vmatpush1.bf16.msra.mxu0 %v3375
        %3931 = vmatprep.subr.bf16.mxu0 %v3366
        %3932 = vmatpush1.bf16.msra.mxu0 %v3365
        %3933 = vmatprep.subr.bf16.mxu0 %v3356
        %3934 = vmatpush1.bf16.msra.mxu0 %v3355
        %3935 = vmatprep.subr.bf16.mxu0 %v3346
        %3936 = vmatpush1.bf16.msra.mxu0 %v3345
        %3937 = vmatprep.subr.bf16.mxu0 %v3336
        %3938 = vmatpush1.bf16.msra.mxu0 %v3335
        %3939 = vmatprep.subr.bf16.mxu0 %v3326
        %3940 = vmatpush1.bf16.msra.mxu0 %v3325
        %3941 = vmatprep.subr.bf16.mxu0 %v3476
        %3942 = vmatpush2.bf16.msra.mxu0 %v3475
        %3943 = vmatprep.subr.bf16.mxu0 %v3466
        %3944 = vmatpush2.bf16.msra.mxu0 %v3465
        %3945 = vmatprep.subr.bf16.mxu0 %v3456
        %3946 = vmatpush2.bf16.msra.mxu0 %v3455
        %3947 = vmatprep.subr.bf16.mxu0 %v3446
        %3948 = vmatpush2.bf16.msra.mxu0 %v3445
        %3949 = vmatprep.subr.bf16.mxu0 %v3436
        %3950 = vmatpush2.bf16.msra.mxu0 %v3435
        %3951 = vmatprep.subr.bf16.mxu0 %v3426
        %3952 = vmatpush2.bf16.msra.mxu0 %v3425
        %3953 = vmatprep.subr.bf16.mxu0 %v3416
        %3954 = vmatpush2.bf16.msra.mxu0 %v3415
        %3955 = vmatprep.subr.bf16.mxu0 %v3406
        %3956 = vmatpush2.bf16.msra.mxu0 %v3405
        %3957 = vmatprep.mubr.bf16.mxu0 %v2749
        %3958 = vmatmul.mubr.bf16.gmra.mxu0 %v2748
        %v3959 = vpop.f32.mrf.mxu0
        %v3960 = vadd.f32 %v3919, %v3959
        %v3961 = vpop.f32.mrf.mxu0
        %v3962 = vadd.f32 %v3921, %v3961
        %v3963 = vpop.f32.mrf.mxu0
        %v3964 = vpop.f32.mrf.mxu0
        %3965 = vdwg.mxu0
        %3966 = vmatprep.subr.bf16.mxu0 0
        %3967 = vmatpush1.bf16.msra.mxu0 0
        %3968 = vmatprep.subr.bf16.mxu0 0
        %3969 = vmatpush1.bf16.msra.mxu0 0
        %3970 = vmatprep.subr.bf16.mxu0 0
        %3971 = vmatpush1.bf16.msra.mxu0 0
        %3972 = vmatprep.subr.bf16.mxu0 0
        %3973 = vmatpush1.bf16.msra.mxu0 0
        %3974 = vmatprep.subr.bf16.mxu0 0
        %3975 = vmatpush1.bf16.msra.mxu0 0
        %3976 = vmatprep.subr.bf16.mxu0 0
        %3977 = vmatpush1.bf16.msra.mxu0 0
        %3978 = vmatprep.subr.bf16.mxu0 %v3496
        %3979 = vmatpush1.bf16.msra.mxu0 %v3495
        %3980 = vmatprep.subr.bf16.mxu0 %v3486
        %3981 = vmatpush1.bf16.msra.mxu0 %v3485
        %3982 = vmatprep.subr.bf16.mxu0 0
        %3983 = vmatpush2.bf16.msra.mxu0 0
        %3984 = vmatprep.subr.bf16.mxu0 0
        %3985 = vmatpush2.bf16.msra.mxu0 0
        %3986 = vmatprep.subr.bf16.mxu0 0
        %3987 = vmatpush2.bf16.msra.mxu0 0
        %3988 = vmatprep.subr.bf16.mxu0 0
        %3989 = vmatpush2.bf16.msra.mxu0 0
        %3990 = vmatprep.subr.bf16.mxu0 0
        %3991 = vmatpush2.bf16.msra.mxu0 0
        %3992 = vmatprep.subr.bf16.mxu0 0
        %3993 = vmatpush2.bf16.msra.mxu0 0
        %3994 = vmatprep.subr.bf16.mxu0 0
        %3995 = vmatpush2.bf16.msra.mxu0 0
        %3996 = vmatprep.subr.bf16.mxu0 0
        %3997 = vmatpush2.bf16.msra.mxu0 0
        %3998 = vmatprep.mubr.bf16.mxu0 0
        %3999 = vmatmul.mubr.bf16.gmra.mxu0 %v3513
        %v4000 = vpop.f32.mrf.mxu0
        %v4001 = vadd.f32 %v3960, %v4000
        %v4002 = vpop.f32.mrf.mxu0
        %v4003 = vadd.f32 %v3962, %v4002
        %v4004 = vpop.f32.mrf.mxu0
        %v4005 = vpop.f32.mrf.mxu0
        %4006 = vdwg.mxu0
        %4007 = vmatprep.subr.bf16.mxu0 %v3078
        %4008 = vmatpush1.bf16.msra.mxu0 %v3077
        %4009 = vmatprep.subr.bf16.mxu0 %v3068
        %4010 = vmatpush1.bf16.msra.mxu0 %v3067
        %4011 = vmatprep.subr.bf16.mxu0 %v3058
        %4012 = vmatpush1.bf16.msra.mxu0 %v3057
        %4013 = vmatprep.subr.bf16.mxu0 %v3048
        %4014 = vmatpush1.bf16.msra.mxu0 %v3047
        %4015 = vmatprep.subr.bf16.mxu0 %v3038
        %4016 = vmatpush1.bf16.msra.mxu0 %v3037
        %4017 = vmatprep.subr.bf16.mxu0 %v3028
        %4018 = vmatpush1.bf16.msra.mxu0 %v3027
        %4019 = vmatprep.subr.bf16.mxu0 %v3018
        %4020 = vmatpush1.bf16.msra.mxu0 %v3017
        %4021 = vmatprep.subr.bf16.mxu0 %v3008
        %4022 = vmatpush1.bf16.msra.mxu0 %v3007
        %4023 = vmatprep.subr.bf16.mxu0 %v3158
        %4024 = vmatpush2.bf16.msra.mxu0 %v3157
        %4025 = vmatprep.subr.bf16.mxu0 %v3148
        %4026 = vmatpush2.bf16.msra.mxu0 %v3147
        %4027 = vmatprep.subr.bf16.mxu0 %v3138
        %4028 = vmatpush2.bf16.msra.mxu0 %v3137
        %4029 = vmatprep.subr.bf16.mxu0 %v3128
        %4030 = vmatpush2.bf16.msra.mxu0 %v3127
        %4031 = vmatprep.subr.bf16.mxu0 %v3118
        %4032 = vmatpush2.bf16.msra.mxu0 %v3117
        %4033 = vmatprep.subr.bf16.mxu0 %v3108
        %4034 = vmatpush2.bf16.msra.mxu0 %v3107
        %4035 = vmatprep.subr.bf16.mxu0 %v3098
        %4036 = vmatpush2.bf16.msra.mxu0 %v3097
        %4037 = vmatprep.subr.bf16.mxu0 %v3088
        %4038 = vmatpush2.bf16.msra.mxu0 %v3087
        %4039 = vmatprep.mubr.bf16.mxu0 %v2745
        %4040 = vmatmul.mubr.bf16.gmra.mxu0 %v2744
        %v4041 = vpop.f32.mrf.mxu0
        %v4042 = vadd.f32 0.0, %v4041
        %v4043 = vpop.f32.mrf.mxu0
        %v4044 = vadd.f32 0.0, %v4043
        %v4045 = vpop.f32.mrf.mxu0
        %v4046 = vpop.f32.mrf.mxu0
        %4047 = vdwg.mxu0
        %4048 = vmatprep.subr.bf16.mxu0 %v3238
        %4049 = vmatpush1.bf16.msra.mxu0 %v3237
        %4050 = vmatprep.subr.bf16.mxu0 %v3228
        %4051 = vmatpush1.bf16.msra.mxu0 %v3227
        %4052 = vmatprep.subr.bf16.mxu0 %v3218
        %4053 = vmatpush1.bf16.msra.mxu0 %v3217
        %4054 = vmatprep.subr.bf16.mxu0 %v3208
        %4055 = vmatpush1.bf16.msra.mxu0 %v3207
        %4056 = vmatprep.subr.bf16.mxu0 %v3198
        %4057 = vmatpush1.bf16.msra.mxu0 %v3197
        %4058 = vmatprep.subr.bf16.mxu0 %v3188
        %4059 = vmatpush1.bf16.msra.mxu0 %v3187
        %4060 = vmatprep.subr.bf16.mxu0 %v3178
        %4061 = vmatpush1.bf16.msra.mxu0 %v3177
        %4062 = vmatprep.subr.bf16.mxu0 %v3168
        %4063 = vmatpush1.bf16.msra.mxu0 %v3167
        %4064 = vmatprep.subr.bf16.mxu0 %v3318
        %4065 = vmatpush2.bf16.msra.mxu0 %v3317
        %4066 = vmatprep.subr.bf16.mxu0 %v3308
        %4067 = vmatpush2.bf16.msra.mxu0 %v3307
        %4068 = vmatprep.subr.bf16.mxu0 %v3298
        %4069 = vmatpush2.bf16.msra.mxu0 %v3297
        %4070 = vmatprep.subr.bf16.mxu0 %v3288
        %4071 = vmatpush2.bf16.msra.mxu0 %v3287
        %4072 = vmatprep.subr.bf16.mxu0 %v3278
        %4073 = vmatpush2.bf16.msra.mxu0 %v3277
        %4074 = vmatprep.subr.bf16.mxu0 %v3268
        %4075 = vmatpush2.bf16.msra.mxu0 %v3267
        %4076 = vmatprep.subr.bf16.mxu0 %v3258
        %4077 = vmatpush2.bf16.msra.mxu0 %v3257
        %4078 = vmatprep.subr.bf16.mxu0 %v3248
        %4079 = vmatpush2.bf16.msra.mxu0 %v3247
        %4080 = vmatprep.mubr.bf16.mxu0 %v2747
        %4081 = vmatmul.mubr.bf16.gmra.mxu0 %v2746
        %v4082 = vpop.f32.mrf.mxu0
        %v4083 = vadd.f32 %v4042, %v4082
        %v4084 = vpop.f32.mrf.mxu0
        %v4085 = vadd.f32 %v4044, %v4084
        %v4086 = vpop.f32.mrf.mxu0
        %v4087 = vpop.f32.mrf.mxu0
        %4088 = vdwg.mxu0
        %4089 = vmatprep.subr.bf16.mxu0 %v3398
        %4090 = vmatpush1.bf16.msra.mxu0 %v3397
        %4091 = vmatprep.subr.bf16.mxu0 %v3388
        %4092 = vmatpush1.bf16.msra.mxu0 %v3387
        %4093 = vmatprep.subr.bf16.mxu0 %v3378
        %4094 = vmatpush1.bf16.msra.mxu0 %v3377
        %4095 = vmatprep.subr.bf16.mxu0 %v3368
        %4096 = vmatpush1.bf16.msra.mxu0 %v3367
        %4097 = vmatprep.subr.bf16.mxu0 %v3358
        %4098 = vmatpush1.bf16.msra.mxu0 %v3357
        %4099 = vmatprep.subr.bf16.mxu0 %v3348
        %4100 = vmatpush1.bf16.msra.mxu0 %v3347
        %4101 = vmatprep.subr.bf16.mxu0 %v3338
        %4102 = vmatpush1.bf16.msra.mxu0 %v3337
        %4103 = vmatprep.subr.bf16.mxu0 %v3328
        %4104 = vmatpush1.bf16.msra.mxu0 %v3327
        %4105 = vmatprep.subr.bf16.mxu0 %v3478
        %4106 = vmatpush2.bf16.msra.mxu0 %v3477
        %4107 = vmatprep.subr.bf16.mxu0 %v3468
        %4108 = vmatpush2.bf16.msra.mxu0 %v3467
        %4109 = vmatprep.subr.bf16.mxu0 %v3458
        %4110 = vmatpush2.bf16.msra.mxu0 %v3457
        %4111 = vmatprep.subr.bf16.mxu0 %v3448
        %4112 = vmatpush2.bf16.msra.mxu0 %v3447
        %4113 = vmatprep.subr.bf16.mxu0 %v3438
        %4114 = vmatpush2.bf16.msra.mxu0 %v3437
        %4115 = vmatprep.subr.bf16.mxu0 %v3428
        %4116 = vmatpush2.bf16.msra.mxu0 %v3427
        %4117 = vmatprep.subr.bf16.mxu0 %v3418
        %4118 = vmatpush2.bf16.msra.mxu0 %v3417
        %4119 = vmatprep.subr.bf16.mxu0 %v3408
        %4120 = vmatpush2.bf16.msra.mxu0 %v3407
        %4121 = vmatprep.mubr.bf16.mxu0 %v2749
        %4122 = vmatmul.mubr.bf16.gmra.mxu0 %v2748
        %v4123 = vpop.f32.mrf.mxu0
        %v4124 = vadd.f32 %v4083, %v4123
        %v4125 = vpop.f32.mrf.mxu0
        %v4126 = vadd.f32 %v4085, %v4125
        %v4127 = vpop.f32.mrf.mxu0
        %v4128 = vpop.f32.mrf.mxu0
        %4129 = vdwg.mxu0
        %4130 = vmatprep.subr.bf16.mxu0 0
        %4131 = vmatpush1.bf16.msra.mxu0 0
        %4132 = vmatprep.subr.bf16.mxu0 0
        %4133 = vmatpush1.bf16.msra.mxu0 0
        %4134 = vmatprep.subr.bf16.mxu0 0
        %4135 = vmatpush1.bf16.msra.mxu0 0
        %4136 = vmatprep.subr.bf16.mxu0 0
        %4137 = vmatpush1.bf16.msra.mxu0 0
        %4138 = vmatprep.subr.bf16.mxu0 0
        %4139 = vmatpush1.bf16.msra.mxu0 0
        %4140 = vmatprep.subr.bf16.mxu0 0
        %4141 = vmatpush1.bf16.msra.mxu0 0
        %4142 = vmatprep.subr.bf16.mxu0 %v3498
        %4143 = vmatpush1.bf16.msra.mxu0 %v3497
        %4144 = vmatprep.subr.bf16.mxu0 %v3488
        %4145 = vmatpush1.bf16.msra.mxu0 %v3487
        %4146 = vmatprep.subr.bf16.mxu0 0
        %4147 = vmatpush2.bf16.msra.mxu0 0
        %4148 = vmatprep.subr.bf16.mxu0 0
        %4149 = vmatpush2.bf16.msra.mxu0 0
        %4150 = vmatprep.subr.bf16.mxu0 0
        %4151 = vmatpush2.bf16.msra.mxu0 0
        %4152 = vmatprep.subr.bf16.mxu0 0
        %4153 = vmatpush2.bf16.msra.mxu0 0
        %4154 = vmatprep.subr.bf16.mxu0 0
        %4155 = vmatpush2.bf16.msra.mxu0 0
        %4156 = vmatprep.subr.bf16.mxu0 0
        %4157 = vmatpush2.bf16.msra.mxu0 0
        %4158 = vmatprep.subr.bf16.mxu0 0
        %4159 = vmatpush2.bf16.msra.mxu0 0
        %4160 = vmatprep.subr.bf16.mxu0 0
        %4161 = vmatpush2.bf16.msra.mxu0 0
        %4162 = vmatprep.mubr.bf16.mxu0 0
        %4163 = vmatmul.mubr.bf16.gmra.mxu0 %v3513
        %v4164 = vpop.f32.mrf.mxu0
        %v4165 = vadd.f32 %v4124, %v4164
        %v4166 = vpop.f32.mrf.mxu0
        %v4167 = vadd.f32 %v4126, %v4166
        %v4168 = vpop.f32.mrf.mxu0
        %v4169 = vpop.f32.mrf.mxu0
        %4170 = vdwg.mxu0
        %4171 = vmatprep.subr.bf16.mxu0 %v3080
        %4172 = vmatpush1.bf16.msra.mxu0 %v3079
        %4173 = vmatprep.subr.bf16.mxu0 %v3070
        %4174 = vmatpush1.bf16.msra.mxu0 %v3069
        %4175 = vmatprep.subr.bf16.mxu0 %v3060
        %4176 = vmatpush1.bf16.msra.mxu0 %v3059
        %4177 = vmatprep.subr.bf16.mxu0 %v3050
        %4178 = vmatpush1.bf16.msra.mxu0 %v3049
        %4179 = vmatprep.subr.bf16.mxu0 %v3040
        %4180 = vmatpush1.bf16.msra.mxu0 %v3039
        %4181 = vmatprep.subr.bf16.mxu0 %v3030
        %4182 = vmatpush1.bf16.msra.mxu0 %v3029
        %4183 = vmatprep.subr.bf16.mxu0 %v3020
        %4184 = vmatpush1.bf16.msra.mxu0 %v3019
        %4185 = vmatprep.subr.bf16.mxu0 %v3010
        %4186 = vmatpush1.bf16.msra.mxu0 %v3009
        %4187 = vmatprep.subr.bf16.mxu0 %v3160
        %4188 = vmatpush2.bf16.msra.mxu0 %v3159
        %4189 = vmatprep.subr.bf16.mxu0 %v3150
        %4190 = vmatpush2.bf16.msra.mxu0 %v3149
        %4191 = vmatprep.subr.bf16.mxu0 %v3140
        %4192 = vmatpush2.bf16.msra.mxu0 %v3139
        %4193 = vmatprep.subr.bf16.mxu0 %v3130
        %4194 = vmatpush2.bf16.msra.mxu0 %v3129
        %4195 = vmatprep.subr.bf16.mxu0 %v3120
        %4196 = vmatpush2.bf16.msra.mxu0 %v3119
        %4197 = vmatprep.subr.bf16.mxu0 %v3110
        %4198 = vmatpush2.bf16.msra.mxu0 %v3109
        %4199 = vmatprep.subr.bf16.mxu0 %v3100
        %4200 = vmatpush2.bf16.msra.mxu0 %v3099
        %4201 = vmatprep.subr.bf16.mxu0 %v3090
        %4202 = vmatpush2.bf16.msra.mxu0 %v3089
        %4203 = vmatprep.mubr.bf16.mxu0 %v2745
        %4204 = vmatmul.mubr.bf16.gmra.mxu0 %v2744
        %v4205 = vpop.f32.mrf.mxu0
        %v4206 = vadd.f32 0.0, %v4205
        %v4207 = vpop.f32.mrf.mxu0
        %v4208 = vadd.f32 0.0, %v4207
        %v4209 = vpop.f32.mrf.mxu0
        %v4210 = vpop.f32.mrf.mxu0
        %4211 = vdwg.mxu0
        %4212 = vmatprep.subr.bf16.mxu0 %v3240
        %4213 = vmatpush1.bf16.msra.mxu0 %v3239
        %4214 = vmatprep.subr.bf16.mxu0 %v3230
        %4215 = vmatpush1.bf16.msra.mxu0 %v3229
        %4216 = vmatprep.subr.bf16.mxu0 %v3220
        %4217 = vmatpush1.bf16.msra.mxu0 %v3219
        %4218 = vmatprep.subr.bf16.mxu0 %v3210
        %4219 = vmatpush1.bf16.msra.mxu0 %v3209
        %4220 = vmatprep.subr.bf16.mxu0 %v3200
        %4221 = vmatpush1.bf16.msra.mxu0 %v3199
        %4222 = vmatprep.subr.bf16.mxu0 %v3190
        %4223 = vmatpush1.bf16.msra.mxu0 %v3189
        %4224 = vmatprep.subr.bf16.mxu0 %v3180
        %4225 = vmatpush1.bf16.msra.mxu0 %v3179
        %4226 = vmatprep.subr.bf16.mxu0 %v3170
        %4227 = vmatpush1.bf16.msra.mxu0 %v3169
        %4228 = vmatprep.subr.bf16.mxu0 %v3320
        %4229 = vmatpush2.bf16.msra.mxu0 %v3319
        %4230 = vmatprep.subr.bf16.mxu0 %v3310
        %4231 = vmatpush2.bf16.msra.mxu0 %v3309
        %4232 = vmatprep.subr.bf16.mxu0 %v3300
        %4233 = vmatpush2.bf16.msra.mxu0 %v3299
        %4234 = vmatprep.subr.bf16.mxu0 %v3290
        %4235 = vmatpush2.bf16.msra.mxu0 %v3289
        %4236 = vmatprep.subr.bf16.mxu0 %v3280
        %4237 = vmatpush2.bf16.msra.mxu0 %v3279
        %4238 = vmatprep.subr.bf16.mxu0 %v3270
        %4239 = vmatpush2.bf16.msra.mxu0 %v3269
        %4240 = vmatprep.subr.bf16.mxu0 %v3260
        %4241 = vmatpush2.bf16.msra.mxu0 %v3259
        %4242 = vmatprep.subr.bf16.mxu0 %v3250
        %4243 = vmatpush2.bf16.msra.mxu0 %v3249
        %4244 = vmatprep.mubr.bf16.mxu0 %v2747
        %4245 = vmatmul.mubr.bf16.gmra.mxu0 %v2746
        %v4246 = vpop.f32.mrf.mxu0
        %v4247 = vadd.f32 %v4206, %v4246
        %v4248 = vpop.f32.mrf.mxu0
        %v4249 = vadd.f32 %v4208, %v4248
        %v4250 = vpop.f32.mrf.mxu0
        %v4251 = vpop.f32.mrf.mxu0
        %4252 = vdwg.mxu0
        %4253 = vmatprep.subr.bf16.mxu0 %v3400
        %4254 = vmatpush1.bf16.msra.mxu0 %v3399
        %4255 = vmatprep.subr.bf16.mxu0 %v3390
        %4256 = vmatpush1.bf16.msra.mxu0 %v3389
        %4257 = vmatprep.subr.bf16.mxu0 %v3380
        %4258 = vmatpush1.bf16.msra.mxu0 %v3379
        %4259 = vmatprep.subr.bf16.mxu0 %v3370
        %4260 = vmatpush1.bf16.msra.mxu0 %v3369
        %4261 = vmatprep.subr.bf16.mxu0 %v3360
        %4262 = vmatpush1.bf16.msra.mxu0 %v3359
        %4263 = vmatprep.subr.bf16.mxu0 %v3350
        %4264 = vmatpush1.bf16.msra.mxu0 %v3349
        %4265 = vmatprep.subr.bf16.mxu0 %v3340
        %4266 = vmatpush1.bf16.msra.mxu0 %v3339
        %4267 = vmatprep.subr.bf16.mxu0 %v3330
        %4268 = vmatpush1.bf16.msra.mxu0 %v3329
        %4269 = vmatprep.subr.bf16.mxu0 %v3480
        %4270 = vmatpush2.bf16.msra.mxu0 %v3479
        %4271 = vmatprep.subr.bf16.mxu0 %v3470
        %4272 = vmatpush2.bf16.msra.mxu0 %v3469
        %4273 = vmatprep.subr.bf16.mxu0 %v3460
        %4274 = vmatpush2.bf16.msra.mxu0 %v3459
        %4275 = vmatprep.subr.bf16.mxu0 %v3450
        %4276 = vmatpush2.bf16.msra.mxu0 %v3449
        %4277 = vmatprep.subr.bf16.mxu0 %v3440
        %4278 = vmatpush2.bf16.msra.mxu0 %v3439
        %4279 = vmatprep.subr.bf16.mxu0 %v3430
        %4280 = vmatpush2.bf16.msra.mxu0 %v3429
        %4281 = vmatprep.subr.bf16.mxu0 %v3420
        %4282 = vmatpush2.bf16.msra.mxu0 %v3419
        %4283 = vmatprep.subr.bf16.mxu0 %v3410
        %4284 = vmatpush2.bf16.msra.mxu0 %v3409
        %4285 = vmatprep.mubr.bf16.mxu0 %v2749
        %4286 = vmatmul.mubr.bf16.gmra.mxu0 %v2748
        %v4287 = vpop.f32.mrf.mxu0
        %v4288 = vadd.f32 %v4247, %v4287
        %v4289 = vpop.f32.mrf.mxu0
        %v4290 = vadd.f32 %v4249, %v4289
        %v4291 = vpop.f32.mrf.mxu0
        %v4292 = vpop.f32.mrf.mxu0
        %4293 = vdwg.mxu0
        %4294 = vmatprep.subr.bf16.mxu0 0
        %4295 = vmatpush1.bf16.msra.mxu0 0
        %4296 = vmatprep.subr.bf16.mxu0 0
        %4297 = vmatpush1.bf16.msra.mxu0 0
        %4298 = vmatprep.subr.bf16.mxu0 0
        %4299 = vmatpush1.bf16.msra.mxu0 0
        %4300 = vmatprep.subr.bf16.mxu0 0
        %4301 = vmatpush1.bf16.msra.mxu0 0
        %4302 = vmatprep.subr.bf16.mxu0 0
        %4303 = vmatpush1.bf16.msra.mxu0 0
        %4304 = vmatprep.subr.bf16.mxu0 0
        %4305 = vmatpush1.bf16.msra.mxu0 0
        %4306 = vmatprep.subr.bf16.mxu0 %v3500
        %4307 = vmatpush1.bf16.msra.mxu0 %v3499
        %4308 = vmatprep.subr.bf16.mxu0 %v3490
        %4309 = vmatpush1.bf16.msra.mxu0 %v3489
        %4310 = vmatprep.subr.bf16.mxu0 0
        %4311 = vmatpush2.bf16.msra.mxu0 0
        %4312 = vmatprep.subr.bf16.mxu0 0
        %4313 = vmatpush2.bf16.msra.mxu0 0
        %4314 = vmatprep.subr.bf16.mxu0 0
        %4315 = vmatpush2.bf16.msra.mxu0 0
        %4316 = vmatprep.subr.bf16.mxu0 0
        %4317 = vmatpush2.bf16.msra.mxu0 0
        %4318 = vmatprep.subr.bf16.mxu0 0
        %4319 = vmatpush2.bf16.msra.mxu0 0
        %4320 = vmatprep.subr.bf16.mxu0 0
        %4321 = vmatpush2.bf16.msra.mxu0 0
        %4322 = vmatprep.subr.bf16.mxu0 0
        %4323 = vmatpush2.bf16.msra.mxu0 0
        %4324 = vmatprep.subr.bf16.mxu0 0
        %4325 = vmatpush2.bf16.msra.mxu0 0
        %4326 = vmatprep.mubr.bf16.mxu0 0
        %4327 = vmatmul.mubr.bf16.gmra.mxu0 %v3513
        %v4328 = vpop.f32.mrf.mxu0
        %v4329 = vadd.f32 %v4288, %v4328
        %v4330 = vpop.f32.mrf.mxu0
        %v4331 = vadd.f32 %v4290, %v4330
        %v4332 = vpop.f32.mrf.mxu0
        %v4333 = vpop.f32.mrf.mxu0
        %4334 = vdwg.mxu0
        %v4335 = vadd.f32 %v3501, %v3673
        %v4336 = vadd.f32 %v3502, %v3675
        %v4337 = vadd.f32 %v3503, %v3837
        %v4338 = vadd.f32 %v3504, %v3839
        %v4339 = vadd.f32 %v3505, %v4001
        %v4340 = vadd.f32 %v3506, %v4003
        %v4341 = vadd.f32 %v3507, %v4165
        %v4342 = vadd.f32 %v3508, %v4167
        %v4343 = vadd.f32 %v3509, %v4329
        %v4344 = vadd.f32 %v3510, %v4331
        %4345 = vst [vmem:[#allocation3] sm:$0xff] %v4335
        %4346 = vst [vmem:[#allocation3 + $0x8] sm:$0xff] %v4336
        %4347 = vst [vmem:[#allocation3 + $0x10] sm:$0xff] %v4337
        %4348 = vst [vmem:[#allocation3 + $0x18] sm:$0xff] %v4338
        %4349 = vst [vmem:[#allocation3 + $0x20] sm:$0xff] %v4339
        %4350 = vst [vmem:[#allocation3 + $0x28] sm:$0xff] %v4340
        %4351 = vst [vmem:[#allocation3 + $0x30] sm:$0xff] %v4341
        %4352 = vst [vmem:[#allocation3 + $0x38] sm:$0xff] %v4342
        %4353 = vst [vmem:[#allocation3 + $0x40] sm:$0xff] %v4343
        %4354 = vst.msk [vmem:[#allocation3 + $0x48] sm:$0xff] %vm1680, %v4344
        %p4355 = scmp.eq.s32.totalorder %s23, 1
        // Predicated region
        $region69: #{tpu_custom_call.1} parent=63 // pred_check
          %p4356 = pneg %p4355
        $region70: #{tpu_custom_call.1} parent=63 // pred_check_branch
          %4358 = sbr.rel (%p4356) target = $region72
        $region71: #{tpu_custom_call.1} parent=63 // pred_region
          %v4359 = vld [vmem:[#allocation3] sm:$0xff]
          %v4360 = vld [vmem:[#allocation3 + $0x8] sm:$0xff]
          %v4361 = vld [vmem:[#allocation3 + $0x10] sm:$0xff]
          %v4362 = vld [vmem:[#allocation3 + $0x18] sm:$0xff]
          %v4363 = vld [vmem:[#allocation3 + $0x20] sm:$0xff]
          %v4364 = vld [vmem:[#allocation3 + $0x28] sm:$0xff]
          %v4365 = vld [vmem:[#allocation3 + $0x30] sm:$0xff]
          %v4366 = vld [vmem:[#allocation3 + $0x38] sm:$0xff]
          %v4367 = vld [vmem:[#allocation3 + $0x40] sm:$0xff]
          %v4368 = vld [vmem:[#allocation3 + $0x48] sm:$0xff]
          %v4369 = vld [vmem:[%s7] sm:$0xff]
          %v4370 = vld [vmem:[%s7 + $0x8] sm:$0x3]
          %v4373 = vlaneseq
          %v4374 = vshrl.u32 %v4373, 7
          %v4375 = vsub.s32 0, %v4374
          %v4376 = vrot.slane %v4369, %v4375
          %v4377 = vlaneseq
          %v4378 = vshrl.u32 %v4377, 7
          %v4379 = vsub.s32 1, %v4378
          %v4380 = vrot.slane %v4369, %v4379
          %v4381 = vlaneseq
          %v4382 = vshrl.u32 %v4381, 7
          %v4383 = vsub.s32 2, %v4382
          %v4384 = vrot.slane %v4369, %v4383
          %v4385 = vlaneseq
          %v4386 = vshrl.u32 %v4385, 7
          %v4387 = vsub.s32 3, %v4386
          %v4388 = vrot.slane %v4369, %v4387
          %v4389 = vlaneseq
          %v4390 = vshrl.u32 %v4389, 7
          %v4391 = vsub.s32 4, %v4390
          %v4392 = vrot.slane %v4369, %v4391
          %v4393 = vlaneseq
          %v4394 = vshrl.u32 %v4393, 7
          %v4395 = vsub.s32 5, %v4394
          %v4396 = vrot.slane %v4369, %v4395
          %v4397 = vlaneseq
          %v4398 = vshrl.u32 %v4397, 7
          %v4399 = vsub.s32 6, %v4398
          %v4400 = vrot.slane %v4369, %v4399
          %v4401 = vlaneseq
          %v4402 = vshrl.u32 %v4401, 7
          %v4403 = vsub.s32 7, %v4402
          %v4404 = vrot.slane %v4369, %v4403
          %v4405 = vlaneseq
          %v4406 = vshrl.u32 %v4405, 7
          %v4407 = vsub.s32 0, %v4406
          %v4408 = vrot.slane %v4370, %v4407
          %v4409 = vlaneseq
          %v4410 = vshrl.u32 %v4409, 7
          %v4411 = vsub.s32 1, %v4410
          %v4412 = vrot.slane %v4370, %v4411
          %v4423 = vmul.f32 %v4359, %v4376
          %v4424 = vmul.f32 %v4360, %v4380
          %v4425 = vmul.f32 %v4361, %v4384
          %v4426 = vmul.f32 %v4362, %v4388
          %v4427 = vmul.f32 %v4363, %v4392
          %v4428 = vmul.f32 %v4364, %v4396
          %v4429 = vmul.f32 %v4365, %v4400
          %v4430 = vmul.f32 %v4366, %v4404
          %v4431 = vmul.f32 %v4367, %v4408
          %v4432 = vmul.f32 %v4368, %v4412
          %v4433 = vld [vmem:[%s8] sm:$0xff]
          %v4434 = vld [vmem:[%s8 + $0x8] sm:$0x3]
          %v4437 = vlaneseq
          %v4438 = vshrl.u32 %v4437, 7
          %v4439 = vsub.s32 0, %v4438
          %v4440 = vrot.slane %v4433, %v4439
          %v4441 = vlaneseq
          %v4442 = vshrl.u32 %v4441, 7
          %v4443 = vsub.s32 1, %v4442
          %v4444 = vrot.slane %v4433, %v4443
          %v4445 = vlaneseq
          %v4446 = vshrl.u32 %v4445, 7
          %v4447 = vsub.s32 2, %v4446
          %v4448 = vrot.slane %v4433, %v4447
          %v4449 = vlaneseq
          %v4450 = vshrl.u32 %v4449, 7
          %v4451 = vsub.s32 3, %v4450
          %v4452 = vrot.slane %v4433, %v4451
          %v4453 = vlaneseq
          %v4454 = vshrl.u32 %v4453, 7
          %v4455 = vsub.s32 4, %v4454
          %v4456 = vrot.slane %v4433, %v4455
          %v4457 = vlaneseq
          %v4458 = vshrl.u32 %v4457, 7
          %v4459 = vsub.s32 5, %v4458
          %v4460 = vrot.slane %v4433, %v4459
          %v4461 = vlaneseq
          %v4462 = vshrl.u32 %v4461, 7
          %v4463 = vsub.s32 6, %v4462
          %v4464 = vrot.slane %v4433, %v4463
          %v4465 = vlaneseq
          %v4466 = vshrl.u32 %v4465, 7
          %v4467 = vsub.s32 7, %v4466
          %v4468 = vrot.slane %v4433, %v4467
          %v4469 = vlaneseq
          %v4470 = vshrl.u32 %v4469, 7
          %v4471 = vsub.s32 0, %v4470
          %v4472 = vrot.slane %v4434, %v4471
          %v4473 = vlaneseq
          %v4474 = vshrl.u32 %v4473, 7
          %v4475 = vsub.s32 1, %v4474
          %v4476 = vrot.slane %v4434, %v4475
          %v4487 = vadd.f32 %v4423, %v4440
          %v4488 = vadd.f32 %v4424, %v4444
          %v4489 = vadd.f32 %v4425, %v4448
          %v4490 = vadd.f32 %v4426, %v4452
          %v4491 = vadd.f32 %v4427, %v4456
          %v4492 = vadd.f32 %v4428, %v4460
          %v4493 = vadd.f32 %v4429, %v4464
          %v4494 = vadd.f32 %v4430, %v4468
          %v4495 = vadd.f32 %v4431, %v4472
          %v4496 = vadd.f32 %v4432, %v4476
          %v4497 = vmax.f32 %v4487, 0.0
          %v4498 = vmax.f32 %v4488, 0.0
          %v4499 = vmax.f32 %v4489, 0.0
          %v4500 = vmax.f32 %v4490, 0.0
          %v4501 = vmax.f32 %v4491, 0.0
          %v4502 = vmax.f32 %v4492, 0.0
          %v4503 = vmax.f32 %v4493, 0.0
          %v4504 = vmax.f32 %v4494, 0.0
          %v4505 = vmax.f32 %v4495, 0.0
          %v4506 = vmax.f32 %v4496, 0.0
          %v4507 = vpack.c.bf16 %v4497, %v4497
          %v4508 = vpack.c.bf16 %v4498, %v4498
          %v4509 = vpack.c.bf16 %v4499, %v4499
          %v4510 = vpack.c.bf16 %v4500, %v4500
          %v4511 = vpack.c.bf16 %v4501, %v4501
          %v4512 = vpack.c.bf16 %v4502, %v4502
          %v4513 = vpack.c.bf16 %v4503, %v4503
          %v4514 = vpack.c.bf16 %v4504, %v4504
          %v4515 = vpack.c.bf16 %v4505, %v4505
          %v4516 = vpack.c.bf16 %v4506, %v4506
          %v4517 = vld [vmem:[%s9] sm:$0xf]
          %v4518 = vld [vmem:[%s9 + $0x4] sm:$0xf]
          %v4519 = vld [vmem:[%s9 + $0x8] sm:$0xf]
          %v4520 = vld [vmem:[%s9 + $0xc] sm:$0xf]
          %v4521 = vld [vmem:[%s9 + $0x10] sm:$0xf]
          %v4522 = vld [vmem:[%s9 + $0x14] sm:$0xf]
          %v4523 = vld [vmem:[%s9 + $0x18] sm:$0xf]
          %v4524 = vld [vmem:[%s9 + $0x1c] sm:$0xf]
          %v4525 = vld [vmem:[%s9 + $0x20] sm:$0xf]
          %v4526 = vld [vmem:[%s9 + $0x24] sm:$0xf]
          %v4527 = vld [vmem:[%s9 + $0x28] sm:$0xf]
          %v4528 = vld [vmem:[%s9 + $0x2c] sm:$0xf]
          %v4529 = vld [vmem:[%s9 + $0x30] sm:$0xf]
          %v4530 = vld [vmem:[%s9 + $0x34] sm:$0xf]
          %v4531 = vld [vmem:[%s9 + $0x38] sm:$0xf]
          %v4532 = vld [vmem:[%s9 + $0x3c] sm:$0xf]
          %v4533 = vld [vmem:[%s9 + $0x40] sm:$0xf]
          %v4534 = vld [vmem:[%s9 + $0x44] sm:$0xf]
          %v4535 = vld [vmem:[%s9 + $0x48] sm:$0xf]
          %v4536 = vld [vmem:[%s9 + $0x4c] sm:$0xf]
          %v4537 = vld [vmem:[%s9 + $0x50] sm:$0xf]
          %v4538 = vld [vmem:[%s9 + $0x54] sm:$0xf]
          %v4539 = vld [vmem:[%s9 + $0x58] sm:$0xf]
          %v4540 = vld [vmem:[%s9 + $0x5c] sm:$0xf]
          %v4541 = vld [vmem:[%s9 + $0x60] sm:$0xf]
          %v4542 = vld [vmem:[%s9 + $0x64] sm:$0xf]
          %v4543 = vld [vmem:[%s9 + $0x68] sm:$0xf]
          %v4544 = vld [vmem:[%s9 + $0x6c] sm:$0xf]
          %v4545 = vld [vmem:[%s9 + $0x70] sm:$0xf]
          %v4546 = vld [vmem:[%s9 + $0x74] sm:$0xf]
          %v4547 = vld [vmem:[%s9 + $0x78] sm:$0xf]
          %v4548 = vld [vmem:[%s9 + $0x7c] sm:$0xf]
          %v4549 = vld [vmem:[%s9 + $0x80] sm:$0xf]
          %v4550 = vld [vmem:[%s9 + $0x84] sm:$0xf]
          %v4551 = vld [vmem:[%s9 + $0x88] sm:$0xf]
          %v4552 = vld [vmem:[%s9 + $0x8c] sm:$0xf]
          %v4553 = vld [vmem:[%s9 + $0x90] sm:$0xf]
          %v4554 = vld [vmem:[%s9 + $0x94] sm:$0xf]
          %v4555 = vld [vmem:[%s9 + $0x98] sm:$0xf]
          %v4556 = vld [vmem:[%s9 + $0x9c] sm:$0xf]
          %v4557 = vld [vmem:[%s9 + $0xa0] sm:$0xf]
          %v4558 = vld [vmem:[%s9 + $0xa4] sm:$0xf]
          %v4559 = vld [vmem:[%s9 + $0xa8] sm:$0xf]
          %v4560 = vld [vmem:[%s9 + $0xac] sm:$0xf]
          %v4561 = vld [vmem:[%s9 + $0xb0] sm:$0xf]
          %v4562 = vld [vmem:[%s9 + $0xb4] sm:$0xf]
          %v4563 = vld [vmem:[%s9 + $0xb8] sm:$0xf]
          %v4564 = vld [vmem:[%s9 + $0xbc] sm:$0xf]
          %v4565 = vld [vmem:[%s9 + $0xc0] sm:$0xf]
          %v4566 = vld [vmem:[%s9 + $0xc4] sm:$0xf]
          %v4567 = vld [vmem:[%s9 + $0xc8] sm:$0xf]
          %v4568 = vld [vmem:[%s9 + $0xcc] sm:$0xf]
          %v4569 = vld [vmem:[%s9 + $0xd0] sm:$0xf]
          %v4570 = vld [vmem:[%s9 + $0xd4] sm:$0xf]
          %v4571 = vld [vmem:[%s9 + $0xd8] sm:$0xf]
          %v4572 = vld [vmem:[%s9 + $0xdc] sm:$0xf]
          %v4573 = vld [vmem:[%s9 + $0xe0] sm:$0xf]
          %v4574 = vld [vmem:[%s9 + $0xe4] sm:$0xf]
          %v4575 = vld [vmem:[%s9 + $0xe8] sm:$0xf]
          %v4576 = vld [vmem:[%s9 + $0xec] sm:$0xf]
          %v4577 = vld [vmem:[%s9 + $0xf0] sm:$0xf]
          %v4578 = vld [vmem:[%s9 + $0xf4] sm:$0xf]
          %v4579 = vld [vmem:[%s9 + $0xf8] sm:$0xf]
          %v4580 = vld [vmem:[%s9 + $0xfc] sm:$0xf]
          %v4581 = vld [vmem:[%s9 + $0x100] sm:$0xf]
          %v4582 = vld [vmem:[%s9 + $0x104] sm:$0xf]
          %v4583 = vld [vmem:[%s9 + $0x108] sm:$0xf]
          %v4584 = vld [vmem:[%s9 + $0x10c] sm:$0xf]
          %v4585 = vld [vmem:[%s9 + $0x110] sm:$0xf]
          %v4586 = vld [vmem:[%s9 + $0x114] sm:$0xf]
          %v4587 = vld [vmem:[%s9 + $0x118] sm:$0xf]
          %v4588 = vld [vmem:[%s9 + $0x11c] sm:$0xf]
          %v4589 = vld [vmem:[%s9 + $0x120] sm:$0xf]
          %v4590 = vld [vmem:[%s9 + $0x124] sm:$0xf]
          %v4591 = vld [vmem:[%s9 + $0x128] sm:$0xf]
          %v4592 = vld [vmem:[%s9 + $0x12c] sm:$0xf]
          %v4593 = vld [vmem:[%s9 + $0x130] sm:$0xf]
          %v4594 = vld [vmem:[%s9 + $0x134] sm:$0xf]
          %v4595 = vld [vmem:[%s9 + $0x138] sm:$0xf]
          %v4596 = vld [vmem:[%s9 + $0x13c] sm:$0xf]
          %v4597 = vld [vmem:[%s9 + $0x140] sm:$0xf]
          %v4598 = vld [vmem:[%s9 + $0x144] sm:$0xf]
          %v4599 = vld [vmem:[%s9 + $0x148] sm:$0xf]
          %v4600 = vld [vmem:[%s9 + $0x14c] sm:$0xf]
          %v4601 = vld [vmem:[%s9 + $0x150] sm:$0xf]
          %v4602 = vld [vmem:[%s9 + $0x154] sm:$0xf]
          %v4603 = vld [vmem:[%s9 + $0x158] sm:$0xf]
          %v4604 = vld [vmem:[%s9 + $0x15c] sm:$0xf]
          %v4605 = vld [vmem:[%s9 + $0x160] sm:$0xf]
          %v4606 = vld [vmem:[%s9 + $0x164] sm:$0xf]
          %v4607 = vld [vmem:[%s9 + $0x168] sm:$0xf]
          %v4608 = vld [vmem:[%s9 + $0x16c] sm:$0xf]
          %v4609 = vld [vmem:[%s9 + $0x170] sm:$0xf]
          %v4610 = vld [vmem:[%s9 + $0x174] sm:$0xf]
          %v4611 = vld [vmem:[%s9 + $0x178] sm:$0xf]
          %v4612 = vld [vmem:[%s9 + $0x17c] sm:$0xf]
          %v4613 = vld [vmem:[%s9 + $0x180] sm:$0xf]
          %v4614 = vld [vmem:[%s9 + $0x184] sm:$0xf]
          %v4615 = vld [vmem:[%s9 + $0x188] sm:$0xf]
          %v4616 = vld [vmem:[%s9 + $0x18c] sm:$0xf]
          %v4617 = vld [vmem:[%s9 + $0x190] sm:$0xf]
          %v4618 = vld [vmem:[%s9 + $0x194] sm:$0xf]
          %v4619 = vld [vmem:[%s9 + $0x198] sm:$0xf]
          %v4620 = vld [vmem:[%s9 + $0x19c] sm:$0xf]
          %v4621 = vld [vmem:[%s9 + $0x1a0] sm:$0xf]
          %v4622 = vld [vmem:[%s9 + $0x1a4] sm:$0xf]
          %v4623 = vld [vmem:[%s9 + $0x1a8] sm:$0xf]
          %v4624 = vld [vmem:[%s9 + $0x1ac] sm:$0xf]
          %v4625 = vld [vmem:[%s9 + $0x1b0] sm:$0xf]
          %v4626 = vld [vmem:[%s9 + $0x1b4] sm:$0xf]
          %v4627 = vld [vmem:[%s9 + $0x1b8] sm:$0xf]
          %v4628 = vld [vmem:[%s9 + $0x1bc] sm:$0xf]
          %v4629 = vld [vmem:[%s9 + $0x1c0] sm:$0xf]
          %v4630 = vld [vmem:[%s9 + $0x1c4] sm:$0xf]
          %v4631 = vld [vmem:[%s9 + $0x1c8] sm:$0xf]
          %v4632 = vld [vmem:[%s9 + $0x1cc] sm:$0xf]
          %v4633 = vld [vmem:[%s9 + $0x1d0] sm:$0xf]
          %v4634 = vld [vmem:[%s9 + $0x1d4] sm:$0xf]
          %v4635 = vld [vmem:[%s9 + $0x1d8] sm:$0xf]
          %v4636 = vld [vmem:[%s9 + $0x1dc] sm:$0xf]
          %v4637 = vld [vmem:[%s9 + $0x1e0] sm:$0xf]
          %v4638 = vld [vmem:[%s9 + $0x1e4] sm:$0xf]
          %v4639 = vld [vmem:[%s9 + $0x1e8] sm:$0xf]
          %v4640 = vld [vmem:[%s9 + $0x1ec] sm:$0xf]
          %v4641 = vld [vmem:[%s9 + $0x1f0] sm:$0xf]
          %v4642 = vld [vmem:[%s9 + $0x1f4] sm:$0xf]
          %v4643 = vld [vmem:[%s9 + $0x1f8] sm:$0xf]
          %v4644 = vld [vmem:[%s9 + $0x1fc] sm:$0xf]
          %v4645 = vld [vmem:[%s9 + $0x200] sm:$0xf]
          %v4646 = vld [vmem:[%s9 + $0x204] sm:$0xf]
          %v4647 = vld [vmem:[%s9 + $0x208] sm:$0xf]
          %v4648 = vld [vmem:[%s9 + $0x20c] sm:$0xf]
          %v4649 = vld [vmem:[%s9 + $0x210] sm:$0xf]
          %v4650 = vld [vmem:[%s9 + $0x214] sm:$0xf]
          %v4651 = vld [vmem:[%s9 + $0x218] sm:$0xf]
          %v4652 = vld [vmem:[%s9 + $0x21c] sm:$0xf]
          %v4653 = vld [vmem:[%s9 + $0x220] sm:$0xf]
          %v4654 = vld [vmem:[%s9 + $0x224] sm:$0xf]
          %v4655 = vld [vmem:[%s9 + $0x228] sm:$0xf]
          %v4656 = vld [vmem:[%s9 + $0x22c] sm:$0xf]
          %v4657 = vld [vmem:[%s9 + $0x230] sm:$0xf]
          %v4658 = vld [vmem:[%s9 + $0x234] sm:$0xf]
          %v4659 = vld [vmem:[%s9 + $0x238] sm:$0xf]
          %v4660 = vld [vmem:[%s9 + $0x23c] sm:$0xf]
          %v4661 = vld [vmem:[%s9 + $0x240] sm:$0xf]
          %v4662 = vld [vmem:[%s9 + $0x244] sm:$0xf]
          %v4663 = vld [vmem:[%s9 + $0x248] sm:$0xf]
          %v4664 = vld [vmem:[%s9 + $0x24c] sm:$0xf]
          %v4665 = vld [vmem:[%s9 + $0x250] sm:$0xf]
          %v4666 = vld [vmem:[%s9 + $0x254] sm:$0xf]
          %v4667 = vld [vmem:[%s10] sm:$0x1]
          %v4669 = vlaneseq
          %v4670 = vshrl.u32 %v4669, 7
          %v4671 = vsub.s32 0, %v4670
          %v4672 = vrot.slane %v4667, %v4671
          %v4824 = vunpack.c.l.b16 %v4517
          %v4825 = vunpack.c.l.b16 %v4518
          %v4826 = vunpack.c.l.b16 %v4519
          %v4827 = vunpack.c.l.b16 %v4520
          %v4828 = vunpack.c.l.b16 %v4521
          %v4829 = vunpack.c.l.b16 %v4522
          %v4830 = vunpack.c.l.b16 %v4523
          %v4831 = vunpack.c.l.b16 %v4524
          %v4832 = vunpack.c.l.b16 %v4525
          %v4833 = vunpack.c.l.b16 %v4526
          %v4834 = vunpack.c.l.b16 %v4527
          %v4835 = vunpack.c.l.b16 %v4528
          %v4836 = vunpack.c.l.b16 %v4529
          %v4837 = vunpack.c.l.b16 %v4530
          %v4838 = vunpack.c.l.b16 %v4531
          %v4839 = vunpack.c.l.b16 %v4532
          %v4840 = vunpack.c.l.b16 %v4533
          %v4841 = vunpack.c.l.b16 %v4534
          %v4842 = vunpack.c.l.b16 %v4535
          %v4843 = vunpack.c.l.b16 %v4536
          %v4844 = vunpack.c.l.b16 %v4537
          %v4845 = vunpack.c.l.b16 %v4538
          %v4846 = vunpack.c.l.b16 %v4539
          %v4847 = vunpack.c.l.b16 %v4540
          %v4848 = vunpack.c.l.b16 %v4541
          %v4849 = vunpack.c.l.b16 %v4542
          %v4850 = vunpack.c.l.b16 %v4543
          %v4851 = vunpack.c.l.b16 %v4544
          %v4852 = vunpack.c.l.b16 %v4545
          %v4853 = vunpack.c.l.b16 %v4546
          %v4854 = vunpack.c.l.b16 %v4547
          %v4855 = vunpack.c.l.b16 %v4548
          %v4856 = vunpack.c.l.b16 %v4549
          %v4857 = vunpack.c.l.b16 %v4550
          %v4858 = vunpack.c.l.b16 %v4551
          %v4859 = vunpack.c.l.b16 %v4552
          %v4860 = vunpack.c.l.b16 %v4553
          %v4861 = vunpack.c.l.b16 %v4554
          %v4862 = vunpack.c.l.b16 %v4555
          %v4863 = vunpack.c.l.b16 %v4556
          %v4864 = vunpack.c.l.b16 %v4557
          %v4865 = vunpack.c.l.b16 %v4558
          %v4866 = vunpack.c.l.b16 %v4559
          %v4867 = vunpack.c.l.b16 %v4560
          %v4868 = vunpack.c.l.b16 %v4561
          %v4869 = vunpack.c.l.b16 %v4562
          %v4870 = vunpack.c.l.b16 %v4563
          %v4871 = vunpack.c.l.b16 %v4564
          %v4872 = vunpack.c.l.b16 %v4565
          %v4873 = vunpack.c.l.b16 %v4566
          %v4874 = vunpack.c.l.b16 %v4567
          %v4875 = vunpack.c.l.b16 %v4568
          %v4876 = vunpack.c.l.b16 %v4569
          %v4877 = vunpack.c.l.b16 %v4570
          %v4878 = vunpack.c.l.b16 %v4571
          %v4879 = vunpack.c.l.b16 %v4572
          %v4880 = vunpack.c.l.b16 %v4573
          %v4881 = vunpack.c.l.b16 %v4574
          %v4882 = vunpack.c.l.b16 %v4575
          %v4883 = vunpack.c.l.b16 %v4576
          %v4884 = vunpack.c.l.b16 %v4577
          %v4885 = vunpack.c.l.b16 %v4578
          %v4886 = vunpack.c.l.b16 %v4579
          %v4887 = vunpack.c.l.b16 %v4580
          %v4888 = vunpack.c.l.b16 %v4581
          %v4889 = vunpack.c.l.b16 %v4582
          %v4890 = vunpack.c.l.b16 %v4583
          %v4891 = vunpack.c.l.b16 %v4584
          %v4892 = vunpack.c.l.b16 %v4585
          %v4893 = vunpack.c.l.b16 %v4586
          %v4894 = vunpack.c.l.b16 %v4587
          %v4895 = vunpack.c.l.b16 %v4588
          %v4896 = vunpack.c.l.b16 %v4589
          %v4897 = vunpack.c.l.b16 %v4590
          %v4898 = vunpack.c.l.b16 %v4591
          %v4899 = vunpack.c.l.b16 %v4592
          %v4900 = vunpack.c.l.b16 %v4593
          %v4901 = vunpack.c.l.b16 %v4594
          %v4902 = vunpack.c.l.b16 %v4595
          %v4903 = vunpack.c.l.b16 %v4596
          %v4904 = vunpack.c.l.b16 %v4597
          %v4905 = vunpack.c.l.b16 %v4598
          %v4906 = vunpack.c.l.b16 %v4599
          %v4907 = vunpack.c.l.b16 %v4600
          %v4908 = vunpack.c.l.b16 %v4601
          %v4909 = vunpack.c.l.b16 %v4602
          %v4910 = vunpack.c.l.b16 %v4603
          %v4911 = vunpack.c.l.b16 %v4604
          %v4912 = vunpack.c.l.b16 %v4605
          %v4913 = vunpack.c.l.b16 %v4606
          %v4914 = vunpack.c.l.b16 %v4607
          %v4915 = vunpack.c.l.b16 %v4608
          %v4916 = vunpack.c.l.b16 %v4609
          %v4917 = vunpack.c.l.b16 %v4610
          %v4918 = vunpack.c.l.b16 %v4611
          %v4919 = vunpack.c.l.b16 %v4612
          %v4920 = vunpack.c.l.b16 %v4613
          %v4921 = vunpack.c.l.b16 %v4614
          %v4922 = vunpack.c.l.b16 %v4615
          %v4923 = vunpack.c.l.b16 %v4616
          %v4924 = vunpack.c.l.b16 %v4617
          %v4925 = vunpack.c.l.b16 %v4618
          %v4926 = vunpack.c.l.b16 %v4619
          %v4927 = vunpack.c.l.b16 %v4620
          %v4928 = vunpack.c.l.b16 %v4621
          %v4929 = vunpack.c.l.b16 %v4622
          %v4930 = vunpack.c.l.b16 %v4623
          %v4931 = vunpack.c.l.b16 %v4624
          %v4932 = vunpack.c.l.b16 %v4625
          %v4933 = vunpack.c.l.b16 %v4626
          %v4934 = vunpack.c.l.b16 %v4627
          %v4935 = vunpack.c.l.b16 %v4628
          %v4936 = vunpack.c.l.b16 %v4629
          %v4937 = vunpack.c.l.b16 %v4630
          %v4938 = vunpack.c.l.b16 %v4631
          %v4939 = vunpack.c.l.b16 %v4632
          %v4940 = vunpack.c.l.b16 %v4633
          %v4941 = vunpack.c.l.b16 %v4634
          %v4942 = vunpack.c.l.b16 %v4635
          %v4943 = vunpack.c.l.b16 %v4636
          %v4944 = vunpack.c.l.b16 %v4637
          %v4945 = vunpack.c.l.b16 %v4638
          %v4946 = vunpack.c.l.b16 %v4639
          %v4947 = vunpack.c.l.b16 %v4640
          %v4948 = vunpack.c.l.b16 %v4641
          %v4949 = vunpack.c.l.b16 %v4642
          %v4950 = vunpack.c.l.b16 %v4643
          %v4951 = vunpack.c.l.b16 %v4644
          %v4952 = vunpack.c.l.b16 %v4645
          %v4953 = vunpack.c.l.b16 %v4646
          %v4954 = vunpack.c.l.b16 %v4647
          %v4955 = vunpack.c.l.b16 %v4648
          %v4956 = vunpack.c.l.b16 %v4649
          %v4957 = vunpack.c.l.b16 %v4650
          %v4958 = vunpack.c.l.b16 %v4651
          %v4959 = vunpack.c.l.b16 %v4652
          %v4960 = vunpack.c.l.b16 %v4653
          %v4961 = vunpack.c.l.b16 %v4654
          %v4962 = vunpack.c.l.b16 %v4655
          %v4963 = vunpack.c.l.b16 %v4656
          %v4964 = vunpack.c.l.b16 %v4657
          %v4965 = vunpack.c.l.b16 %v4658
          %v4966 = vunpack.c.l.b16 %v4659
          %v4967 = vunpack.c.l.b16 %v4660
          %v4968 = vunpack.c.l.b16 %v4661
          %v4969 = vunpack.c.l.b16 %v4662
          %v4970 = vunpack.c.l.b16 %v4663
          %v4971 = vunpack.c.l.b16 %v4664
          %v4972 = vunpack.c.l.b16 %v4665
          %v4973 = vunpack.c.l.b16 %v4666
          %v4974 = vpack.c.b16 %v4825, %v4824
          %v4975 = vpack.c.b16 %v4827, %v4826
          %v4976 = vpack.c.b16 %v4829, %v4828
          %v4977 = vpack.c.b16 %v4831, %v4830
          %v4978 = vpack.c.b16 %v4833, %v4832
          %v4979 = vpack.c.b16 %v4835, %v4834
          %v4980 = vpack.c.b16 %v4837, %v4836
          %v4981 = vpack.c.b16 %v4839, %v4838
          %v4982 = vpack.c.b16 %v4841, %v4840
          %v4983 = vpack.c.b16 %v4843, %v4842
          %v4984 = vpack.c.b16 %v4845, %v4844
          %v4985 = vpack.c.b16 %v4847, %v4846
          %v4986 = vpack.c.b16 %v4849, %v4848
          %v4987 = vpack.c.b16 %v4851, %v4850
          %v4988 = vpack.c.b16 %v4853, %v4852
          %v4989 = vpack.c.b16 %v4855, %v4854
          %v4990 = vpack.c.b16 %v4857, %v4856
          %v4991 = vpack.c.b16 %v4859, %v4858
          %v4992 = vpack.c.b16 %v4861, %v4860
          %v4993 = vpack.c.b16 %v4863, %v4862
          %v4994 = vpack.c.b16 %v4865, %v4864
          %v4995 = vpack.c.b16 %v4867, %v4866
          %v4996 = vpack.c.b16 %v4869, %v4868
          %v4997 = vpack.c.b16 %v4871, %v4870
          %v4998 = vpack.c.b16 %v4873, %v4872
          %v4999 = vpack.c.b16 %v4875, %v4874
          %v5000 = vpack.c.b16 %v4877, %v4876
          %v5001 = vpack.c.b16 %v4879, %v4878
          %v5002 = vpack.c.b16 %v4881, %v4880
          %v5003 = vpack.c.b16 %v4883, %v4882
          %v5004 = vpack.c.b16 %v4885, %v4884
          %v5005 = vpack.c.b16 %v4887, %v4886
          %v5006 = vpack.c.b16 %v4889, %v4888
          %v5007 = vpack.c.b16 %v4891, %v4890
          %v5008 = vpack.c.b16 %v4893, %v4892
          %v5009 = vpack.c.b16 %v4895, %v4894
          %v5010 = vpack.c.b16 %v4897, %v4896
          %v5011 = vpack.c.b16 %v4899, %v4898
          %v5012 = vpack.c.b16 %v4901, %v4900
          %v5013 = vpack.c.b16 %v4903, %v4902
          %v5014 = vpack.c.b16 %v4905, %v4904
          %v5015 = vpack.c.b16 %v4907, %v4906
          %v5016 = vpack.c.b16 %v4909, %v4908
          %v5017 = vpack.c.b16 %v4911, %v4910
          %v5018 = vpack.c.b16 %v4913, %v4912
          %v5019 = vpack.c.b16 %v4915, %v4914
          %v5020 = vpack.c.b16 %v4917, %v4916
          %v5021 = vpack.c.b16 %v4919, %v4918
          %v5022 = vpack.c.b16 %v4921, %v4920
          %v5023 = vpack.c.b16 %v4923, %v4922
          %v5024 = vpack.c.b16 %v4925, %v4924
          %v5025 = vpack.c.b16 %v4927, %v4926
          %v5026 = vpack.c.b16 %v4929, %v4928
          %v5027 = vpack.c.b16 %v4931, %v4930
          %v5028 = vpack.c.b16 %v4933, %v4932
          %v5029 = vpack.c.b16 %v4935, %v4934
          %v5030 = vpack.c.b16 %v4937, %v4936
          %v5031 = vpack.c.b16 %v4939, %v4938
          %v5032 = vpack.c.b16 %v4941, %v4940
          %v5033 = vpack.c.b16 %v4943, %v4942
          %v5034 = vpack.c.b16 %v4945, %v4944
          %v5035 = vpack.c.b16 %v4947, %v4946
          %v5036 = vpack.c.b16 %v4949, %v4948
          %v5037 = vpack.c.b16 %v4951, %v4950
          %v5038 = vpack.c.b16 %v4953, %v4952
          %v5039 = vpack.c.b16 %v4955, %v4954
          %v5040 = vpack.c.b16 %v4957, %v4956
          %v5041 = vpack.c.b16 %v4959, %v4958
          %v5042 = vpack.c.b16 %v4961, %v4960
          %v5043 = vpack.c.b16 %v4963, %v4962
          %v5044 = vpack.c.b16 %v4965, %v4964
          %v5045 = vpack.c.b16 %v4967, %v4966
          %v5046 = vpack.c.b16 %v4969, %v4968
          %v5047 = vpack.c.b16 %v4971, %v4970
          %v5048 = vpack.c.b16 %v4973, %v4972
          %v5125 = vsel %vm1680, %v4516, 0
          %5127 = vmatprep.subr.bf16.mxu0 0
          %5128 = vmatpush1.bf16.msra.mxu0 %v4981
          %5129 = vmatprep.subr.bf16.mxu0 0
          %5130 = vmatpush1.bf16.msra.mxu0 %v4980
          %5131 = vmatprep.subr.bf16.mxu0 0
          %5132 = vmatpush1.bf16.msra.mxu0 %v4979
          %5133 = vmatprep.subr.bf16.mxu0 0
          %5134 = vmatpush1.bf16.msra.mxu0 %v4978
          %5135 = vmatprep.subr.bf16.mxu0 0
          %5136 = vmatpush1.bf16.msra.mxu0 %v4977
          %5137 = vmatprep.subr.bf16.mxu0 0
          %5138 = vmatpush1.bf16.msra.mxu0 %v4976
          %5139 = vmatprep.subr.bf16.mxu0 0
          %5140 = vmatpush1.bf16.msra.mxu0 %v4975
          %5141 = vmatprep.subr.bf16.mxu0 0
          %5142 = vmatpush1.bf16.msra.mxu0 %v4974
          %5143 = vmatprep.subr.bf16.mxu0 0
          %5144 = vmatpush2.bf16.msra.mxu0 %v4989
          %5145 = vmatprep.subr.bf16.mxu0 0
          %5146 = vmatpush2.bf16.msra.mxu0 %v4988
          %5147 = vmatprep.subr.bf16.mxu0 0
          %5148 = vmatpush2.bf16.msra.mxu0 %v4987
          %5149 = vmatprep.subr.bf16.mxu0 0
          %5150 = vmatpush2.bf16.msra.mxu0 %v4986
          %5151 = vmatprep.subr.bf16.mxu0 0
          %5152 = vmatpush2.bf16.msra.mxu0 %v4985
          %5153 = vmatprep.subr.bf16.mxu0 0
          %5154 = vmatpush2.bf16.msra.mxu0 %v4984
          %5155 = vmatprep.subr.bf16.mxu0 0
          %5156 = vmatpush2.bf16.msra.mxu0 %v4983
          %5157 = vmatprep.subr.bf16.mxu0 0
          %5158 = vmatpush2.bf16.msra.mxu0 %v4982
          %5159 = vmatprep.mubr.bf16.mxu0 %v4508
          %5160 = vmatmul.mubr.bf16.gmra.mxu0 %v4507
          %v5161 = vpop.f32.mrf.mxu0
          %v5162 = vadd.f32 %v4672, %v5161
          %v5163 = vpop.f32.mrf.mxu0
          %v5164 = vpop.f32.mrf.mxu0
          %v5165 = vpop.f32.mrf.mxu0
          %5166 = vdwg.mxu0
          %5167 = vmatprep.subr.bf16.mxu0 0
          %5168 = vmatpush1.bf16.msra.mxu0 %v4997
          %5169 = vmatprep.subr.bf16.mxu0 0
          %5170 = vmatpush1.bf16.msra.mxu0 %v4996
          %5171 = vmatprep.subr.bf16.mxu0 0
          %5172 = vmatpush1.bf16.msra.mxu0 %v4995
          %5173 = vmatprep.subr.bf16.mxu0 0
          %5174 = vmatpush1.bf16.msra.mxu0 %v4994
          %5175 = vmatprep.subr.bf16.mxu0 0
          %5176 = vmatpush1.bf16.msra.mxu0 %v4993
          %5177 = vmatprep.subr.bf16.mxu0 0
          %5178 = vmatpush1.bf16.msra.mxu0 %v4992
          %5179 = vmatprep.subr.bf16.mxu0 0
          %5180 = vmatpush1.bf16.msra.mxu0 %v4991
          %5181 = vmatprep.subr.bf16.mxu0 0
          %5182 = vmatpush1.bf16.msra.mxu0 %v4990
          %5183 = vmatprep.subr.bf16.mxu0 0
          %5184 = vmatpush2.bf16.msra.mxu0 %v5005
          %5185 = vmatprep.subr.bf16.mxu0 0
          %5186 = vmatpush2.bf16.msra.mxu0 %v5004
          %5187 = vmatprep.subr.bf16.mxu0 0
          %5188 = vmatpush2.bf16.msra.mxu0 %v5003
          %5189 = vmatprep.subr.bf16.mxu0 0
          %5190 = vmatpush2.bf16.msra.mxu0 %v5002
          %5191 = vmatprep.subr.bf16.mxu0 0
          %5192 = vmatpush2.bf16.msra.mxu0 %v5001
          %5193 = vmatprep.subr.bf16.mxu0 0
          %5194 = vmatpush2.bf16.msra.mxu0 %v5000
          %5195 = vmatprep.subr.bf16.mxu0 0
          %5196 = vmatpush2.bf16.msra.mxu0 %v4999
          %5197 = vmatprep.subr.bf16.mxu0 0
          %5198 = vmatpush2.bf16.msra.mxu0 %v4998
          %5199 = vmatprep.mubr.bf16.mxu0 %v4510
          %5200 = vmatmul.mubr.bf16.gmra.mxu0 %v4509
          %v5201 = vpop.f32.mrf.mxu0
          %v5202 = vadd.f32 %v5162, %v5201
          %v5203 = vpop.f32.mrf.mxu0
          %v5204 = vpop.f32.mrf.mxu0
          %v5205 = vpop.f32.mrf.mxu0
          %5206 = vdwg.mxu0
          %5207 = vmatprep.subr.bf16.mxu0 0
          %5208 = vmatpush1.bf16.msra.mxu0 %v5013
          %5209 = vmatprep.subr.bf16.mxu0 0
          %5210 = vmatpush1.bf16.msra.mxu0 %v5012
          %5211 = vmatprep.subr.bf16.mxu0 0
          %5212 = vmatpush1.bf16.msra.mxu0 %v5011
          %5213 = vmatprep.subr.bf16.mxu0 0
          %5214 = vmatpush1.bf16.msra.mxu0 %v5010
          %5215 = vmatprep.subr.bf16.mxu0 0
          %5216 = vmatpush1.bf16.msra.mxu0 %v5009
          %5217 = vmatprep.subr.bf16.mxu0 0
          %5218 = vmatpush1.bf16.msra.mxu0 %v5008
          %5219 = vmatprep.subr.bf16.mxu0 0
          %5220 = vmatpush1.bf16.msra.mxu0 %v5007
          %5221 = vmatprep.subr.bf16.mxu0 0
          %5222 = vmatpush1.bf16.msra.mxu0 %v5006
          %5223 = vmatprep.subr.bf16.mxu0 0
          %5224 = vmatpush2.bf16.msra.mxu0 %v5021
          %5225 = vmatprep.subr.bf16.mxu0 0
          %5226 = vmatpush2.bf16.msra.mxu0 %v5020
          %5227 = vmatprep.subr.bf16.mxu0 0
          %5228 = vmatpush2.bf16.msra.mxu0 %v5019
          %5229 = vmatprep.subr.bf16.mxu0 0
          %5230 = vmatpush2.bf16.msra.mxu0 %v5018
          %5231 = vmatprep.subr.bf16.mxu0 0
          %5232 = vmatpush2.bf16.msra.mxu0 %v5017
          %5233 = vmatprep.subr.bf16.mxu0 0
          %5234 = vmatpush2.bf16.msra.mxu0 %v5016
          %5235 = vmatprep.subr.bf16.mxu0 0
          %5236 = vmatpush2.bf16.msra.mxu0 %v5015
          %5237 = vmatprep.subr.bf16.mxu0 0
          %5238 = vmatpush2.bf16.msra.mxu0 %v5014
          %5239 = vmatprep.mubr.bf16.mxu0 %v4512
          %5240 = vmatmul.mubr.bf16.gmra.mxu0 %v4511
          %v5241 = vpop.f32.mrf.mxu0
          %v5242 = vadd.f32 %v5202, %v5241
          %v5243 = vpop.f32.mrf.mxu0
          %v5244 = vpop.f32.mrf.mxu0
          %v5245 = vpop.f32.mrf.mxu0
          %5246 = vdwg.mxu0
          %5247 = vmatprep.subr.bf16.mxu0 0
          %5248 = vmatpush1.bf16.msra.mxu0 %v5029
          %5249 = vmatprep.subr.bf16.mxu0 0
          %5250 = vmatpush1.bf16.msra.mxu0 %v5028
          %5251 = vmatprep.subr.bf16.mxu0 0
          %5252 = vmatpush1.bf16.msra.mxu0 %v5027
          %5253 = vmatprep.subr.bf16.mxu0 0
          %5254 = vmatpush1.bf16.msra.mxu0 %v5026
          %5255 = vmatprep.subr.bf16.mxu0 0
          %5256 = vmatpush1.bf16.msra.mxu0 %v5025
          %5257 = vmatprep.subr.bf16.mxu0 0
          %5258 = vmatpush1.bf16.msra.mxu0 %v5024
          %5259 = vmatprep.subr.bf16.mxu0 0
          %5260 = vmatpush1.bf16.msra.mxu0 %v5023
          %5261 = vmatprep.subr.bf16.mxu0 0
          %5262 = vmatpush1.bf16.msra.mxu0 %v5022
          %5263 = vmatprep.subr.bf16.mxu0 0
          %5264 = vmatpush2.bf16.msra.mxu0 %v5037
          %5265 = vmatprep.subr.bf16.mxu0 0
          %5266 = vmatpush2.bf16.msra.mxu0 %v5036
          %5267 = vmatprep.subr.bf16.mxu0 0
          %5268 = vmatpush2.bf16.msra.mxu0 %v5035
          %5269 = vmatprep.subr.bf16.mxu0 0
          %5270 = vmatpush2.bf16.msra.mxu0 %v5034
          %5271 = vmatprep.subr.bf16.mxu0 0
          %5272 = vmatpush2.bf16.msra.mxu0 %v5033
          %5273 = vmatprep.subr.bf16.mxu0 0
          %5274 = vmatpush2.bf16.msra.mxu0 %v5032
          %5275 = vmatprep.subr.bf16.mxu0 0
          %5276 = vmatpush2.bf16.msra.mxu0 %v5031
          %5277 = vmatprep.subr.bf16.mxu0 0
          %5278 = vmatpush2.bf16.msra.mxu0 %v5030
          %5279 = vmatprep.mubr.bf16.mxu0 %v4514
          %5280 = vmatmul.mubr.bf16.gmra.mxu0 %v4513
          %v5281 = vpop.f32.mrf.mxu0
          %v5282 = vadd.f32 %v5242, %v5281
          %v5283 = vpop.f32.mrf.mxu0
          %v5284 = vpop.f32.mrf.mxu0
          %v5285 = vpop.f32.mrf.mxu0
          %5286 = vdwg.mxu0
          %5287 = vmatprep.subr.bf16.mxu0 0
          %5288 = vmatpush1.bf16.msra.mxu0 %v5045
          %5289 = vmatprep.subr.bf16.mxu0 0
          %5290 = vmatpush1.bf16.msra.mxu0 %v5044
          %5291 = vmatprep.subr.bf16.mxu0 0
          %5292 = vmatpush1.bf16.msra.mxu0 %v5043
          %5293 = vmatprep.subr.bf16.mxu0 0
          %5294 = vmatpush1.bf16.msra.mxu0 %v5042
          %5295 = vmatprep.subr.bf16.mxu0 0
          %5296 = vmatpush1.bf16.msra.mxu0 %v5041
          %5297 = vmatprep.subr.bf16.mxu0 0
          %5298 = vmatpush1.bf16.msra.mxu0 %v5040
          %5299 = vmatprep.subr.bf16.mxu0 0
          %5300 = vmatpush1.bf16.msra.mxu0 %v5039
          %5301 = vmatprep.subr.bf16.mxu0 0
          %5302 = vmatpush1.bf16.msra.mxu0 %v5038
          %5303 = vmatprep.subr.bf16.mxu0 0
          %5304 = vmatpush2.bf16.msra.mxu0 0
          %5305 = vmatprep.subr.bf16.mxu0 0
          %5306 = vmatpush2.bf16.msra.mxu0 0
          %5307 = vmatprep.subr.bf16.mxu0 0
          %5308 = vmatpush2.bf16.msra.mxu0 0
          %5309 = vmatprep.subr.bf16.mxu0 0
          %5310 = vmatpush2.bf16.msra.mxu0 0
          %5311 = vmatprep.subr.bf16.mxu0 0
          %5312 = vmatpush2.bf16.msra.mxu0 0
          %5313 = vmatprep.subr.bf16.mxu0 0
          %5314 = vmatpush2.bf16.msra.mxu0 %v5048
          %5315 = vmatprep.subr.bf16.mxu0 0
          %5316 = vmatpush2.bf16.msra.mxu0 %v5047
          %5317 = vmatprep.subr.bf16.mxu0 0
          %5318 = vmatpush2.bf16.msra.mxu0 %v5046
          %5319 = vmatprep.mubr.bf16.mxu0 %v5125
          %5320 = vmatmul.mubr.bf16.gmra.mxu0 %v4515
          %v5321 = vpop.f32.mrf.mxu0
          %v5322 = vadd.f32 %v5282, %v5321
          %v5323 = vpop.f32.mrf.mxu0
          %v5324 = vpop.f32.mrf.mxu0
          %v5325 = vpop.f32.mrf.mxu0
          %5326 = vdwg.mxu0
          %vm5327 = vcmask 130048
          %5328 = vst.msk [vmem:[#allocation4] sm:$0xff] %vm5327, %v5322
        $region72: #{tpu_custom_call.1} parent=63 // pred_fallthru
          _
        // Predicated region
        $region73: #{tpu_custom_call.1} parent=63 // pred_check
          %p5329 = pneg %p287
        $region74: #{tpu_custom_call.1} parent=63 // pred_check_branch
          %5331 = sbr.rel (%p5329) target = $region76
        $region75: #{tpu_custom_call.1} parent=63 // pred_region
          %s5333 = ssub.s32 128, 128
          %5334 = vsyncadd [#allocation5], %s5333
          %s5336 = sshll.u32 [#allocation4], 4
          %s5337 = int_to_ptr.vmem [resolvable:$true] %s5336
          %5339 = dma.vmem_to_hbm [thread:$0]  %s5337, 128, %s11, [#allocation5]
        $region76: #{tpu_custom_call.1} parent=63 // pred_fallthru
          _
        // Predicated region
        $region77: #{tpu_custom_call.1} parent=63 // pred_check
          %p5340 = pneg %p287
        $region78: #{tpu_custom_call.1} parent=63 // pred_check_branch
          %5342 = sbr.rel (%p5340) target = $region80
        $region79: #{tpu_custom_call.1} parent=63 // pred_region
          %5343 = dma.done [#allocation5], 128
        $region80: #{tpu_custom_call.1} parent=63 // pred_fallthru
          _
      $region64: #{tpu_custom_call.1} parent=5 // pred_fallthru
        _
      %p5344 = scmp.le.s32.totalorder 2, %s18
      // Predicated region
      $region81: #{tpu_custom_call.1} parent=5 // pred_check
        %p5345 = pneg %p5344
      $region82: #{tpu_custom_call.1} parent=5 // pred_check_branch
        %5347 = sbr.rel (%p5345) target = $region84
      $region83: #{tpu_custom_call.1} parent=5 // pred_region
        %s5348 = ssub.s32 %s18, 2
      $region84: #{tpu_custom_call.1} parent=5 // pred_fallthru
        _
    $region6: #{tpu_custom_call.1} parent=1 // loop_footer
      %s22 = sadd.s32 1, %s18
    $region7: #{tpu_custom_call.1} parent=1 // loop_footer_branch
      %17 = sbr.rel target = $region3
    $region8: #{tpu_custom_call.1} parent=1 // loop_exit
      _
    %5349 = vsyncpa [#allocation5], 1
    %s5350 = scalar_lea.sflag [#allocation5], 1
    %5351 = vsyncpa %s5350, 1

</llo_original>
